<compile_context>
chip_gen: v7x
topology: tpu7x:2x2x1
jax: 0.10.0
libtpu: 0.0.40
codegen_flags: <defaults>
</compile_context>

<pallas_src>
import functools

import jax
import jax.numpy as jnp
from jax.experimental import pallas as pl
from jax.experimental.pallas import tpu as pltpu


def _speller_kernel(n_head,
                    emb_ref, lst_ref,
                    w_ih_ref, w_hh_ref, b_gi_ref, b_hn_ref,
                    w_qq_ref, b_qq_ref, w_v_ref, b_v_ref,
                    w_fc_ctx_ref, w_out_ref, b_out_ref,
                    logits_ref, yhat_ref):
    B, T, H = emb_ref.shape
    S = lst_ref.shape[1]
    GATE = w_hh_ref.shape[1] // 3          # 128-lane padded gate slab width
    qk = w_v_ref.shape[1]
    dim = qk // n_head

    emb_flat = emb_ref[...].reshape(B * T, H)

    # ---- GRU input projections: all gates fused into one matmul, with the
    # r/z hidden biases folded in (commute out of the recurrence) ------------
    gi = (jnp.dot(emb_flat, w_ih_ref[...], preferred_element_type=jnp.float32)
          + b_gi_ref[...]).reshape(B, T, 3 * GATE)

    w_hh = w_hh_ref[...]                   # (H, 3*GATE), lane-padded per gate
    b_hn = b_hn_ref[...]                   # (1, H), must stay under r * (...)

    row_ids = jax.lax.broadcasted_iota(jnp.int32, (B * T, H), 0)

    # ---- GRU recurrence (n_layers=1, h0=0, batch_first) --------------------
    # Single fused h @ W_hh matmul per step; gate slabs are aligned lane
    # slices at offsets 0 / GATE / 2*GATE.
    h = jnp.zeros((B, H), jnp.float32)
    gru_flat = jnp.zeros((B * T, H), jnp.float32)
    for t in range(T):                     # T small & static
        gh = jnp.dot(h, w_hh, preferred_element_type=jnp.float32)
        gi_t = gi[:, t, :]
        r = jax.nn.sigmoid(gi_t[:, 0:H] + gh[:, 0:H])
        z = jax.nn.sigmoid(gi_t[:, GATE:GATE + H] + gh[:, GATE:GATE + H])
        n = jnp.tanh(gi_t[:, 2 * GATE:2 * GATE + H]
                     + r * (gh[:, 2 * GATE:2 * GATE + H] + b_hn))
        h = (1.0 - z) * n + z * h
        # keep the sequence in registers: scatter h's rows into rows b*T+t of
        # the (B*T, H) slab with cheap VPU selects (no VMEM scratch round trip)
        for b in range(B):
            gru_flat = jnp.where(row_ids == (b * T + t), h[b:b + 1, :],
                                 gru_flat)

    # ---- Multi-head attention over listener outputs ------------------------
    # W_Q and W_fc_qry share gru_flat as LHS -> one fused (H, qk+H) matmul.
    qp = (jnp.dot(gru_flat, w_qq_ref[...], preferred_element_type=jnp.float32)
          + b_qq_ref[...])                 # (B*T, qk+H)
    q_flat = qp[:, :qk]                    # (B*T, qk)
    qry_part = qp[:, qk:]                  # gru @ W_fc_qry + b_fc  (B*T, H)

    lst_flat = lst_ref[...].reshape(B * S, H)
    v_flat = (jnp.dot(lst_flat, w_v_ref[...],
                      preferred_element_type=jnp.float32) + b_v_ref[...])

    # Head-batched layout (B*n_head, T/S, dim): built from 128-lane-aligned
    # slices + major-dim concat (Mosaic-safe, avoids a 4D minor-preserving
    # transpose).
    q_bh = jnp.concatenate(
        [q_flat[:, hd * dim:(hd + 1) * dim].reshape(B, 1, T, dim)
         for hd in range(n_head)], axis=1).reshape(B * n_head, T, dim)
    v_bh = jnp.concatenate(
        [v_flat[:, hd * dim:(hd + 1) * dim].reshape(B, 1, S, dim)
         for hd in range(n_head)], axis=1).reshape(B * n_head, S, dim)

    score = jnp.einsum('ntd,nsd->nts', q_bh, v_bh,
                       preferred_element_type=jnp.float32)
    smax = jnp.max(score, axis=-1, keepdims=True)
    e = jnp.exp(score - smax)
    align = e * pl.reciprocal(jnp.sum(e, axis=-1, keepdims=True), approx=True)
    ctx = jnp.einsum('nts,nsd->ntd', align, v_bh,
                     preferred_element_type=jnp.float32)   # (B*n_head, T, dim)

    # fc(cat([context, query])) == ctx @ W_ctx + gru @ W_qry + b_fc
    ctx4 = ctx.reshape(B, n_head, T, dim)
    ctx_flat = jnp.concatenate(
        [ctx4[:, hd].reshape(B * T, dim) for hd in range(n_head)],
        axis=1)                                            # (B*T, qk)
    attn_out = jnp.tanh(
        jnp.dot(ctx_flat, w_fc_ctx_ref[...],
                preferred_element_type=jnp.float32) + qry_part)

    # ---- output projection + log_softmax + argmax ---------------------------
    lin = (jnp.dot(attn_out, w_out_ref[...],
                   preferred_element_type=jnp.float32) + b_out_ref[...])
    C = lin.shape[-1]
    lin3 = lin.reshape(B, T, C)

    # argmax from pre-log-softmax values (invariant under the per-row shift),
    # first occurrence like torch.max(-1)[1]
    maxv = jnp.max(lin3, axis=-1, keepdims=True)
    idx = jax.lax.broadcasted_iota(jnp.int32, lin3.shape, 2)
    yhat_ref[...] = jnp.min(jnp.where(lin3 == maxv, idx, C),
                            axis=-1).astype(jnp.int32)

    m = jnp.max(lin, axis=-1, keepdims=True)
    lse = jnp.log(jnp.sum(jnp.exp(lin - m), axis=-1, keepdims=True)) + m
    logits_ref[...] = (lin - lse).reshape(B, T, C)


def init_params(key, class_num, hidden_size, dim=128, n_head=4):
    """Deterministic synthetic parameters with PyTorch-native shapes."""
    ks = jax.random.split(key, 12)

    def init(k, shape, scale=0.1):
        return scale * jax.random.normal(k, shape, dtype=jnp.float32)

    H = hidden_size
    qk = dim * n_head
    return dict(
        embedding=init(ks[0], (class_num, H)),          # nn.Embedding
        rnn_w_ih=init(ks[1], (3 * H, H)),               # GRU weight_ih_l0
        rnn_w_hh=init(ks[2], (3 * H, H)),               # GRU weight_hh_l0
        rnn_b_ih=init(ks[3], (3 * H,)),
        rnn_b_hh=init(ks[4], (3 * H,)),
        attn_wq_w=init(ks[5], (qk, H)),                 # attention.W_Q
        attn_wq_b=init(ks[6], (qk,)),
        attn_wv_w=init(ks[7], (qk, H)),                 # attention.W_V
        attn_wv_b=init(ks[8], (qk,)),
        attn_fc_w=init(ks[9], (H, qk + H)),             # attention.fc
        attn_fc_b=init(ks[10], (H,)),
        out_w=init(ks[11], (class_num, H)),             # self.out
        out_b=jnp.zeros((class_num,), jnp.float32),
    )


def speller_forward(params, inputs, listener_outputs, eos_id, n_head=4):
    """Teacher-forcing forward. inputs: (B, seq_len) int tokens, eos at the end."""
    B, seq_len = inputs.shape
    T = seq_len - 1
    # inputs[inputs != eos_id].view(B, -1): eos only appears as the trailing
    # token in this synthetic setup, so this equals dropping the last column.
    speller_inputs = inputs[:, :T]
    emb = params['embedding'][speller_inputs].astype(jnp.float32)   # (B, T, H)

    H = params['embedding'].shape[1]
    C = params['out_w'].shape[0]
    qk = params['attn_wq_w'].shape[0]
    GATE = 128                                          # lane-padded gate slab

    # GRU weights: PyTorch layout (3H, H), gates stacked as (r, z, n).
    # Fuse all three gates into a single (H, 3*GATE) lane-padded weight.
    def fuse_gate_weights(w):
        wt = jnp.transpose(w.reshape(3, H, H), (0, 2, 1))   # (gate, in, out)
        fused = jnp.zeros((H, 3 * GATE), jnp.float32)
        for g in range(3):
            fused = fused.at[:, g * GATE:g * GATE + H].set(wt[g])
        return fused

    w_ih_fused = fuse_gate_weights(params['rnn_w_ih'])
    w_hh_fused = fuse_gate_weights(params['rnn_w_hh'])

    b_i = params['rnn_b_ih'].reshape(3, H)
    b_h = params['rnn_b_hh'].reshape(3, H)
    b_gi_fused = jnp.zeros((1, 3 * GATE), jnp.float32)
    b_gi_fused = b_gi_fused.at[0, 0:H].set(b_i[0] + b_h[0])           # r
    b_gi_fused = b_gi_fused.at[0, GATE:GATE + H].set(b_i[1] + b_h[1])  # z
    b_gi_fused = b_gi_fused.at[0, 2 * GATE:2 * GATE + H].set(b_i[2])   # n
    b_hn = b_h[2][None, :]                               # stays in the loop

    # Attention weights: fold W_Q and the query half of fc into one matmul.
    w_q_t = params['attn_wq_w'].T                        # (H, qk)
    w_v_t = params['attn_wv_w'].T                        # (H, qk)
    b_v = params['attn_wv_b'][None, :]                   # (1, qk)
    w_fc = params['attn_fc_w']                           # (H, qk + H)
    w_fc_ctx_t = w_fc[:, :qk].T                          # (qk, H)
    w_fc_qry_t = w_fc[:, qk:].T                          # (H, H)
    w_qq = jnp.concatenate([w_q_t, w_fc_qry_t], axis=1)  # (H, qk + H)
    b_qq = jnp.concatenate([params['attn_wq_b'],
                            params['attn_fc_b']])[None, :]   # (1, qk + H)
    w_out_t = params['out_w'].T                          # (H, C)
    b_out = params['out_b'][None, :]                     # (1, C)

    lst = listener_outputs.astype(jnp.float32)

    args = (emb, lst, w_ih_fused, w_hh_fused, b_gi_fused, b_hn,
            w_qq, b_qq, w_v_t, b_v, w_fc_ctx_t, w_out_t, b_out)
    vspec = pl.BlockSpec(memory_space=pltpu.MemorySpace.VMEM)

    logits, y_hats = pl.pallas_call(
        functools.partial(_speller_kernel, n_head),
        out_shape=(jax.ShapeDtypeStruct((B, T, C), jnp.float32),
                   jax.ShapeDtypeStruct((B, T), jnp.int32)),
        in_specs=[vspec] * len(args),
        out_specs=(vspec, vspec),
    )(*args)
    return y_hats, logits


if __name__ == "__main__":
    key = jax.random.PRNGKey(0)
    k_param, k_tok, k_lst = jax.random.split(key, 3)

    class_num, hidden_size = 16, 32
    sos_id, eos_id = 1, 2
    B, seq_len, S = 2, 9, 16          # inputs (B, 9) -> max_len = 8 decode steps

    params = init_params(k_param, class_num, hidden_size)

    tokens = jax.random.randint(k_tok, (B, seq_len), 0, class_num)
    # make sure eos only appears as the trailing token (teacher-forcing filter)
    tokens = jnp.where(tokens == eos_id, (eos_id + 1) % class_num, tokens)
    tokens = tokens.at[:, 0].set(sos_id).at[:, -1].set(eos_id)

    listener_outputs = jax.random.normal(k_lst, (B, S, hidden_size),
                                         dtype=jnp.float32)

    y_hats, logits = speller_forward(params, tokens, listener_outputs, eos_id)
    jax.block_until_ready((y_hats, logits))

    assert y_hats.shape == (B, seq_len - 1)
    assert logits.shape == (B, seq_len - 1, class_num)
    assert bool(jnp.all(jnp.isfinite(logits)))
    print("KERNEL_OK")
</pallas_src>

<mosaic_0001>
module attributes {stable_mosaic.version = 11 : i64} {
  func.func @_speller_kernel(%arg0: memref<2x8x32xf32, #tpu.memory_space<vmem>>, %arg1: memref<2x16x32xf32, #tpu.memory_space<vmem>>, %arg2: memref<32x384xf32, #tpu.memory_space<vmem>>, %arg3: memref<32x384xf32, #tpu.memory_space<vmem>>, %arg4: memref<1x384xf32, #tpu.memory_space<vmem>>, %arg5: memref<1x32xf32, #tpu.memory_space<vmem>>, %arg6: memref<32x544xf32, #tpu.memory_space<vmem>>, %arg7: memref<1x544xf32, #tpu.memory_space<vmem>>, %arg8: memref<32x512xf32, #tpu.memory_space<vmem>>, %arg9: memref<1x512xf32, #tpu.memory_space<vmem>>, %arg10: memref<512x32xf32, #tpu.memory_space<vmem>>, %arg11: memref<32x16xf32, #tpu.memory_space<vmem>>, %arg12: memref<1x16xf32, #tpu.memory_space<vmem>>, %arg13: memref<2x8x16xf32, #tpu.memory_space<vmem>>, %arg14: memref<2x8xi32, #tpu.memory_space<vmem>>) attributes {dimension_semantics = [], scalar_prefetch = 0 : i64, scratch_operands = 0 : i64, tpu.core_type = #tpu.core_type<tc>} {
    %c0 = arith.constant 0 : index
    %c0_0 = arith.constant 0 : index
    %c0_1 = arith.constant 0 : index
    %0 = vector.load %arg0[%c0, %c0_0, %c0_1] : memref<2x8x32xf32, #tpu.memory_space<vmem>>, vector<2x8x32xf32>
    %1 = vector.shape_cast %0 : vector<2x8x32xf32> to vector<16x32xf32>
    %c0_2 = arith.constant 0 : index
    %c0_3 = arith.constant 0 : index
    %2 = vector.load %arg2[%c0_2, %c0_3] : memref<32x384xf32, #tpu.memory_space<vmem>>, vector<32x384xf32>
    %cst = arith.constant dense<0.000000e+00> : vector<16x384xf32>
    %3 = tpu.matmul %1, %2, %cst {dimension_numbers = #tpu.dot_dimension_numbers<[1], [0], [0], [1], [0, 0, 1, 1], [], []>} : vector<16x32xf32>, vector<32x384xf32>, vector<16x384xf32> -> vector<16x384xf32>
    %c0_4 = arith.constant 0 : index
    %c0_5 = arith.constant 0 : index
    %4 = vector.load %arg4[%c0_4, %c0_5] : memref<1x384xf32, #tpu.memory_space<vmem>>, vector<1x384xf32>
    %5 = vector.broadcast %4 : vector<1x384xf32> to vector<16x384xf32>
    %6 = arith.addf %3, %5 : vector<16x384xf32>
    %7 = vector.shape_cast %6 : vector<16x384xf32> to vector<2x8x384xf32>
    %c0_6 = arith.constant 0 : index
    %c0_7 = arith.constant 0 : index
    %8 = vector.load %arg3[%c0_6, %c0_7] : memref<32x384xf32, #tpu.memory_space<vmem>>, vector<32x384xf32>
    %c0_8 = arith.constant 0 : index
    %c0_9 = arith.constant 0 : index
    %9 = vector.load %arg5[%c0_8, %c0_9] : memref<1x32xf32, #tpu.memory_space<vmem>>, vector<1x32xf32>
    %10 = tpu.iota {dimensions = array<i32: 0>} : vector<16x32xi32>
    %cst_10 = arith.constant 0.000000e+00 : f32
    %11 = vector.broadcast %cst_10 : f32 to vector<2x32xf32>
    %cst_11 = arith.constant 0.000000e+00 : f32
    %12 = vector.broadcast %cst_11 : f32 to vector<16x32xf32>
    %cst_12 = arith.constant dense<0.000000e+00> : vector<2x384xf32>
    %13 = tpu.matmul %11, %8, %cst_12 {dimension_numbers = #tpu.dot_dimension_numbers<[1], [0], [0], [1], [0, 0, 1, 1], [], []>} : vector<2x32xf32>, vector<32x384xf32>, vector<2x384xf32> -> vector<2x384xf32>
    %14 = vector.extract_strided_slice %7 {offsets = [0, 0, 0], sizes = [2, 1, 384], strides = [1, 1, 1]} : vector<2x8x384xf32> to vector<2x1x384xf32>
    %15 = vector.shape_cast %14 : vector<2x1x384xf32> to vector<2x384xf32>
    %16 = vector.extract_strided_slice %15 {offsets = [0, 0], sizes = [2, 32], strides = [1, 1]} : vector<2x384xf32> to vector<2x32xf32>
    %17 = vector.extract_strided_slice %13 {offsets = [0, 0], sizes = [2, 32], strides = [1, 1]} : vector<2x384xf32> to vector<2x32xf32>
    %18 = arith.addf %16, %17 : vector<2x32xf32>
    %19 = arith.negf %18 : vector<2x32xf32>
    %20 = math.exp %19 : vector<2x32xf32>
    %cst_13 = arith.constant 1.000000e+00 : f32
    %21 = vector.broadcast %cst_13 : f32 to vector<2x32xf32>
    %22 = arith.addf %21, %20 : vector<2x32xf32>
    %23 = arith.divf %21, %22 : vector<2x32xf32>
    %24 = vector.extract_strided_slice %15 {offsets = [0, 128], sizes = [2, 32], strides = [1, 1]} : vector<2x384xf32> to vector<2x32xf32>
    %25 = vector.extract_strided_slice %13 {offsets = [0, 128], sizes = [2, 32], strides = [1, 1]} : vector<2x384xf32> to vector<2x32xf32>
    %26 = arith.addf %24, %25 : vector<2x32xf32>
    %27 = arith.negf %26 : vector<2x32xf32>
    %28 = math.exp %27 : vector<2x32xf32>
    %cst_14 = arith.constant 1.000000e+00 : f32
    %29 = vector.broadcast %cst_14 : f32 to vector<2x32xf32>
    %30 = arith.addf %29, %28 : vector<2x32xf32>
    %31 = arith.divf %29, %30 : vector<2x32xf32>
    %32 = vector.extract_strided_slice %15 {offsets = [0, 256], sizes = [2, 32], strides = [1, 1]} : vector<2x384xf32> to vector<2x32xf32>
    %33 = vector.extract_strided_slice %13 {offsets = [0, 256], sizes = [2, 32], strides = [1, 1]} : vector<2x384xf32> to vector<2x32xf32>
    %34 = vector.broadcast %9 : vector<1x32xf32> to vector<2x32xf32>
    %35 = arith.addf %33, %34 : vector<2x32xf32>
    %36 = arith.mulf %23, %35 : vector<2x32xf32>
    %37 = arith.addf %32, %36 : vector<2x32xf32>
    %38 = math.tanh %37 : vector<2x32xf32>
    %cst_15 = arith.constant 1.000000e+00 : f32
    %39 = vector.broadcast %cst_15 : f32 to vector<2x32xf32>
    %40 = arith.subf %39, %31 : vector<2x32xf32>
    %41 = arith.mulf %40, %38 : vector<2x32xf32>
    %42 = arith.mulf %31, %11 : vector<2x32xf32>
    %43 = arith.addf %41, %42 : vector<2x32xf32>
    %c0_i32 = arith.constant 0 : i32
    %44 = vector.broadcast %c0_i32 : i32 to vector<16x32xi32>
    %45 = arith.cmpi eq, %10, %44 : vector<16x32xi32>
    %46 = vector.extract_strided_slice %43 {offsets = [0, 0], sizes = [1, 32], strides = [1, 1]} : vector<2x32xf32> to vector<1x32xf32>
    %47 = vector.shape_cast %46 : vector<1x32xf32> to vector<1x32xf32>
    %48 = vector.broadcast %47 : vector<1x32xf32> to vector<16x32xf32>
    %49 = arith.select %45, %48, %12 : vector<16x32xi1>, vector<16x32xf32>
    %c8_i32 = arith.constant 8 : i32
    %50 = vector.broadcast %c8_i32 : i32 to vector<16x32xi32>
    %51 = arith.cmpi eq, %10, %50 : vector<16x32xi32>
    %52 = vector.extract_strided_slice %43 {offsets = [1, 0], sizes = [1, 32], strides = [1, 1]} : vector<2x32xf32> to vector<1x32xf32>
    %53 = vector.shape_cast %52 : vector<1x32xf32> to vector<1x32xf32>
    %54 = vector.broadcast %53 : vector<1x32xf32> to vector<16x32xf32>
    %55 = arith.select %51, %54, %49 : vector<16x32xi1>, vector<16x32xf32>
    %cst_16 = arith.constant dense<0.000000e+00> : vector<2x384xf32>
    %56 = tpu.matmul %43, %8, %cst_16 {dimension_numbers = #tpu.dot_dimension_numbers<[1], [0], [0], [1], [0, 0, 1, 1], [], []>} : vector<2x32xf32>, vector<32x384xf32>, vector<2x384xf32> -> vector<2x384xf32>
    %57 = vector.extract_strided_slice %7 {offsets = [0, 1, 0], sizes = [2, 1, 384], strides = [1, 1, 1]} : vector<2x8x384xf32> to vector<2x1x384xf32>
    %58 = vector.shape_cast %57 : vector<2x1x384xf32> to vector<2x384xf32>
    %59 = vector.extract_strided_slice %58 {offsets = [0, 0], sizes = [2, 32], strides = [1, 1]} : vector<2x384xf32> to vector<2x32xf32>
    %60 = vector.extract_strided_slice %56 {offsets = [0, 0], sizes = [2, 32], strides = [1, 1]} : vector<2x384xf32> to vector<2x32xf32>
    %61 = arith.addf %59, %60 : vector<2x32xf32>
    %62 = arith.negf %61 : vector<2x32xf32>
    %63 = math.exp %62 : vector<2x32xf32>
    %cst_17 = arith.constant 1.000000e+00 : f32
    %64 = vector.broadcast %cst_17 : f32 to vector<2x32xf32>
    %65 = arith.addf %64, %63 : vector<2x32xf32>
    %66 = arith.divf %64, %65 : vector<2x32xf32>
    %67 = vector.extract_strided_slice %58 {offsets = [0, 128], sizes = [2, 32], strides = [1, 1]} : vector<2x384xf32> to vector<2x32xf32>
    %68 = vector.extract_strided_slice %56 {offsets = [0, 128], sizes = [2, 32], strides = [1, 1]} : vector<2x384xf32> to vector<2x32xf32>
    %69 = arith.addf %67, %68 : vector<2x32xf32>
    %70 = arith.negf %69 : vector<2x32xf32>
    %71 = math.exp %70 : vector<2x32xf32>
    %cst_18 = arith.constant 1.000000e+00 : f32
    %72 = vector.broadcast %cst_18 : f32 to vector<2x32xf32>
    %73 = arith.addf %72, %71 : vector<2x32xf32>
    %74 = arith.divf %72, %73 : vector<2x32xf32>
    %75 = vector.extract_strided_slice %58 {offsets = [0, 256], sizes = [2, 32], strides = [1, 1]} : vector<2x384xf32> to vector<2x32xf32>
    %76 = vector.extract_strided_slice %56 {offsets = [0, 256], sizes = [2, 32], strides = [1, 1]} : vector<2x384xf32> to vector<2x32xf32>
    %77 = vector.broadcast %9 : vector<1x32xf32> to vector<2x32xf32>
    %78 = arith.addf %76, %77 : vector<2x32xf32>
    %79 = arith.mulf %66, %78 : vector<2x32xf32>
    %80 = arith.addf %75, %79 : vector<2x32xf32>
    %81 = math.tanh %80 : vector<2x32xf32>
    %cst_19 = arith.constant 1.000000e+00 : f32
    %82 = vector.broadcast %cst_19 : f32 to vector<2x32xf32>
    %83 = arith.subf %82, %74 : vector<2x32xf32>
    %84 = arith.mulf %83, %81 : vector<2x32xf32>
    %85 = arith.mulf %74, %43 : vector<2x32xf32>
    %86 = arith.addf %84, %85 : vector<2x32xf32>
    %c1_i32 = arith.constant 1 : i32
    %87 = vector.broadcast %c1_i32 : i32 to vector<16x32xi32>
    %88 = arith.cmpi eq, %10, %87 : vector<16x32xi32>
    %89 = vector.extract_strided_slice %86 {offsets = [0, 0], sizes = [1, 32], strides = [1, 1]} : vector<2x32xf32> to vector<1x32xf32>
    %90 = vector.shape_cast %89 : vector<1x32xf32> to vector<1x32xf32>
    %91 = vector.broadcast %90 : vector<1x32xf32> to vector<16x32xf32>
    %92 = arith.select %88, %91, %55 : vector<16x32xi1>, vector<16x32xf32>
    %c9_i32 = arith.constant 9 : i32
    %93 = vector.broadcast %c9_i32 : i32 to vector<16x32xi32>
    %94 = arith.cmpi eq, %10, %93 : vector<16x32xi32>
    %95 = vector.extract_strided_slice %86 {offsets = [1, 0], sizes = [1, 32], strides = [1, 1]} : vector<2x32xf32> to vector<1x32xf32>
    %96 = vector.shape_cast %95 : vector<1x32xf32> to vector<1x32xf32>
    %97 = vector.broadcast %96 : vector<1x32xf32> to vector<16x32xf32>
    %98 = arith.select %94, %97, %92 : vector<16x32xi1>, vector<16x32xf32>
    %cst_20 = arith.constant dense<0.000000e+00> : vector<2x384xf32>
    %99 = tpu.matmul %86, %8, %cst_20 {dimension_numbers = #tpu.dot_dimension_numbers<[1], [0], [0], [1], [0, 0, 1, 1], [], []>} : vector<2x32xf32>, vector<32x384xf32>, vector<2x384xf32> -> vector<2x384xf32>
    %100 = vector.extract_strided_slice %7 {offsets = [0, 2, 0], sizes = [2, 1, 384], strides = [1, 1, 1]} : vector<2x8x384xf32> to vector<2x1x384xf32>
    %101 = vector.shape_cast %100 : vector<2x1x384xf32> to vector<2x384xf32>
    %102 = vector.extract_strided_slice %101 {offsets = [0, 0], sizes = [2, 32], strides = [1, 1]} : vector<2x384xf32> to vector<2x32xf32>
    %103 = vector.extract_strided_slice %99 {offsets = [0, 0], sizes = [2, 32], strides = [1, 1]} : vector<2x384xf32> to vector<2x32xf32>
    %104 = arith.addf %102, %103 : vector<2x32xf32>
    %105 = arith.negf %104 : vector<2x32xf32>
    %106 = math.exp %105 : vector<2x32xf32>
    %cst_21 = arith.constant 1.000000e+00 : f32
    %107 = vector.broadcast %cst_21 : f32 to vector<2x32xf32>
    %108 = arith.addf %107, %106 : vector<2x32xf32>
    %109 = arith.divf %107, %108 : vector<2x32xf32>
    %110 = vector.extract_strided_slice %101 {offsets = [0, 128], sizes = [2, 32], strides = [1, 1]} : vector<2x384xf32> to vector<2x32xf32>
    %111 = vector.extract_strided_slice %99 {offsets = [0, 128], sizes = [2, 32], strides = [1, 1]} : vector<2x384xf32> to vector<2x32xf32>
    %112 = arith.addf %110, %111 : vector<2x32xf32>
    %113 = arith.negf %112 : vector<2x32xf32>
    %114 = math.exp %113 : vector<2x32xf32>
    %cst_22 = arith.constant 1.000000e+00 : f32
    %115 = vector.broadcast %cst_22 : f32 to vector<2x32xf32>
    %116 = arith.addf %115, %114 : vector<2x32xf32>
    %117 = arith.divf %115, %116 : vector<2x32xf32>
    %118 = vector.extract_strided_slice %101 {offsets = [0, 256], sizes = [2, 32], strides = [1, 1]} : vector<2x384xf32> to vector<2x32xf32>
    %119 = vector.extract_strided_slice %99 {offsets = [0, 256], sizes = [2, 32], strides = [1, 1]} : vector<2x384xf32> to vector<2x32xf32>
    %120 = vector.broadcast %9 : vector<1x32xf32> to vector<2x32xf32>
    %121 = arith.addf %119, %120 : vector<2x32xf32>
    %122 = arith.mulf %109, %121 : vector<2x32xf32>
    %123 = arith.addf %118, %122 : vector<2x32xf32>
    %124 = math.tanh %123 : vector<2x32xf32>
    %cst_23 = arith.constant 1.000000e+00 : f32
    %125 = vector.broadcast %cst_23 : f32 to vector<2x32xf32>
    %126 = arith.subf %125, %117 : vector<2x32xf32>
    %127 = arith.mulf %126, %124 : vector<2x32xf32>
    %128 = arith.mulf %117, %86 : vector<2x32xf32>
    %129 = arith.addf %127, %128 : vector<2x32xf32>
    %c2_i32 = arith.constant 2 : i32
    %130 = vector.broadcast %c2_i32 : i32 to vector<16x32xi32>
    %131 = arith.cmpi eq, %10, %130 : vector<16x32xi32>
    %132 = vector.extract_strided_slice %129 {offsets = [0, 0], sizes = [1, 32], strides = [1, 1]} : vector<2x32xf32> to vector<1x32xf32>
    %133 = vector.shape_cast %132 : vector<1x32xf32> to vector<1x32xf32>
    %134 = vector.broadcast %133 : vector<1x32xf32> to vector<16x32xf32>
    %135 = arith.select %131, %134, %98 : vector<16x32xi1>, vector<16x32xf32>
    %c10_i32 = arith.constant 10 : i32
    %136 = vector.broadcast %c10_i32 : i32 to vector<16x32xi32>
    %137 = arith.cmpi eq, %10, %136 : vector<16x32xi32>
    %138 = vector.extract_strided_slice %129 {offsets = [1, 0], sizes = [1, 32], strides = [1, 1]} : vector<2x32xf32> to vector<1x32xf32>
    %139 = vector.shape_cast %138 : vector<1x32xf32> to vector<1x32xf32>
    %140 = vector.broadcast %139 : vector<1x32xf32> to vector<16x32xf32>
    %141 = arith.select %137, %140, %135 : vector<16x32xi1>, vector<16x32xf32>
    %cst_24 = arith.constant dense<0.000000e+00> : vector<2x384xf32>
    %142 = tpu.matmul %129, %8, %cst_24 {dimension_numbers = #tpu.dot_dimension_numbers<[1], [0], [0], [1], [0, 0, 1, 1], [], []>} : vector<2x32xf32>, vector<32x384xf32>, vector<2x384xf32> -> vector<2x384xf32>
    %143 = vector.extract_strided_slice %7 {offsets = [0, 3, 0], sizes = [2, 1, 384], strides = [1, 1, 1]} : vector<2x8x384xf32> to vector<2x1x384xf32>
    %144 = vector.shape_cast %143 : vector<2x1x384xf32> to vector<2x384xf32>
    %145 = vector.extract_strided_slice %144 {offsets = [0, 0], sizes = [2, 32], strides = [1, 1]} : vector<2x384xf32> to vector<2x32xf32>
    %146 = vector.extract_strided_slice %142 {offsets = [0, 0], sizes = [2, 32], strides = [1, 1]} : vector<2x384xf32> to vector<2x32xf32>
    %147 = arith.addf %145, %146 : vector<2x32xf32>
    %148 = arith.negf %147 : vector<2x32xf32>
    %149 = math.exp %148 : vector<2x32xf32>
    %cst_25 = arith.constant 1.000000e+00 : f32
    %150 = vector.broadcast %cst_25 : f32 to vector<2x32xf32>
    %151 = arith.addf %150, %149 : vector<2x32xf32>
    %152 = arith.divf %150, %151 : vector<2x32xf32>
    %153 = vector.extract_strided_slice %144 {offsets = [0, 128], sizes = [2, 32], strides = [1, 1]} : vector<2x384xf32> to vector<2x32xf32>
    %154 = vector.extract_strided_slice %142 {offsets = [0, 128], sizes = [2, 32], strides = [1, 1]} : vector<2x384xf32> to vector<2x32xf32>
    %155 = arith.addf %153, %154 : vector<2x32xf32>
    %156 = arith.negf %155 : vector<2x32xf32>
    %157 = math.exp %156 : vector<2x32xf32>
    %cst_26 = arith.constant 1.000000e+00 : f32
    %158 = vector.broadcast %cst_26 : f32 to vector<2x32xf32>
    %159 = arith.addf %158, %157 : vector<2x32xf32>
    %160 = arith.divf %158, %159 : vector<2x32xf32>
    %161 = vector.extract_strided_slice %144 {offsets = [0, 256], sizes = [2, 32], strides = [1, 1]} : vector<2x384xf32> to vector<2x32xf32>
    %162 = vector.extract_strided_slice %142 {offsets = [0, 256], sizes = [2, 32], strides = [1, 1]} : vector<2x384xf32> to vector<2x32xf32>
    %163 = vector.broadcast %9 : vector<1x32xf32> to vector<2x32xf32>
    %164 = arith.addf %162, %163 : vector<2x32xf32>
    %165 = arith.mulf %152, %164 : vector<2x32xf32>
    %166 = arith.addf %161, %165 : vector<2x32xf32>
    %167 = math.tanh %166 : vector<2x32xf32>
    %cst_27 = arith.constant 1.000000e+00 : f32
    %168 = vector.broadcast %cst_27 : f32 to vector<2x32xf32>
    %169 = arith.subf %168, %160 : vector<2x32xf32>
    %170 = arith.mulf %169, %167 : vector<2x32xf32>
    %171 = arith.mulf %160, %129 : vector<2x32xf32>
    %172 = arith.addf %170, %171 : vector<2x32xf32>
    %c3_i32 = arith.constant 3 : i32
    %173 = vector.broadcast %c3_i32 : i32 to vector<16x32xi32>
    %174 = arith.cmpi eq, %10, %173 : vector<16x32xi32>
    %175 = vector.extract_strided_slice %172 {offsets = [0, 0], sizes = [1, 32], strides = [1, 1]} : vector<2x32xf32> to vector<1x32xf32>
    %176 = vector.shape_cast %175 : vector<1x32xf32> to vector<1x32xf32>
    %177 = vector.broadcast %176 : vector<1x32xf32> to vector<16x32xf32>
    %178 = arith.select %174, %177, %141 : vector<16x32xi1>, vector<16x32xf32>
    %c11_i32 = arith.constant 11 : i32
    %179 = vector.broadcast %c11_i32 : i32 to vector<16x32xi32>
    %180 = arith.cmpi eq, %10, %179 : vector<16x32xi32>
    %181 = vector.extract_strided_slice %172 {offsets = [1, 0], sizes = [1, 32], strides = [1, 1]} : vector<2x32xf32> to vector<1x32xf32>
    %182 = vector.shape_cast %181 : vector<1x32xf32> to vector<1x32xf32>
    %183 = vector.broadcast %182 : vector<1x32xf32> to vector<16x32xf32>
    %184 = arith.select %180, %183, %178 : vector<16x32xi1>, vector<16x32xf32>
    %cst_28 = arith.constant dense<0.000000e+00> : vector<2x384xf32>
    %185 = tpu.matmul %172, %8, %cst_28 {dimension_numbers = #tpu.dot_dimension_numbers<[1], [0], [0], [1], [0, 0, 1, 1], [], []>} : vector<2x32xf32>, vector<32x384xf32>, vector<2x384xf32> -> vector<2x384xf32>
    %186 = vector.extract_strided_slice %7 {offsets = [0, 4, 0], sizes = [2, 1, 384], strides = [1, 1, 1]} : vector<2x8x384xf32> to vector<2x1x384xf32>
    %187 = vector.shape_cast %186 : vector<2x1x384xf32> to vector<2x384xf32>
    %188 = vector.extract_strided_slice %187 {offsets = [0, 0], sizes = [2, 32], strides = [1, 1]} : vector<2x384xf32> to vector<2x32xf32>
    %189 = vector.extract_strided_slice %185 {offsets = [0, 0], sizes = [2, 32], strides = [1, 1]} : vector<2x384xf32> to vector<2x32xf32>
    %190 = arith.addf %188, %189 : vector<2x32xf32>
    %191 = arith.negf %190 : vector<2x32xf32>
    %192 = math.exp %191 : vector<2x32xf32>
    %cst_29 = arith.constant 1.000000e+00 : f32
    %193 = vector.broadcast %cst_29 : f32 to vector<2x32xf32>
    %194 = arith.addf %193, %192 : vector<2x32xf32>
    %195 = arith.divf %193, %194 : vector<2x32xf32>
    %196 = vector.extract_strided_slice %187 {offsets = [0, 128], sizes = [2, 32], strides = [1, 1]} : vector<2x384xf32> to vector<2x32xf32>
    %197 = vector.extract_strided_slice %185 {offsets = [0, 128], sizes = [2, 32], strides = [1, 1]} : vector<2x384xf32> to vector<2x32xf32>
    %198 = arith.addf %196, %197 : vector<2x32xf32>
    %199 = arith.negf %198 : vector<2x32xf32>
    %200 = math.exp %199 : vector<2x32xf32>
    %cst_30 = arith.constant 1.000000e+00 : f32
    %201 = vector.broadcast %cst_30 : f32 to vector<2x32xf32>
    %202 = arith.addf %201, %200 : vector<2x32xf32>
    %203 = arith.divf %201, %202 : vector<2x32xf32>
    %204 = vector.extract_strided_slice %187 {offsets = [0, 256], sizes = [2, 32], strides = [1, 1]} : vector<2x384xf32> to vector<2x32xf32>
    %205 = vector.extract_strided_slice %185 {offsets = [0, 256], sizes = [2, 32], strides = [1, 1]} : vector<2x384xf32> to vector<2x32xf32>
    %206 = vector.broadcast %9 : vector<1x32xf32> to vector<2x32xf32>
    %207 = arith.addf %205, %206 : vector<2x32xf32>
    %208 = arith.mulf %195, %207 : vector<2x32xf32>
    %209 = arith.addf %204, %208 : vector<2x32xf32>
    %210 = math.tanh %209 : vector<2x32xf32>
    %cst_31 = arith.constant 1.000000e+00 : f32
    %211 = vector.broadcast %cst_31 : f32 to vector<2x32xf32>
    %212 = arith.subf %211, %203 : vector<2x32xf32>
    %213 = arith.mulf %212, %210 : vector<2x32xf32>
    %214 = arith.mulf %203, %172 : vector<2x32xf32>
    %215 = arith.addf %213, %214 : vector<2x32xf32>
    %c4_i32 = arith.constant 4 : i32
    %216 = vector.broadcast %c4_i32 : i32 to vector<16x32xi32>
    %217 = arith.cmpi eq, %10, %216 : vector<16x32xi32>
    %218 = vector.extract_strided_slice %215 {offsets = [0, 0], sizes = [1, 32], strides = [1, 1]} : vector<2x32xf32> to vector<1x32xf32>
    %219 = vector.shape_cast %218 : vector<1x32xf32> to vector<1x32xf32>
    %220 = vector.broadcast %219 : vector<1x32xf32> to vector<16x32xf32>
    %221 = arith.select %217, %220, %184 : vector<16x32xi1>, vector<16x32xf32>
    %c12_i32 = arith.constant 12 : i32
    %222 = vector.broadcast %c12_i32 : i32 to vector<16x32xi32>
    %223 = arith.cmpi eq, %10, %222 : vector<16x32xi32>
    %224 = vector.extract_strided_slice %215 {offsets = [1, 0], sizes = [1, 32], strides = [1, 1]} : vector<2x32xf32> to vector<1x32xf32>
    %225 = vector.shape_cast %224 : vector<1x32xf32> to vector<1x32xf32>
    %226 = vector.broadcast %225 : vector<1x32xf32> to vector<16x32xf32>
    %227 = arith.select %223, %226, %221 : vector<16x32xi1>, vector<16x32xf32>
    %cst_32 = arith.constant dense<0.000000e+00> : vector<2x384xf32>
    %228 = tpu.matmul %215, %8, %cst_32 {dimension_numbers = #tpu.dot_dimension_numbers<[1], [0], [0], [1], [0, 0, 1, 1], [], []>} : vector<2x32xf32>, vector<32x384xf32>, vector<2x384xf32> -> vector<2x384xf32>
    %229 = vector.extract_strided_slice %7 {offsets = [0, 5, 0], sizes = [2, 1, 384], strides = [1, 1, 1]} : vector<2x8x384xf32> to vector<2x1x384xf32>
    %230 = vector.shape_cast %229 : vector<2x1x384xf32> to vector<2x384xf32>
    %231 = vector.extract_strided_slice %230 {offsets = [0, 0], sizes = [2, 32], strides = [1, 1]} : vector<2x384xf32> to vector<2x32xf32>
    %232 = vector.extract_strided_slice %228 {offsets = [0, 0], sizes = [2, 32], strides = [1, 1]} : vector<2x384xf32> to vector<2x32xf32>
    %233 = arith.addf %231, %232 : vector<2x32xf32>
    %234 = arith.negf %233 : vector<2x32xf32>
    %235 = math.exp %234 : vector<2x32xf32>
    %cst_33 = arith.constant 1.000000e+00 : f32
    %236 = vector.broadcast %cst_33 : f32 to vector<2x32xf32>
    %237 = arith.addf %236, %235 : vector<2x32xf32>
    %238 = arith.divf %236, %237 : vector<2x32xf32>
    %239 = vector.extract_strided_slice %230 {offsets = [0, 128], sizes = [2, 32], strides = [1, 1]} : vector<2x384xf32> to vector<2x32xf32>
    %240 = vector.extract_strided_slice %228 {offsets = [0, 128], sizes = [2, 32], strides = [1, 1]} : vector<2x384xf32> to vector<2x32xf32>
    %241 = arith.addf %239, %240 : vector<2x32xf32>
    %242 = arith.negf %241 : vector<2x32xf32>
    %243 = math.exp %242 : vector<2x32xf32>
    %cst_34 = arith.constant 1.000000e+00 : f32
    %244 = vector.broadcast %cst_34 : f32 to vector<2x32xf32>
    %245 = arith.addf %244, %243 : vector<2x32xf32>
    %246 = arith.divf %244, %245 : vector<2x32xf32>
    %247 = vector.extract_strided_slice %230 {offsets = [0, 256], sizes = [2, 32], strides = [1, 1]} : vector<2x384xf32> to vector<2x32xf32>
    %248 = vector.extract_strided_slice %228 {offsets = [0, 256], sizes = [2, 32], strides = [1, 1]} : vector<2x384xf32> to vector<2x32xf32>
    %249 = vector.broadcast %9 : vector<1x32xf32> to vector<2x32xf32>
    %250 = arith.addf %248, %249 : vector<2x32xf32>
    %251 = arith.mulf %238, %250 : vector<2x32xf32>
    %252 = arith.addf %247, %251 : vector<2x32xf32>
    %253 = math.tanh %252 : vector<2x32xf32>
    %cst_35 = arith.constant 1.000000e+00 : f32
    %254 = vector.broadcast %cst_35 : f32 to vector<2x32xf32>
    %255 = arith.subf %254, %246 : vector<2x32xf32>
    %256 = arith.mulf %255, %253 : vector<2x32xf32>
    %257 = arith.mulf %246, %215 : vector<2x32xf32>
    %258 = arith.addf %256, %257 : vector<2x32xf32>
    %c5_i32 = arith.constant 5 : i32
    %259 = vector.broadcast %c5_i32 : i32 to vector<16x32xi32>
    %260 = arith.cmpi eq, %10, %259 : vector<16x32xi32>
    %261 = vector.extract_strided_slice %258 {offsets = [0, 0], sizes = [1, 32], strides = [1, 1]} : vector<2x32xf32> to vector<1x32xf32>
    %262 = vector.shape_cast %261 : vector<1x32xf32> to vector<1x32xf32>
    %263 = vector.broadcast %262 : vector<1x32xf32> to vector<16x32xf32>
    %264 = arith.select %260, %263, %227 : vector<16x32xi1>, vector<16x32xf32>
    %c13_i32 = arith.constant 13 : i32
    %265 = vector.broadcast %c13_i32 : i32 to vector<16x32xi32>
    %266 = arith.cmpi eq, %10, %265 : vector<16x32xi32>
    %267 = vector.extract_strided_slice %258 {offsets = [1, 0], sizes = [1, 32], strides = [1, 1]} : vector<2x32xf32> to vector<1x32xf32>
    %268 = vector.shape_cast %267 : vector<1x32xf32> to vector<1x32xf32>
    %269 = vector.broadcast %268 : vector<1x32xf32> to vector<16x32xf32>
    %270 = arith.select %266, %269, %264 : vector<16x32xi1>, vector<16x32xf32>
    %cst_36 = arith.constant dense<0.000000e+00> : vector<2x384xf32>
    %271 = tpu.matmul %258, %8, %cst_36 {dimension_numbers = #tpu.dot_dimension_numbers<[1], [0], [0], [1], [0, 0, 1, 1], [], []>} : vector<2x32xf32>, vector<32x384xf32>, vector<2x384xf32> -> vector<2x384xf32>
    %272 = vector.extract_strided_slice %7 {offsets = [0, 6, 0], sizes = [2, 1, 384], strides = [1, 1, 1]} : vector<2x8x384xf32> to vector<2x1x384xf32>
    %273 = vector.shape_cast %272 : vector<2x1x384xf32> to vector<2x384xf32>
    %274 = vector.extract_strided_slice %273 {offsets = [0, 0], sizes = [2, 32], strides = [1, 1]} : vector<2x384xf32> to vector<2x32xf32>
    %275 = vector.extract_strided_slice %271 {offsets = [0, 0], sizes = [2, 32], strides = [1, 1]} : vector<2x384xf32> to vector<2x32xf32>
    %276 = arith.addf %274, %275 : vector<2x32xf32>
    %277 = arith.negf %276 : vector<2x32xf32>
    %278 = math.exp %277 : vector<2x32xf32>
    %cst_37 = arith.constant 1.000000e+00 : f32
    %279 = vector.broadcast %cst_37 : f32 to vector<2x32xf32>
    %280 = arith.addf %279, %278 : vector<2x32xf32>
    %281 = arith.divf %279, %280 : vector<2x32xf32>
    %282 = vector.extract_strided_slice %273 {offsets = [0, 128], sizes = [2, 32], strides = [1, 1]} : vector<2x384xf32> to vector<2x32xf32>
    %283 = vector.extract_strided_slice %271 {offsets = [0, 128], sizes = [2, 32], strides = [1, 1]} : vector<2x384xf32> to vector<2x32xf32>
    %284 = arith.addf %282, %283 : vector<2x32xf32>
    %285 = arith.negf %284 : vector<2x32xf32>
    %286 = math.exp %285 : vector<2x32xf32>
    %cst_38 = arith.constant 1.000000e+00 : f32
    %287 = vector.broadcast %cst_38 : f32 to vector<2x32xf32>
    %288 = arith.addf %287, %286 : vector<2x32xf32>
    %289 = arith.divf %287, %288 : vector<2x32xf32>
    %290 = vector.extract_strided_slice %273 {offsets = [0, 256], sizes = [2, 32], strides = [1, 1]} : vector<2x384xf32> to vector<2x32xf32>
    %291 = vector.extract_strided_slice %271 {offsets = [0, 256], sizes = [2, 32], strides = [1, 1]} : vector<2x384xf32> to vector<2x32xf32>
    %292 = vector.broadcast %9 : vector<1x32xf32> to vector<2x32xf32>
    %293 = arith.addf %291, %292 : vector<2x32xf32>
    %294 = arith.mulf %281, %293 : vector<2x32xf32>
    %295 = arith.addf %290, %294 : vector<2x32xf32>
    %296 = math.tanh %295 : vector<2x32xf32>
    %cst_39 = arith.constant 1.000000e+00 : f32
    %297 = vector.broadcast %cst_39 : f32 to vector<2x32xf32>
    %298 = arith.subf %297, %289 : vector<2x32xf32>
    %299 = arith.mulf %298, %296 : vector<2x32xf32>
    %300 = arith.mulf %289, %258 : vector<2x32xf32>
    %301 = arith.addf %299, %300 : vector<2x32xf32>
    %c6_i32 = arith.constant 6 : i32
    %302 = vector.broadcast %c6_i32 : i32 to vector<16x32xi32>
    %303 = arith.cmpi eq, %10, %302 : vector<16x32xi32>
    %304 = vector.extract_strided_slice %301 {offsets = [0, 0], sizes = [1, 32], strides = [1, 1]} : vector<2x32xf32> to vector<1x32xf32>
    %305 = vector.shape_cast %304 : vector<1x32xf32> to vector<1x32xf32>
    %306 = vector.broadcast %305 : vector<1x32xf32> to vector<16x32xf32>
    %307 = arith.select %303, %306, %270 : vector<16x32xi1>, vector<16x32xf32>
    %c14_i32 = arith.constant 14 : i32
    %308 = vector.broadcast %c14_i32 : i32 to vector<16x32xi32>
    %309 = arith.cmpi eq, %10, %308 : vector<16x32xi32>
    %310 = vector.extract_strided_slice %301 {offsets = [1, 0], sizes = [1, 32], strides = [1, 1]} : vector<2x32xf32> to vector<1x32xf32>
    %311 = vector.shape_cast %310 : vector<1x32xf32> to vector<1x32xf32>
    %312 = vector.broadcast %311 : vector<1x32xf32> to vector<16x32xf32>
    %313 = arith.select %309, %312, %307 : vector<16x32xi1>, vector<16x32xf32>
    %cst_40 = arith.constant dense<0.000000e+00> : vector<2x384xf32>
    %314 = tpu.matmul %301, %8, %cst_40 {dimension_numbers = #tpu.dot_dimension_numbers<[1], [0], [0], [1], [0, 0, 1, 1], [], []>} : vector<2x32xf32>, vector<32x384xf32>, vector<2x384xf32> -> vector<2x384xf32>
    %315 = vector.extract_strided_slice %7 {offsets = [0, 7, 0], sizes = [2, 1, 384], strides = [1, 1, 1]} : vector<2x8x384xf32> to vector<2x1x384xf32>
    %316 = vector.shape_cast %315 : vector<2x1x384xf32> to vector<2x384xf32>
    %317 = vector.extract_strided_slice %316 {offsets = [0, 0], sizes = [2, 32], strides = [1, 1]} : vector<2x384xf32> to vector<2x32xf32>
    %318 = vector.extract_strided_slice %314 {offsets = [0, 0], sizes = [2, 32], strides = [1, 1]} : vector<2x384xf32> to vector<2x32xf32>
    %319 = arith.addf %317, %318 : vector<2x32xf32>
    %320 = arith.negf %319 : vector<2x32xf32>
    %321 = math.exp %320 : vector<2x32xf32>
    %cst_41 = arith.constant 1.000000e+00 : f32
    %322 = vector.broadcast %cst_41 : f32 to vector<2x32xf32>
    %323 = arith.addf %322, %321 : vector<2x32xf32>
    %324 = arith.divf %322, %323 : vector<2x32xf32>
    %325 = vector.extract_strided_slice %316 {offsets = [0, 128], sizes = [2, 32], strides = [1, 1]} : vector<2x384xf32> to vector<2x32xf32>
    %326 = vector.extract_strided_slice %314 {offsets = [0, 128], sizes = [2, 32], strides = [1, 1]} : vector<2x384xf32> to vector<2x32xf32>
    %327 = arith.addf %325, %326 : vector<2x32xf32>
    %328 = arith.negf %327 : vector<2x32xf32>
    %329 = math.exp %328 : vector<2x32xf32>
    %cst_42 = arith.constant 1.000000e+00 : f32
    %330 = vector.broadcast %cst_42 : f32 to vector<2x32xf32>
    %331 = arith.addf %330, %329 : vector<2x32xf32>
    %332 = arith.divf %330, %331 : vector<2x32xf32>
    %333 = vector.extract_strided_slice %316 {offsets = [0, 256], sizes = [2, 32], strides = [1, 1]} : vector<2x384xf32> to vector<2x32xf32>
    %334 = vector.extract_strided_slice %314 {offsets = [0, 256], sizes = [2, 32], strides = [1, 1]} : vector<2x384xf32> to vector<2x32xf32>
    %335 = vector.broadcast %9 : vector<1x32xf32> to vector<2x32xf32>
    %336 = arith.addf %334, %335 : vector<2x32xf32>
    %337 = arith.mulf %324, %336 : vector<2x32xf32>
    %338 = arith.addf %333, %337 : vector<2x32xf32>
    %339 = math.tanh %338 : vector<2x32xf32>
    %cst_43 = arith.constant 1.000000e+00 : f32
    %340 = vector.broadcast %cst_43 : f32 to vector<2x32xf32>
    %341 = arith.subf %340, %332 : vector<2x32xf32>
    %342 = arith.mulf %341, %339 : vector<2x32xf32>
    %343 = arith.mulf %332, %301 : vector<2x32xf32>
    %344 = arith.addf %342, %343 : vector<2x32xf32>
    %c7_i32 = arith.constant 7 : i32
    %345 = vector.broadcast %c7_i32 : i32 to vector<16x32xi32>
    %346 = arith.cmpi eq, %10, %345 : vector<16x32xi32>
    %347 = vector.extract_strided_slice %344 {offsets = [0, 0], sizes = [1, 32], strides = [1, 1]} : vector<2x32xf32> to vector<1x32xf32>
    %348 = vector.shape_cast %347 : vector<1x32xf32> to vector<1x32xf32>
    %349 = vector.broadcast %348 : vector<1x32xf32> to vector<16x32xf32>
    %350 = arith.select %346, %349, %313 : vector<16x32xi1>, vector<16x32xf32>
    %c15_i32 = arith.constant 15 : i32
    %351 = vector.broadcast %c15_i32 : i32 to vector<16x32xi32>
    %352 = arith.cmpi eq, %10, %351 : vector<16x32xi32>
    %353 = vector.extract_strided_slice %344 {offsets = [1, 0], sizes = [1, 32], strides = [1, 1]} : vector<2x32xf32> to vector<1x32xf32>
    %354 = vector.shape_cast %353 : vector<1x32xf32> to vector<1x32xf32>
    %355 = vector.broadcast %354 : vector<1x32xf32> to vector<16x32xf32>
    %356 = arith.select %352, %355, %350 : vector<16x32xi1>, vector<16x32xf32>
    %c0_44 = arith.constant 0 : index
    %c0_45 = arith.constant 0 : index
    %357 = vector.load %arg6[%c0_44, %c0_45] : memref<32x544xf32, #tpu.memory_space<vmem>>, vector<32x544xf32>
    %cst_46 = arith.constant dense<0.000000e+00> : vector<16x544xf32>
    %358 = tpu.matmul %356, %357, %cst_46 {dimension_numbers = #tpu.dot_dimension_numbers<[1], [0], [0], [1], [0, 0, 1, 1], [], []>} : vector<16x32xf32>, vector<32x544xf32>, vector<16x544xf32> -> vector<16x544xf32>
    %c0_47 = arith.constant 0 : index
    %c0_48 = arith.constant 0 : index
    %359 = vector.load %arg7[%c0_47, %c0_48] : memref<1x544xf32, #tpu.memory_space<vmem>>, vector<1x544xf32>
    %360 = vector.broadcast %359 : vector<1x544xf32> to vector<16x544xf32>
    %361 = arith.addf %358, %360 : vector<16x544xf32>
    %362 = vector.extract_strided_slice %361 {offsets = [0, 0], sizes = [16, 512], strides = [1, 1]} : vector<16x544xf32> to vector<16x512xf32>
    %363 = vector.extract_strided_slice %361 {offsets = [0, 512], sizes = [16, 32], strides = [1, 1]} : vector<16x544xf32> to vector<16x32xf32>
    %c0_49 = arith.constant 0 : index
    %c0_50 = arith.constant 0 : index
    %c0_51 = arith.constant 0 : index
    %364 = vector.load %arg1[%c0_49, %c0_50, %c0_51] : memref<2x16x32xf32, #tpu.memory_space<vmem>>, vector<2x16x32xf32>
    %365 = vector.shape_cast %364 : vector<2x16x32xf32> to vector<32x32xf32>
    %c0_52 = arith.constant 0 : index
    %c0_53 = arith.constant 0 : index
    %366 = vector.load %arg8[%c0_52, %c0_53] : memref<32x512xf32, #tpu.memory_space<vmem>>, vector<32x512xf32>
    %cst_54 = arith.constant dense<0.000000e+00> : vector<32x512xf32>
    %367 = tpu.matmul %365, %366, %cst_54 {dimension_numbers = #tpu.dot_dimension_numbers<[1], [0], [0], [1], [0, 0, 1, 1], [], []>} : vector<32x32xf32>, vector<32x512xf32>, vector<32x512xf32> -> vector<32x512xf32>
    %c0_55 = arith.constant 0 : index
    %c0_56 = arith.constant 0 : index
    %368 = vector.load %arg9[%c0_55, %c0_56] : memref<1x512xf32, #tpu.memory_space<vmem>>, vector<1x512xf32>
    %369 = vector.broadcast %368 : vector<1x512xf32> to vector<32x512xf32>
    %370 = arith.addf %367, %369 : vector<32x512xf32>
    %371 = vector.extract_strided_slice %362 {offsets = [0, 0], sizes = [16, 128], strides = [1, 1]} : vector<16x512xf32> to vector<16x128xf32>
    %372 = vector.shape_cast %371 : vector<16x128xf32> to vector<2x1x8x128xf32>
    %373 = vector.extract_strided_slice %362 {offsets = [0, 128], sizes = [16, 128], strides = [1, 1]} : vector<16x512xf32> to vector<16x128xf32>
    %374 = vector.shape_cast %373 : vector<16x128xf32> to vector<2x1x8x128xf32>
    %375 = vector.extract_strided_slice %362 {offsets = [0, 256], sizes = [16, 128], strides = [1, 1]} : vector<16x512xf32> to vector<16x128xf32>
    %376 = vector.shape_cast %375 : vector<16x128xf32> to vector<2x1x8x128xf32>
    %377 = vector.extract_strided_slice %362 {offsets = [0, 384], sizes = [16, 128], strides = [1, 1]} : vector<16x512xf32> to vector<16x128xf32>
    %378 = vector.shape_cast %377 : vector<16x128xf32> to vector<2x1x8x128xf32>
    %379 = tpu.concatenate %372, %374, %376, %378 in 1 : vector<2x1x8x128xf32>, vector<2x1x8x128xf32>, vector<2x1x8x128xf32>, vector<2x1x8x128xf32> -> vector<2x4x8x128xf32>
    %380 = vector.shape_cast %379 : vector<2x4x8x128xf32> to vector<8x8x128xf32>
    %381 = vector.extract_strided_slice %370 {offsets = [0, 0], sizes = [32, 128], strides = [1, 1]} : vector<32x512xf32> to vector<32x128xf32>
    %382 = vector.shape_cast %381 : vector<32x128xf32> to vector<2x1x16x128xf32>
    %383 = vector.extract_strided_slice %370 {offsets = [0, 128], sizes = [32, 128], strides = [1, 1]} : vector<32x512xf32> to vector<32x128xf32>
    %384 = vector.shape_cast %383 : vector<32x128xf32> to vector<2x1x16x128xf32>
    %385 = vector.extract_strided_slice %370 {offsets = [0, 256], sizes = [32, 128], strides = [1, 1]} : vector<32x512xf32> to vector<32x128xf32>
    %386 = vector.shape_cast %385 : vector<32x128xf32> to vector<2x1x16x128xf32>
    %387 = vector.extract_strided_slice %370 {offsets = [0, 384], sizes = [32, 128], strides = [1, 1]} : vector<32x512xf32> to vector<32x128xf32>
    %388 = vector.shape_cast %387 : vector<32x128xf32> to vector<2x1x16x128xf32>
    %389 = tpu.concatenate %382, %384, %386, %388 in 1 : vector<2x1x16x128xf32>, vector<2x1x16x128xf32>, vector<2x1x16x128xf32>, vector<2x1x16x128xf32> -> vector<2x4x16x128xf32>
    %390 = vector.shape_cast %389 : vector<2x4x16x128xf32> to vector<8x16x128xf32>
    "tpu.trace_start"() <{level = 10 : i32, message = "ntd,nsd->nts"}> : () -> ()
    %cst_57 = arith.constant dense<0.000000e+00> : vector<8x8x16xf32>
    %391 = tpu.matmul %380, %390, %cst_57 {dimension_numbers = #tpu.dot_dimension_numbers<[2], [2], [1], [1], [0, 0, 0, 1, 1, 1], [0], [0]>} : vector<8x8x128xf32>, vector<8x16x128xf32>, vector<8x8x16xf32> -> vector<8x8x16xf32>
    "tpu.trace_stop"() : () -> ()
    %cst_58 = arith.constant dense<0xFF800000> : vector<8x8xf32>
    %392 = vector.multi_reduction <maximumf>, %391, %cst_58 [2] : vector<8x8x16xf32> to vector<8x8xf32>
    %393 = vector.shape_cast %392 : vector<8x8xf32> to vector<8x8x1xf32>
    %394 = vector.broadcast %393 : vector<8x8x1xf32> to vector<8x8x16xf32>
    %395 = arith.subf %391, %394 : vector<8x8x16xf32>
    %396 = math.exp %395 : vector<8x8x16xf32>
    %cst_59 = arith.constant dense<0.000000e+00> : vector<8x8xf32>
    %397 = vector.multi_reduction <add>, %396, %cst_59 [2] : vector<8x8x16xf32> to vector<8x8xf32>
    %398 = vector.shape_cast %397 : vector<8x8xf32> to vector<8x8x1xf32>
    %399 = tpu.reciprocal %398 {approx = true} : vector<8x8x1xf32> -> vector<8x8x1xf32>
    %400 = vector.broadcast %399 : vector<8x8x1xf32> to vector<8x8x16xf32>
    %401 = arith.mulf %396, %400 : vector<8x8x16xf32>
    "tpu.trace_start"() <{level = 10 : i32, message = "nts,nsd->ntd"}> : () -> ()
    %cst_60 = arith.constant dense<0.000000e+00> : vector<8x8x128xf32>
    %402 = tpu.matmul %401, %390, %cst_60 {dimension_numbers = #tpu.dot_dimension_numbers<[2], [1], [1], [2], [0, 0, 0, 1, 1, 2], [0], [0]>} : vector<8x8x16xf32>, vector<8x16x128xf32>, vector<8x8x128xf32> -> vector<8x8x128xf32>
    "tpu.trace_stop"() : () -> ()
    %403 = vector.shape_cast %402 : vector<8x8x128xf32> to vector<2x4x8x128xf32>
    %404 = vector.extract_strided_slice %403 {offsets = [0, 0, 0, 0], sizes = [2, 1, 8, 128], strides = [1, 1, 1, 1]} : vector<2x4x8x128xf32> to vector<2x1x8x128xf32>
    %405 = vector.shape_cast %404 : vector<2x1x8x128xf32> to vector<2x8x128xf32>
    %406 = vector.shape_cast %405 : vector<2x8x128xf32> to vector<16x128xf32>
    %407 = vector.extract_strided_slice %403 {offsets = [0, 1, 0, 0], sizes = [2, 1, 8, 128], strides = [1, 1, 1, 1]} : vector<2x4x8x128xf32> to vector<2x1x8x128xf32>
    %408 = vector.shape_cast %407 : vector<2x1x8x128xf32> to vector<2x8x128xf32>
    %409 = vector.shape_cast %408 : vector<2x8x128xf32> to vector<16x128xf32>
    %410 = vector.extract_strided_slice %403 {offsets = [0, 2, 0, 0], sizes = [2, 1, 8, 128], strides = [1, 1, 1, 1]} : vector<2x4x8x128xf32> to vector<2x1x8x128xf32>
    %411 = vector.shape_cast %410 : vector<2x1x8x128xf32> to vector<2x8x128xf32>
    %412 = vector.shape_cast %411 : vector<2x8x128xf32> to vector<16x128xf32>
    %413 = vector.extract_strided_slice %403 {offsets = [0, 3, 0, 0], sizes = [2, 1, 8, 128], strides = [1, 1, 1, 1]} : vector<2x4x8x128xf32> to vector<2x1x8x128xf32>
    %414 = vector.shape_cast %413 : vector<2x1x8x128xf32> to vector<2x8x128xf32>
    %415 = vector.shape_cast %414 : vector<2x8x128xf32> to vector<16x128xf32>
    %416 = tpu.concatenate %406, %409, %412, %415 in 1 : vector<16x128xf32>, vector<16x128xf32>, vector<16x128xf32>, vector<16x128xf32> -> vector<16x512xf32>
    %c0_61 = arith.constant 0 : index
    %c0_62 = arith.constant 0 : index
    %417 = vector.load %arg10[%c0_61, %c0_62] : memref<512x32xf32, #tpu.memory_space<vmem>>, vector<512x32xf32>
    %cst_63 = arith.constant dense<0.000000e+00> : vector<16x32xf32>
    %418 = tpu.matmul %416, %417, %cst_63 {dimension_numbers = #tpu.dot_dimension_numbers<[1], [0], [0], [1], [0, 0, 1, 1], [], []>} : vector<16x512xf32>, vector<512x32xf32>, vector<16x32xf32> -> vector<16x32xf32>
    %419 = arith.addf %418, %363 : vector<16x32xf32>
    %420 = math.tanh %419 : vector<16x32xf32>
    %c0_64 = arith.constant 0 : index
    %c0_65 = arith.constant 0 : index
    %421 = vector.load %arg11[%c0_64, %c0_65] : memref<32x16xf32, #tpu.memory_space<vmem>>, vector<32x16xf32>
    %cst_66 = arith.constant dense<0.000000e+00> : vector<16x16xf32>
    %422 = tpu.matmul %420, %421, %cst_66 {dimension_numbers = #tpu.dot_dimension_numbers<[1], [0], [0], [1], [0, 0, 1, 1], [], []>} : vector<16x32xf32>, vector<32x16xf32>, vector<16x16xf32> -> vector<16x16xf32>
    %c0_67 = arith.constant 0 : index
    %c0_68 = arith.constant 0 : index
    %423 = vector.load %arg12[%c0_67, %c0_68] : memref<1x16xf32, #tpu.memory_space<vmem>>, vector<1x16xf32>
    %424 = vector.broadcast %423 : vector<1x16xf32> to vector<16x16xf32>
    %425 = arith.addf %422, %424 : vector<16x16xf32>
    %426 = vector.shape_cast %425 : vector<16x16xf32> to vector<2x8x16xf32>
    %cst_69 = arith.constant dense<0xFF800000> : vector<2x8xf32>
    %427 = vector.multi_reduction <maximumf>, %426, %cst_69 [2] : vector<2x8x16xf32> to vector<2x8xf32>
    %428 = vector.shape_cast %427 : vector<2x8xf32> to vector<2x8x1xf32>
    %429 = tpu.iota {dimensions = array<i32: 2>} : vector<2x8x16xi32>
    %430 = vector.broadcast %428 : vector<2x8x1xf32> to vector<2x8x16xf32>
    %431 = arith.cmpf oeq, %426, %430 : vector<2x8x16xf32>
    %c16_i32 = arith.constant 16 : i32
    %432 = vector.broadcast %c16_i32 : i32 to vector<2x8x16xi32>
    %433 = arith.select %431, %429, %432 : vector<2x8x16xi1>, vector<2x8x16xi32>
    %cst_70 = arith.constant dense<2147483647> : vector<2x8xi32>
    %434 = vector.multi_reduction <minsi>, %433, %cst_70 [2] : vector<2x8x16xi32> to vector<2x8xi32>
    %c0_71 = arith.constant 0 : index
    %c0_72 = arith.constant 0 : index
    %435 = vector.load %arg14[%c0_71, %c0_72] : memref<2x8xi32, #tpu.memory_space<vmem>>, vector<2x8xi32>
    tpu.vector_store %arg14[%c0_71, %c0_72], %434 {strides = array<i32>} : memref<2x8xi32, #tpu.memory_space<vmem>>, vector<2x8xi32>,
    %cst_73 = arith.constant dense<0xFF800000> : vector<16xf32>
    %436 = vector.multi_reduction <maximumf>, %425, %cst_73 [1] : vector<16x16xf32> to vector<16xf32>
    %437 = vector.shape_cast %436 : vector<16xf32> to vector<16x1xf32>
    %438 = vector.broadcast %437 : vector<16x1xf32> to vector<16x16xf32>
    %439 = arith.subf %425, %438 : vector<16x16xf32>
    %440 = math.exp %439 : vector<16x16xf32>
    %cst_74 = arith.constant dense<0.000000e+00> : vector<16xf32>
    %441 = vector.multi_reduction <add>, %440, %cst_74 [1] : vector<16x16xf32> to vector<16xf32>
    %442 = vector.shape_cast %441 : vector<16xf32> to vector<16x1xf32>
    %443 = math.log %442 : vector<16x1xf32>
    %444 = arith.addf %443, %437 : vector<16x1xf32>
    %445 = vector.broadcast %444 : vector<16x1xf32> to vector<16x16xf32>
    %446 = arith.subf %425, %445 : vector<16x16xf32>
    %447 = vector.shape_cast %446 : vector<16x16xf32> to vector<2x8x16xf32>
    %c0_75 = arith.constant 0 : index
    %c0_76 = arith.constant 0 : index
    %c0_77 = arith.constant 0 : index
    %448 = vector.load %arg13[%c0_75, %c0_76, %c0_77] : memref<2x8x16xf32, #tpu.memory_space<vmem>>, vector<2x8x16xf32>
    tpu.vector_store %arg13[%c0_75, %c0_76, %c0_77], %447 {strides = array<i32>} : memref<2x8x16xf32, #tpu.memory_space<vmem>>, vector<2x8x16xf32>,
    return
  }
}

</mosaic_0001>

<llo_original>
// kernel: tpu_custom_call.1
$region0: #{tpu_custom_call.1}
  #allocation0 [shape = 'u32[]', space=smem, size = 0x4, offset = 0x4, fixed_abs, tag = 'smem constant byte address 0x4 - core index']
  #allocation1 [shape = 'u32[144,128]{1,0:T(1,128)}', space=vmem, size = 0x12000, scoped, tag = 'internal scratch']
  %s0 = inlined_call_operand.vmem [shape: f32[2,8,32], index: 0, kind: input, shape index: {}]
  %s1 = inlined_call_operand.vmem [shape: f32[2,16,32], index: 1, kind: input, shape index: {}]
  %s2 = inlined_call_operand.vmem [shape: f32[32,384], index: 2, kind: input, shape index: {}]
  %s3 = inlined_call_operand.vmem [shape: f32[32,384], index: 3, kind: input, shape index: {}]
  %s4 = inlined_call_operand.vmem [shape: f32[1,384], index: 4, kind: input, shape index: {}]
  %s5 = inlined_call_operand.vmem [shape: f32[1,32], index: 5, kind: input, shape index: {}]
  %s6 = inlined_call_operand.vmem [shape: f32[32,544], index: 6, kind: input, shape index: {}]
  %s7 = inlined_call_operand.vmem [shape: f32[1,544], index: 7, kind: input, shape index: {}]
  %s8 = inlined_call_operand.vmem [shape: f32[32,512], index: 8, kind: input, shape index: {}]
  %s9 = inlined_call_operand.vmem [shape: f32[1,512], index: 9, kind: input, shape index: {}]
  %s10 = inlined_call_operand.vmem [shape: f32[512,32], index: 10, kind: input, shape index: {}]
  %s11 = inlined_call_operand.vmem [shape: f32[32,16], index: 11, kind: input, shape index: {}]
  %s12 = inlined_call_operand.vmem [shape: f32[1,16], index: 12, kind: input, shape index: {}]
  %s13 = inlined_call_operand.hbm [shape: f32[2,8,16], index: 13, kind: output, shape index: {0}]
  %s14 = inlined_call_operand.hbm [shape: s32[2,8], index: 14, kind: output, shape index: {1}]
  %15 = xla_tuple %s13, %s14
  %s16 = sld [smem:[#allocation0]]
  $region70: #{tpu_custom_call.1} parent=0
    _
  %s18 = ssub.s32 1, %s16
  %s19 = scalar_select 0, %s18, %s16
  $region1: #{tpu_custom_call.1} parent=0
    #allocation2 [shape = 'u8[8192]{0}', space=vmem, size = 0x2000, scoped, tag = 'output window, operand 0, single buffered']
    #allocation3 [shape = 's32[1]{0}', space=sflag, size = 0x4, scoped, tag = 'scoped memory for tpu_custom_call.1']
    #allocation4 [shape = 'u8[1024]{0}', space=vmem, size = 0x400, scoped, tag = 'output window, operand 1, single buffered']
    #allocation5 [shape = 's32[1]{0}', space=sflag, size = 0x4, scoped, tag = 'scoped memory for tpu_custom_call.1']
    %20 = vsyncpa [#allocation3], 0
    %21 = vsyncpa [#allocation5], 0
    // Predicated region
    $region2: #{tpu_custom_call.1} parent=1 // pred_check
      _
    $region3: #{tpu_custom_call.1} parent=1 // pred_check_branch
      %23 = sbr.rel (0) target = $region5
    $region4: #{tpu_custom_call.1} parent=1 // pred_region
      _
    $region5: #{tpu_custom_call.1} parent=1 // pred_fallthru
      _
    // Predicated region
    $region6: #{tpu_custom_call.1} parent=1 // pred_check
      _
    $region7: #{tpu_custom_call.1} parent=1 // pred_check_branch
      %25 = sbr.rel (0) target = $region9
    $region8: #{tpu_custom_call.1} parent=1 // pred_region
      _
    $region9: #{tpu_custom_call.1} parent=1 // pred_fallthru
      _
    // Predicated region
    $region10: #{tpu_custom_call.1} parent=1 // pred_check
      _
    $region11: #{tpu_custom_call.1} parent=1 // pred_check_branch
      %27 = sbr.rel (0) target = $region13
    $region12: #{tpu_custom_call.1} parent=1 // pred_region
      _
    $region13: #{tpu_custom_call.1} parent=1 // pred_fallthru
      _
    // Predicated region
    $region14: #{tpu_custom_call.1} parent=1 // pred_check
      _
    $region15: #{tpu_custom_call.1} parent=1 // pred_check_branch
      %29 = sbr.rel (0) target = $region17
    $region16: #{tpu_custom_call.1} parent=1 // pred_region
      _
    $region17: #{tpu_custom_call.1} parent=1 // pred_fallthru
      _
    // Predicated region
    $region18: #{tpu_custom_call.1} parent=1 // pred_check
      _
    $region19: #{tpu_custom_call.1} parent=1 // pred_check_branch
      %31 = sbr.rel (0) target = $region21
    $region20: #{tpu_custom_call.1} parent=1 // pred_region
      _
    $region21: #{tpu_custom_call.1} parent=1 // pred_fallthru
      _
    // Predicated region
    $region22: #{tpu_custom_call.1} parent=1 // pred_check
      _
    $region23: #{tpu_custom_call.1} parent=1 // pred_check_branch
      %33 = sbr.rel (0) target = $region25
    $region24: #{tpu_custom_call.1} parent=1 // pred_region
      _
    $region25: #{tpu_custom_call.1} parent=1 // pred_fallthru
      _
    // Predicated region
    $region26: #{tpu_custom_call.1} parent=1 // pred_check
      _
    $region27: #{tpu_custom_call.1} parent=1 // pred_check_branch
      %35 = sbr.rel (0) target = $region29
    $region28: #{tpu_custom_call.1} parent=1 // pred_region
      _
    $region29: #{tpu_custom_call.1} parent=1 // pred_fallthru
      _
    // Predicated region
    $region30: #{tpu_custom_call.1} parent=1 // pred_check
      _
    $region31: #{tpu_custom_call.1} parent=1 // pred_check_branch
      %37 = sbr.rel (0) target = $region33
    $region32: #{tpu_custom_call.1} parent=1 // pred_region
      _
    $region33: #{tpu_custom_call.1} parent=1 // pred_fallthru
      _
    // Predicated region
    $region34: #{tpu_custom_call.1} parent=1 // pred_check
      _
    $region35: #{tpu_custom_call.1} parent=1 // pred_check_branch
      %39 = sbr.rel (0) target = $region37
    $region36: #{tpu_custom_call.1} parent=1 // pred_region
      _
    $region37: #{tpu_custom_call.1} parent=1 // pred_fallthru
      _
    // Predicated region
    $region38: #{tpu_custom_call.1} parent=1 // pred_check
      _
    $region39: #{tpu_custom_call.1} parent=1 // pred_check_branch
      %41 = sbr.rel (0) target = $region41
    $region40: #{tpu_custom_call.1} parent=1 // pred_region
      _
    $region41: #{tpu_custom_call.1} parent=1 // pred_fallthru
      _
    // Predicated region
    $region42: #{tpu_custom_call.1} parent=1 // pred_check
      _
    $region43: #{tpu_custom_call.1} parent=1 // pred_check_branch
      %43 = sbr.rel (0) target = $region45
    $region44: #{tpu_custom_call.1} parent=1 // pred_region
      _
    $region45: #{tpu_custom_call.1} parent=1 // pred_fallthru
      _
    // Predicated region
    $region46: #{tpu_custom_call.1} parent=1 // pred_check
      _
    $region47: #{tpu_custom_call.1} parent=1 // pred_check_branch
      %45 = sbr.rel (0) target = $region49
    $region48: #{tpu_custom_call.1} parent=1 // pred_region
      _
    $region49: #{tpu_custom_call.1} parent=1 // pred_fallthru
      _
    // Predicated region
    $region50: #{tpu_custom_call.1} parent=1 // pred_check
      _
    $region51: #{tpu_custom_call.1} parent=1 // pred_check_branch
      %47 = sbr.rel (0) target = $region53
    $region52: #{tpu_custom_call.1} parent=1 // pred_region
      _
    $region53: #{tpu_custom_call.1} parent=1 // pred_fallthru
      _
    %v48 = vld [vmem:[%s0] sm:$0xff]
    %v49 = vld [vmem:[%s0 + $0x8] sm:$0xff]
    %v50 = vld [vmem:[%s2] sm:$0xff]
    %v51 = vld [vmem:[%s2 + $0x8] sm:$0xff]
    %v52 = vld [vmem:[%s2 + $0x10] sm:$0xff]
    %v53 = vld [vmem:[%s2 + $0x18] sm:$0xff]
    %v54 = vld [vmem:[%s2 + $0x20] sm:$0xff]
    %v55 = vld [vmem:[%s2 + $0x28] sm:$0xff]
    %v56 = vld [vmem:[%s2 + $0x30] sm:$0xff]
    %v57 = vld [vmem:[%s2 + $0x38] sm:$0xff]
    %v58 = vld [vmem:[%s2 + $0x40] sm:$0xff]
    %v59 = vld [vmem:[%s2 + $0x48] sm:$0xff]
    %v60 = vld [vmem:[%s2 + $0x50] sm:$0xff]
    %v61 = vld [vmem:[%s2 + $0x58] sm:$0xff]
    %v62 = vld [vmem:[%s4] sm:$0x7]
    %v64 = vlaneseq
    %v65 = vshrl.u32 %v64, 7
    %v66 = vsub.s32 0, %v65
    %v67 = vrot.slane %v62, %v66
    %v68 = vlaneseq
    %v69 = vshrl.u32 %v68, 7
    %v70 = vsub.s32 1, %v69
    %v71 = vrot.slane %v62, %v70
    %v72 = vlaneseq
    %v73 = vshrl.u32 %v72, 7
    %v74 = vsub.s32 2, %v73
    %v75 = vrot.slane %v62, %v74
    %vm79 = vcmask 261120
    %v81 = vsel %vm79, %v48, 0
    %v84 = vsel %vm79, %v49, 0
    %86 = vmatprep.subr.mxu0 %v51
    %87 = vmatpush1.msra.mxu0 %v50
    %88 = vmatprep.subr.mxu0 %v54
    %89 = vmatpush1.msra.mxu0 %v53
    %90 = vmatprep.subr.mxu0 %v57
    %91 = vmatpush1.msra.mxu0 %v56
    %92 = vmatprep.subr.mxu0 %v60
    %93 = vmatpush1.msra.mxu0 %v59
    %94 = vmatprep.subr.mxu0 0.0
    %95 = vmatpush1.msra.mxu0 0.0
    %96 = vmatprep.subr.mxu0 0.0
    %97 = vmatpush1.msra.mxu0 0.0
    %98 = vmatprep.subr.mxu0 0.0
    %99 = vmatpush1.msra.mxu0 0.0
    %100 = vmatprep.subr.mxu0 0.0
    %101 = vmatpush1.msra.mxu0 0.0
    %102 = vmatprep.subr.mxu0 0.0
    %103 = vmatpush1.msra.mxu0 0.0
    %104 = vmatprep.subr.mxu0 0.0
    %105 = vmatpush1.msra.mxu0 0.0
    %106 = vmatprep.subr.mxu0 0.0
    %107 = vmatpush1.msra.mxu0 0.0
    %108 = vmatprep.subr.mxu0 0.0
    %109 = vmatpush1.msra.mxu0 0.0
    %110 = vmatprep.subr.mxu0 0.0
    %111 = vmatpush1.msra.mxu0 0.0
    %112 = vmatprep.subr.mxu0 0.0
    %113 = vmatpush1.msra.mxu0 0.0
    %114 = vmatprep.subr.mxu0 0.0
    %115 = vmatpush1.msra.mxu0 0.0
    %116 = vmatprep.subr.mxu0 0.0
    %117 = vmatpush1.msra.mxu0 0.0
    %118 = vmatprep.subr.mxu0 0.0
    %119 = vmatpush1.msra.mxu0 0.0
    %120 = vmatprep.subr.mxu0 0.0
    %121 = vmatpush1.msra.mxu0 0.0
    %122 = vmatprep.subr.mxu0 0.0
    %123 = vmatpush1.msra.mxu0 0.0
    %124 = vmatprep.subr.mxu0 0.0
    %125 = vmatpush1.msra.mxu0 0.0
    %126 = vmatprep.subr.mxu0 0.0
    %127 = vmatpush1.msra.mxu0 0.0
    %128 = vmatprep.subr.mxu0 0.0
    %129 = vmatpush1.msra.mxu0 0.0
    %130 = vmatprep.subr.mxu0 0.0
    %131 = vmatpush1.msra.mxu0 0.0
    %132 = vmatprep.subr.mxu0 0.0
    %133 = vmatpush1.msra.mxu0 0.0
    %134 = vmatprep.subr.mxu0 0.0
    %135 = vmatpush1.msra.mxu0 0.0
    %136 = vmatprep.subr.mxu0 0.0
    %137 = vmatpush1.msra.mxu0 0.0
    %138 = vmatprep.subr.mxu0 0.0
    %139 = vmatpush1.msra.mxu0 0.0
    %140 = vmatprep.subr.mxu0 0.0
    %141 = vmatpush1.msra.mxu0 0.0
    %142 = vmatprep.subr.mxu0 0.0
    %143 = vmatpush1.msra.mxu0 0.0
    %144 = vmatprep.subr.mxu0 0.0
    %145 = vmatpush1.msra.mxu0 0.0
    %146 = vmatprep.subr.mxu0 0.0
    %147 = vmatpush1.msra.mxu0 0.0
    %148 = vmatprep.subr.mxu0 0.0
    %149 = vmatpush1.msra.mxu0 0.0
    %150 = vmatprep.mubr.f32.mxu0 0.0
    %151 = vmatmul.mubr.f32.gmra.mrb[0].mxu0 %v81
    %v152 = vpop.f32.mrb[0].mxu0
    %v153 = vadd.f32 %v67, %v152
    %v154 = vpop.f32.mrb[0].mxu0
    %v155 = vadd.f32 %v71, %v154
    %156 = vmatprep.mubr.f32.mxu0 0.0
    %157 = vmatmul.mubr.f32.gmra.mrb[0].mxu0 %v84
    %v158 = vpop.f32.mrb[0].mxu0
    %v159 = vadd.f32 %v67, %v158
    %v160 = vpop.f32.mrb[0].mxu0
    %v161 = vadd.f32 %v71, %v160
    %162 = vdwg.mxu0
    %163 = vmatprep.subr.mxu0 0.0
    %164 = vmatpush1.msra.mxu0 %v52
    %165 = vmatprep.subr.mxu0 0.0
    %166 = vmatpush1.msra.mxu0 %v55
    %167 = vmatprep.subr.mxu0 0.0
    %168 = vmatpush1.msra.mxu0 %v58
    %169 = vmatprep.subr.mxu0 0.0
    %170 = vmatpush1.msra.mxu0 %v61
    %171 = vmatprep.subr.mxu0 0.0
    %172 = vmatpush1.msra.mxu0 0.0
    %173 = vmatprep.subr.mxu0 0.0
    %174 = vmatpush1.msra.mxu0 0.0
    %175 = vmatprep.subr.mxu0 0.0
    %176 = vmatpush1.msra.mxu0 0.0
    %177 = vmatprep.subr.mxu0 0.0
    %178 = vmatpush1.msra.mxu0 0.0
    %179 = vmatprep.subr.mxu0 0.0
    %180 = vmatpush1.msra.mxu0 0.0
    %181 = vmatprep.subr.mxu0 0.0
    %182 = vmatpush1.msra.mxu0 0.0
    %183 = vmatprep.subr.mxu0 0.0
    %184 = vmatpush1.msra.mxu0 0.0
    %185 = vmatprep.subr.mxu0 0.0
    %186 = vmatpush1.msra.mxu0 0.0
    %187 = vmatprep.subr.mxu0 0.0
    %188 = vmatpush1.msra.mxu0 0.0
    %189 = vmatprep.subr.mxu0 0.0
    %190 = vmatpush1.msra.mxu0 0.0
    %191 = vmatprep.subr.mxu0 0.0
    %192 = vmatpush1.msra.mxu0 0.0
    %193 = vmatprep.subr.mxu0 0.0
    %194 = vmatpush1.msra.mxu0 0.0
    %195 = vmatprep.subr.mxu0 0.0
    %196 = vmatpush1.msra.mxu0 0.0
    %197 = vmatprep.subr.mxu0 0.0
    %198 = vmatpush1.msra.mxu0 0.0
    %199 = vmatprep.subr.mxu0 0.0
    %200 = vmatpush1.msra.mxu0 0.0
    %201 = vmatprep.subr.mxu0 0.0
    %202 = vmatpush1.msra.mxu0 0.0
    %203 = vmatprep.subr.mxu0 0.0
    %204 = vmatpush1.msra.mxu0 0.0
    %205 = vmatprep.subr.mxu0 0.0
    %206 = vmatpush1.msra.mxu0 0.0
    %207 = vmatprep.subr.mxu0 0.0
    %208 = vmatpush1.msra.mxu0 0.0
    %209 = vmatprep.subr.mxu0 0.0
    %210 = vmatpush1.msra.mxu0 0.0
    %211 = vmatprep.subr.mxu0 0.0
    %212 = vmatpush1.msra.mxu0 0.0
    %213 = vmatprep.subr.mxu0 0.0
    %214 = vmatpush1.msra.mxu0 0.0
    %215 = vmatprep.subr.mxu0 0.0
    %216 = vmatpush1.msra.mxu0 0.0
    %217 = vmatprep.subr.mxu0 0.0
    %218 = vmatpush1.msra.mxu0 0.0
    %219 = vmatprep.subr.mxu0 0.0
    %220 = vmatpush1.msra.mxu0 0.0
    %221 = vmatprep.subr.mxu0 0.0
    %222 = vmatpush1.msra.mxu0 0.0
    %223 = vmatprep.subr.mxu0 0.0
    %224 = vmatpush1.msra.mxu0 0.0
    %225 = vmatprep.subr.mxu0 0.0
    %226 = vmatpush1.msra.mxu0 0.0
    %227 = vmatprep.mubr.f32.mxu0 0.0
    %228 = vmatmul.mubr.f32.gmra.mrb[0].mxu0 %v81
    %v229 = vpop.f32.mrb[0].mxu0
    %v230 = vadd.f32 %v75, %v229
    %v231 = vpop.f32.mrb[0].mxu0
    %232 = vmatprep.mubr.f32.mxu0 0.0
    %233 = vmatmul.mubr.f32.gmra.mrb[0].mxu0 %v84
    %v234 = vpop.f32.mrb[0].mxu0
    %v235 = vadd.f32 %v75, %v234
    %v236 = vpop.f32.mrb[0].mxu0
    %237 = vdwg.mxu0
    %v238 = vld [vmem:[%s3] sm:$0xff]
    %v239 = vld [vmem:[%s3 + $0x8] sm:$0xff]
    %v240 = vld [vmem:[%s3 + $0x10] sm:$0xff]
    %v241 = vld [vmem:[%s3 + $0x18] sm:$0xff]
    %v242 = vld [vmem:[%s3 + $0x20] sm:$0xff]
    %v243 = vld [vmem:[%s3 + $0x28] sm:$0xff]
    %v244 = vld [vmem:[%s3 + $0x30] sm:$0xff]
    %v245 = vld [vmem:[%s3 + $0x38] sm:$0xff]
    %v246 = vld [vmem:[%s3 + $0x40] sm:$0xff]
    %v247 = vld [vmem:[%s3 + $0x48] sm:$0xff]
    %v248 = vld [vmem:[%s3 + $0x50] sm:$0xff]
    %v249 = vld [vmem:[%s3 + $0x58] sm:$0xff]
    %v250 = vld [vmem:[%s5] sm:$0x1]
    %v251 = vlaneseq
    %v252 = vshrl.u32 %v251, 7
    %v253 = vadd.s32 %v252, 8
    %v255 = vsel %vm79, 0.0, 0
    %257 = vmatprep.subr.mxu0 %v239
    %258 = vmatpush1.msra.mxu0 %v238
    %259 = vmatprep.subr.mxu0 %v242
    %260 = vmatpush1.msra.mxu0 %v241
    %261 = vmatprep.subr.mxu0 %v245
    %262 = vmatpush1.msra.mxu0 %v244
    %263 = vmatprep.subr.mxu0 %v248
    %264 = vmatpush1.msra.mxu0 %v247
    %265 = vmatprep.subr.mxu0 0.0
    %266 = vmatpush1.msra.mxu0 0.0
    %267 = vmatprep.subr.mxu0 0.0
    %268 = vmatpush1.msra.mxu0 0.0
    %269 = vmatprep.subr.mxu0 0.0
    %270 = vmatpush1.msra.mxu0 0.0
    %271 = vmatprep.subr.mxu0 0.0
    %272 = vmatpush1.msra.mxu0 0.0
    %273 = vmatprep.subr.mxu0 0.0
    %274 = vmatpush1.msra.mxu0 0.0
    %275 = vmatprep.subr.mxu0 0.0
    %276 = vmatpush1.msra.mxu0 0.0
    %277 = vmatprep.subr.mxu0 0.0
    %278 = vmatpush1.msra.mxu0 0.0
    %279 = vmatprep.subr.mxu0 0.0
    %280 = vmatpush1.msra.mxu0 0.0
    %281 = vmatprep.subr.mxu0 0.0
    %282 = vmatpush1.msra.mxu0 0.0
    %283 = vmatprep.subr.mxu0 0.0
    %284 = vmatpush1.msra.mxu0 0.0
    %285 = vmatprep.subr.mxu0 0.0
    %286 = vmatpush1.msra.mxu0 0.0
    %287 = vmatprep.subr.mxu0 0.0
    %288 = vmatpush1.msra.mxu0 0.0
    %289 = vmatprep.subr.mxu0 0.0
    %290 = vmatpush1.msra.mxu0 0.0
    %291 = vmatprep.subr.mxu0 0.0
    %292 = vmatpush1.msra.mxu0 0.0
    %293 = vmatprep.subr.mxu0 0.0
    %294 = vmatpush1.msra.mxu0 0.0
    %295 = vmatprep.subr.mxu0 0.0
    %296 = vmatpush1.msra.mxu0 0.0
    %297 = vmatprep.subr.mxu0 0.0
    %298 = vmatpush1.msra.mxu0 0.0
    %299 = vmatprep.subr.mxu0 0.0
    %300 = vmatpush1.msra.mxu0 0.0
    %301 = vmatprep.subr.mxu0 0.0
    %302 = vmatpush1.msra.mxu0 0.0
    %303 = vmatprep.subr.mxu0 0.0
    %304 = vmatpush1.msra.mxu0 0.0
    %305 = vmatprep.subr.mxu0 0.0
    %306 = vmatpush1.msra.mxu0 0.0
    %307 = vmatprep.subr.mxu0 0.0
    %308 = vmatpush1.msra.mxu0 0.0
    %309 = vmatprep.subr.mxu0 0.0
    %310 = vmatpush1.msra.mxu0 0.0
    %311 = vmatprep.subr.mxu0 0.0
    %312 = vmatpush1.msra.mxu0 0.0
    %313 = vmatprep.subr.mxu0 0.0
    %314 = vmatpush1.msra.mxu0 0.0
    %315 = vmatprep.subr.mxu0 0.0
    %316 = vmatpush1.msra.mxu0 0.0
    %317 = vmatprep.subr.mxu0 0.0
    %318 = vmatpush1.msra.mxu0 0.0
    %319 = vmatprep.subr.mxu0 0.0
    %320 = vmatpush1.msra.mxu0 0.0
    %321 = vmatprep.mubr.f32.mxu0 0.0
    %322 = vmatmul.mubr.f32.gmra.mrb[0].mxu0 %v255
    %v323 = vpop.f32.mrb[0].mxu0
    %v324 = vadd.f32 0.0, %v323
    %v325 = vpop.f32.mrb[0].mxu0
    %v326 = vadd.f32 0.0, %v325
    %327 = vdwg.mxu0
    %328 = vmatprep.subr.mxu0 0.0
    %329 = vmatpush1.msra.mxu0 %v240
    %330 = vmatprep.subr.mxu0 0.0
    %331 = vmatpush1.msra.mxu0 %v243
    %332 = vmatprep.subr.mxu0 0.0
    %333 = vmatpush1.msra.mxu0 %v246
    %334 = vmatprep.subr.mxu0 0.0
    %335 = vmatpush1.msra.mxu0 %v249
    %336 = vmatprep.subr.mxu0 0.0
    %337 = vmatpush1.msra.mxu0 0.0
    %338 = vmatprep.subr.mxu0 0.0
    %339 = vmatpush1.msra.mxu0 0.0
    %340 = vmatprep.subr.mxu0 0.0
    %341 = vmatpush1.msra.mxu0 0.0
    %342 = vmatprep.subr.mxu0 0.0
    %343 = vmatpush1.msra.mxu0 0.0
    %344 = vmatprep.subr.mxu0 0.0
    %345 = vmatpush1.msra.mxu0 0.0
    %346 = vmatprep.subr.mxu0 0.0
    %347 = vmatpush1.msra.mxu0 0.0
    %348 = vmatprep.subr.mxu0 0.0
    %349 = vmatpush1.msra.mxu0 0.0
    %350 = vmatprep.subr.mxu0 0.0
    %351 = vmatpush1.msra.mxu0 0.0
    %352 = vmatprep.subr.mxu0 0.0
    %353 = vmatpush1.msra.mxu0 0.0
    %354 = vmatprep.subr.mxu0 0.0
    %355 = vmatpush1.msra.mxu0 0.0
    %356 = vmatprep.subr.mxu0 0.0
    %357 = vmatpush1.msra.mxu0 0.0
    %358 = vmatprep.subr.mxu0 0.0
    %359 = vmatpush1.msra.mxu0 0.0
    %360 = vmatprep.subr.mxu0 0.0
    %361 = vmatpush1.msra.mxu0 0.0
    %362 = vmatprep.subr.mxu0 0.0
    %363 = vmatpush1.msra.mxu0 0.0
    %364 = vmatprep.subr.mxu0 0.0
    %365 = vmatpush1.msra.mxu0 0.0
    %366 = vmatprep.subr.mxu0 0.0
    %367 = vmatpush1.msra.mxu0 0.0
    %368 = vmatprep.subr.mxu0 0.0
    %369 = vmatpush1.msra.mxu0 0.0
    %370 = vmatprep.subr.mxu0 0.0
    %371 = vmatpush1.msra.mxu0 0.0
    %372 = vmatprep.subr.mxu0 0.0
    %373 = vmatpush1.msra.mxu0 0.0
    %374 = vmatprep.subr.mxu0 0.0
    %375 = vmatpush1.msra.mxu0 0.0
    %376 = vmatprep.subr.mxu0 0.0
    %377 = vmatpush1.msra.mxu0 0.0
    %378 = vmatprep.subr.mxu0 0.0
    %379 = vmatpush1.msra.mxu0 0.0
    %380 = vmatprep.subr.mxu0 0.0
    %381 = vmatpush1.msra.mxu0 0.0
    %382 = vmatprep.subr.mxu0 0.0
    %383 = vmatpush1.msra.mxu0 0.0
    %384 = vmatprep.subr.mxu0 0.0
    %385 = vmatpush1.msra.mxu0 0.0
    %386 = vmatprep.subr.mxu0 0.0
    %387 = vmatpush1.msra.mxu0 0.0
    %388 = vmatprep.subr.mxu0 0.0
    %389 = vmatpush1.msra.mxu0 0.0
    %390 = vmatprep.subr.mxu0 0.0
    %391 = vmatpush1.msra.mxu0 0.0
    %392 = vmatprep.mubr.f32.mxu0 0.0
    %393 = vmatmul.mubr.f32.gmra.mrb[0].mxu0 %v255
    %v394 = vpop.f32.mrb[0].mxu0
    %v395 = vadd.f32 0.0, %v394
    %v396 = vpop.f32.mrb[0].mxu0
    %397 = vdwg.mxu0
    %v399 = vrot.slane %v324, 1
    %v402 = vadd.f32 %v153, %v324
    %v403 = vadd.f32 %v159, %v399
    %v404 = vxor.u32 %v402, 2147483648
    %v405 = vxor.u32 %v403, 2147483648
    %v406 = vmul.f32 %v404, 1.442695
    %v407 = vpow.pop %v406
    %v408 = vmul.f32 %v405, 1.442695
    %v409 = vpow.pop %v408
    %v410 = vadd.f32 %v407, 1.0
    %v411 = vadd.f32 %v409, 1.0
    %v412 = vrcp.pop %v410
    %v413 = vmul.f32 1.0, %v412
    %v414 = vrcp.pop %v411
    %v415 = vmul.f32 1.0, %v414
    %v417 = vrot.slane %v326, 1
    %v420 = vadd.f32 %v155, %v326
    %v421 = vadd.f32 %v161, %v417
    %v422 = vxor.u32 %v420, 2147483648
    %v423 = vxor.u32 %v421, 2147483648
    %v424 = vmul.f32 %v422, 1.442695
    %v425 = vpow.pop %v424
    %v426 = vmul.f32 %v423, 1.442695
    %v427 = vpow.pop %v426
    %v428 = vadd.f32 %v425, 1.0
    %v429 = vadd.f32 %v427, 1.0
    %v430 = vrcp.pop %v428
    %v431 = vmul.f32 1.0, %v430
    %v432 = vrcp.pop %v429
    %v433 = vmul.f32 1.0, %v432
    %v435 = vlaneseq
    %v436 = vshrl.u32 %v435, 7
    %v437 = vsub.s32 0, %v436
    %v438 = vrot.slane %v250, %v437
    %v440 = vadd.f32 %v395, %v438
    %v442 = vrot.slane %v440, 1
    %v445 = vmul.f32 %v413, %v440
    %v446 = vmul.f32 %v415, %v442
    %v447 = vadd.f32 %v230, %v445
    %v448 = vadd.f32 %v235, %v446
    %v449 = vtanh.pop %v447
    %v450 = vtanh.pop %v448
    %v451 = vsub.f32 1.0, %v431
    %v452 = vsub.f32 1.0, %v433
    %v453 = vmul.f32 %v451, %v449
    %v454 = vmul.f32 %v452, %v450
    %v455 = vmul.f32 %v431, 0.0
    %v456 = vmul.f32 %v433, 0.0
    %v457 = vadd.f32 %v453, %v455
    %v458 = vadd.f32 %v454, %v456
    %vm459 = vcmp.eq.s32.totalorder %v252, 0
    %vm460 = vcmp.eq.s32.totalorder %v253, 0
    %v461 = vlaneseq
    %v462 = vshrl.u32 %v461, 7
    %v463 = vsub.s32 0, %v462
    %v464 = vrot.slane %v457, %v463
    %v465 = vsel %vm459, %v464, 0.0
    %v466 = vsel %vm460, %v464, 0.0
    %vm467 = vcmp.eq.s32.totalorder %v252, 8
    %vm468 = vcmp.eq.s32.totalorder %v253, 8
    %v469 = vlaneseq
    %v470 = vshrl.u32 %v469, 7
    %v471 = vsub.s32 0, %v470
    %v472 = vrot.slane %v458, %v471
    %v473 = vsel %vm467, %v472, %v465
    %v474 = vsel %vm468, %v472, %v466
    %v477 = vrot.slane %v458, 7
    %vm478 = vcmask 1041409
    %v479 = vsel %vm478, %v477, %v457
    %v480 = vsel %vm79, %v479, 0
    %482 = vmatprep.subr.mxu0 %v239
    %483 = vmatpush1.msra.mxu0 %v238
    %484 = vmatprep.subr.mxu0 %v242
    %485 = vmatpush1.msra.mxu0 %v241
    %486 = vmatprep.subr.mxu0 %v245
    %487 = vmatpush1.msra.mxu0 %v244
    %488 = vmatprep.subr.mxu0 %v248
    %489 = vmatpush1.msra.mxu0 %v247
    %490 = vmatprep.subr.mxu0 0.0
    %491 = vmatpush1.msra.mxu0 0.0
    %492 = vmatprep.subr.mxu0 0.0
    %493 = vmatpush1.msra.mxu0 0.0
    %494 = vmatprep.subr.mxu0 0.0
    %495 = vmatpush1.msra.mxu0 0.0
    %496 = vmatprep.subr.mxu0 0.0
    %497 = vmatpush1.msra.mxu0 0.0
    %498 = vmatprep.subr.mxu0 0.0
    %499 = vmatpush1.msra.mxu0 0.0
    %500 = vmatprep.subr.mxu0 0.0
    %501 = vmatpush1.msra.mxu0 0.0
    %502 = vmatprep.subr.mxu0 0.0
    %503 = vmatpush1.msra.mxu0 0.0
    %504 = vmatprep.subr.mxu0 0.0
    %505 = vmatpush1.msra.mxu0 0.0
    %506 = vmatprep.subr.mxu0 0.0
    %507 = vmatpush1.msra.mxu0 0.0
    %508 = vmatprep.subr.mxu0 0.0
    %509 = vmatpush1.msra.mxu0 0.0
    %510 = vmatprep.subr.mxu0 0.0
    %511 = vmatpush1.msra.mxu0 0.0
    %512 = vmatprep.subr.mxu0 0.0
    %513 = vmatpush1.msra.mxu0 0.0
    %514 = vmatprep.subr.mxu0 0.0
    %515 = vmatpush1.msra.mxu0 0.0
    %516 = vmatprep.subr.mxu0 0.0
    %517 = vmatpush1.msra.mxu0 0.0
    %518 = vmatprep.subr.mxu0 0.0
    %519 = vmatpush1.msra.mxu0 0.0
    %520 = vmatprep.subr.mxu0 0.0
    %521 = vmatpush1.msra.mxu0 0.0
    %522 = vmatprep.subr.mxu0 0.0
    %523 = vmatpush1.msra.mxu0 0.0
    %524 = vmatprep.subr.mxu0 0.0
    %525 = vmatpush1.msra.mxu0 0.0
    %526 = vmatprep.subr.mxu0 0.0
    %527 = vmatpush1.msra.mxu0 0.0
    %528 = vmatprep.subr.mxu0 0.0
    %529 = vmatpush1.msra.mxu0 0.0
    %530 = vmatprep.subr.mxu0 0.0
    %531 = vmatpush1.msra.mxu0 0.0
    %532 = vmatprep.subr.mxu0 0.0
    %533 = vmatpush1.msra.mxu0 0.0
    %534 = vmatprep.subr.mxu0 0.0
    %535 = vmatpush1.msra.mxu0 0.0
    %536 = vmatprep.subr.mxu0 0.0
    %537 = vmatpush1.msra.mxu0 0.0
    %538 = vmatprep.subr.mxu0 0.0
    %539 = vmatpush1.msra.mxu0 0.0
    %540 = vmatprep.subr.mxu0 0.0
    %541 = vmatpush1.msra.mxu0 0.0
    %542 = vmatprep.subr.mxu0 0.0
    %543 = vmatpush1.msra.mxu0 0.0
    %544 = vmatprep.subr.mxu0 0.0
    %545 = vmatpush1.msra.mxu0 0.0
    %546 = vmatprep.mubr.f32.mxu0 0.0
    %547 = vmatmul.mubr.f32.gmra.mrb[0].mxu0 %v480
    %v548 = vpop.f32.mrb[0].mxu0
    %v549 = vadd.f32 0.0, %v548
    %v550 = vpop.f32.mrb[0].mxu0
    %v551 = vadd.f32 0.0, %v550
    %552 = vdwg.mxu0
    %553 = vmatprep.subr.mxu0 0.0
    %554 = vmatpush1.msra.mxu0 %v240
    %555 = vmatprep.subr.mxu0 0.0
    %556 = vmatpush1.msra.mxu0 %v243
    %557 = vmatprep.subr.mxu0 0.0
    %558 = vmatpush1.msra.mxu0 %v246
    %559 = vmatprep.subr.mxu0 0.0
    %560 = vmatpush1.msra.mxu0 %v249
    %561 = vmatprep.subr.mxu0 0.0
    %562 = vmatpush1.msra.mxu0 0.0
    %563 = vmatprep.subr.mxu0 0.0
    %564 = vmatpush1.msra.mxu0 0.0
    %565 = vmatprep.subr.mxu0 0.0
    %566 = vmatpush1.msra.mxu0 0.0
    %567 = vmatprep.subr.mxu0 0.0
    %568 = vmatpush1.msra.mxu0 0.0
    %569 = vmatprep.subr.mxu0 0.0
    %570 = vmatpush1.msra.mxu0 0.0
    %571 = vmatprep.subr.mxu0 0.0
    %572 = vmatpush1.msra.mxu0 0.0
    %573 = vmatprep.subr.mxu0 0.0
    %574 = vmatpush1.msra.mxu0 0.0
    %575 = vmatprep.subr.mxu0 0.0
    %576 = vmatpush1.msra.mxu0 0.0
    %577 = vmatprep.subr.mxu0 0.0
    %578 = vmatpush1.msra.mxu0 0.0
    %579 = vmatprep.subr.mxu0 0.0
    %580 = vmatpush1.msra.mxu0 0.0
    %581 = vmatprep.subr.mxu0 0.0
    %582 = vmatpush1.msra.mxu0 0.0
    %583 = vmatprep.subr.mxu0 0.0
    %584 = vmatpush1.msra.mxu0 0.0
    %585 = vmatprep.subr.mxu0 0.0
    %586 = vmatpush1.msra.mxu0 0.0
    %587 = vmatprep.subr.mxu0 0.0
    %588 = vmatpush1.msra.mxu0 0.0
    %589 = vmatprep.subr.mxu0 0.0
    %590 = vmatpush1.msra.mxu0 0.0
    %591 = vmatprep.subr.mxu0 0.0
    %592 = vmatpush1.msra.mxu0 0.0
    %593 = vmatprep.subr.mxu0 0.0
    %594 = vmatpush1.msra.mxu0 0.0
    %595 = vmatprep.subr.mxu0 0.0
    %596 = vmatpush1.msra.mxu0 0.0
    %597 = vmatprep.subr.mxu0 0.0
    %598 = vmatpush1.msra.mxu0 0.0
    %599 = vmatprep.subr.mxu0 0.0
    %600 = vmatpush1.msra.mxu0 0.0
    %601 = vmatprep.subr.mxu0 0.0
    %602 = vmatpush1.msra.mxu0 0.0
    %603 = vmatprep.subr.mxu0 0.0
    %604 = vmatpush1.msra.mxu0 0.0
    %605 = vmatprep.subr.mxu0 0.0
    %606 = vmatpush1.msra.mxu0 0.0
    %607 = vmatprep.subr.mxu0 0.0
    %608 = vmatpush1.msra.mxu0 0.0
    %609 = vmatprep.subr.mxu0 0.0
    %610 = vmatpush1.msra.mxu0 0.0
    %611 = vmatprep.subr.mxu0 0.0
    %612 = vmatpush1.msra.mxu0 0.0
    %613 = vmatprep.subr.mxu0 0.0
    %614 = vmatpush1.msra.mxu0 0.0
    %615 = vmatprep.subr.mxu0 0.0
    %616 = vmatpush1.msra.mxu0 0.0
    %617 = vmatprep.mubr.f32.mxu0 0.0
    %618 = vmatmul.mubr.f32.gmra.mrb[0].mxu0 %v480
    %v619 = vpop.f32.mrb[0].mxu0
    %v620 = vadd.f32 0.0, %v619
    %v621 = vpop.f32.mrb[0].mxu0
    %622 = vdwg.mxu0
    %v624 = vrot.slane %v549, 7
    %v627 = vadd.f32 %v153, %v624
    %v628 = vadd.f32 %v159, %v549
    %v629 = vxor.u32 %v627, 2147483648
    %v630 = vxor.u32 %v628, 2147483648
    %v631 = vmul.f32 %v629, 1.442695
    %v632 = vpow.pop %v631
    %v633 = vmul.f32 %v630, 1.442695
    %v634 = vpow.pop %v633
    %v635 = vadd.f32 %v632, 1.0
    %v636 = vadd.f32 %v634, 1.0
    %v637 = vrcp.pop %v635
    %v638 = vmul.f32 1.0, %v637
    %v639 = vrcp.pop %v636
    %v640 = vmul.f32 1.0, %v639
    %v642 = vrot.slane %v551, 7
    %v645 = vadd.f32 %v155, %v642
    %v646 = vadd.f32 %v161, %v551
    %v647 = vxor.u32 %v645, 2147483648
    %v648 = vxor.u32 %v646, 2147483648
    %v649 = vmul.f32 %v647, 1.442695
    %v650 = vpow.pop %v649
    %v651 = vmul.f32 %v648, 1.442695
    %v652 = vpow.pop %v651
    %v653 = vadd.f32 %v650, 1.0
    %v654 = vadd.f32 %v652, 1.0
    %v655 = vrcp.pop %v653
    %v656 = vmul.f32 1.0, %v655
    %v657 = vrcp.pop %v654
    %v658 = vmul.f32 1.0, %v657
    %v659 = vadd.f32 %v620, %v438
    %v661 = vrot.slane %v659, 7
    %v664 = vmul.f32 %v638, %v661
    %v665 = vmul.f32 %v640, %v659
    %v666 = vadd.f32 %v230, %v664
    %v667 = vadd.f32 %v235, %v665
    %v668 = vtanh.pop %v666
    %v669 = vtanh.pop %v667
    %v670 = vsub.f32 1.0, %v656
    %v671 = vsub.f32 1.0, %v658
    %v672 = vmul.f32 %v670, %v668
    %v673 = vmul.f32 %v671, %v669
    %v674 = vrot.slane %v457, 7
    %v677 = vmul.f32 %v656, %v674
    %v678 = vmul.f32 %v658, %v477
    %v679 = vadd.f32 %v672, %v677
    %v680 = vadd.f32 %v673, %v678
    %vm681 = vcmp.eq.s32.totalorder %v252, 1
    %vm682 = vcmp.eq.s32.totalorder %v253, 1
    %v683 = vlaneseq
    %v684 = vshrl.u32 %v683, 7
    %v685 = vsub.s32 1, %v684
    %v686 = vrot.slane %v679, %v685
    %v687 = vsel %vm681, %v686, %v473
    %v688 = vsel %vm682, %v686, %v474
    %vm689 = vcmp.eq.s32.totalorder %v252, 9
    %vm690 = vcmp.eq.s32.totalorder %v253, 9
    %v691 = vlaneseq
    %v692 = vshrl.u32 %v691, 7
    %v693 = vsub.s32 1, %v692
    %v694 = vrot.slane %v680, %v693
    %v695 = vsel %vm689, %v694, %v687
    %v696 = vsel %vm690, %v694, %v688
    %v699 = vrot.slane %v679, 1
    %v700 = vsel %vm478, %v680, %v699
    %v701 = vsel %vm79, %v700, 0
    %703 = vmatprep.subr.mxu0 %v239
    %704 = vmatpush1.msra.mxu0 %v238
    %705 = vmatprep.subr.mxu0 %v242
    %706 = vmatpush1.msra.mxu0 %v241
    %707 = vmatprep.subr.mxu0 %v245
    %708 = vmatpush1.msra.mxu0 %v244
    %709 = vmatprep.subr.mxu0 %v248
    %710 = vmatpush1.msra.mxu0 %v247
    %711 = vmatprep.subr.mxu0 0.0
    %712 = vmatpush1.msra.mxu0 0.0
    %713 = vmatprep.subr.mxu0 0.0
    %714 = vmatpush1.msra.mxu0 0.0
    %715 = vmatprep.subr.mxu0 0.0
    %716 = vmatpush1.msra.mxu0 0.0
    %717 = vmatprep.subr.mxu0 0.0
    %718 = vmatpush1.msra.mxu0 0.0
    %719 = vmatprep.subr.mxu0 0.0
    %720 = vmatpush1.msra.mxu0 0.0
    %721 = vmatprep.subr.mxu0 0.0
    %722 = vmatpush1.msra.mxu0 0.0
    %723 = vmatprep.subr.mxu0 0.0
    %724 = vmatpush1.msra.mxu0 0.0
    %725 = vmatprep.subr.mxu0 0.0
    %726 = vmatpush1.msra.mxu0 0.0
    %727 = vmatprep.subr.mxu0 0.0
    %728 = vmatpush1.msra.mxu0 0.0
    %729 = vmatprep.subr.mxu0 0.0
    %730 = vmatpush1.msra.mxu0 0.0
    %731 = vmatprep.subr.mxu0 0.0
    %732 = vmatpush1.msra.mxu0 0.0
    %733 = vmatprep.subr.mxu0 0.0
    %734 = vmatpush1.msra.mxu0 0.0
    %735 = vmatprep.subr.mxu0 0.0
    %736 = vmatpush1.msra.mxu0 0.0
    %737 = vmatprep.subr.mxu0 0.0
    %738 = vmatpush1.msra.mxu0 0.0
    %739 = vmatprep.subr.mxu0 0.0
    %740 = vmatpush1.msra.mxu0 0.0
    %741 = vmatprep.subr.mxu0 0.0
    %742 = vmatpush1.msra.mxu0 0.0
    %743 = vmatprep.subr.mxu0 0.0
    %744 = vmatpush1.msra.mxu0 0.0
    %745 = vmatprep.subr.mxu0 0.0
    %746 = vmatpush1.msra.mxu0 0.0
    %747 = vmatprep.subr.mxu0 0.0
    %748 = vmatpush1.msra.mxu0 0.0
    %749 = vmatprep.subr.mxu0 0.0
    %750 = vmatpush1.msra.mxu0 0.0
    %751 = vmatprep.subr.mxu0 0.0
    %752 = vmatpush1.msra.mxu0 0.0
    %753 = vmatprep.subr.mxu0 0.0
    %754 = vmatpush1.msra.mxu0 0.0
    %755 = vmatprep.subr.mxu0 0.0
    %756 = vmatpush1.msra.mxu0 0.0
    %757 = vmatprep.subr.mxu0 0.0
    %758 = vmatpush1.msra.mxu0 0.0
    %759 = vmatprep.subr.mxu0 0.0
    %760 = vmatpush1.msra.mxu0 0.0
    %761 = vmatprep.subr.mxu0 0.0
    %762 = vmatpush1.msra.mxu0 0.0
    %763 = vmatprep.subr.mxu0 0.0
    %764 = vmatpush1.msra.mxu0 0.0
    %765 = vmatprep.subr.mxu0 0.0
    %766 = vmatpush1.msra.mxu0 0.0
    %767 = vmatprep.mubr.f32.mxu0 0.0
    %768 = vmatmul.mubr.f32.gmra.mrb[0].mxu0 %v701
    %v769 = vpop.f32.mrb[0].mxu0
    %v770 = vadd.f32 0.0, %v769
    %v771 = vpop.f32.mrb[0].mxu0
    %v772 = vadd.f32 0.0, %v771
    %773 = vdwg.mxu0
    %774 = vmatprep.subr.mxu0 0.0
    %775 = vmatpush1.msra.mxu0 %v240
    %776 = vmatprep.subr.mxu0 0.0
    %777 = vmatpush1.msra.mxu0 %v243
    %778 = vmatprep.subr.mxu0 0.0
    %779 = vmatpush1.msra.mxu0 %v246
    %780 = vmatprep.subr.mxu0 0.0
    %781 = vmatpush1.msra.mxu0 %v249
    %782 = vmatprep.subr.mxu0 0.0
    %783 = vmatpush1.msra.mxu0 0.0
    %784 = vmatprep.subr.mxu0 0.0
    %785 = vmatpush1.msra.mxu0 0.0
    %786 = vmatprep.subr.mxu0 0.0
    %787 = vmatpush1.msra.mxu0 0.0
    %788 = vmatprep.subr.mxu0 0.0
    %789 = vmatpush1.msra.mxu0 0.0
    %790 = vmatprep.subr.mxu0 0.0
    %791 = vmatpush1.msra.mxu0 0.0
    %792 = vmatprep.subr.mxu0 0.0
    %793 = vmatpush1.msra.mxu0 0.0
    %794 = vmatprep.subr.mxu0 0.0
    %795 = vmatpush1.msra.mxu0 0.0
    %796 = vmatprep.subr.mxu0 0.0
    %797 = vmatpush1.msra.mxu0 0.0
    %798 = vmatprep.subr.mxu0 0.0
    %799 = vmatpush1.msra.mxu0 0.0
    %800 = vmatprep.subr.mxu0 0.0
    %801 = vmatpush1.msra.mxu0 0.0
    %802 = vmatprep.subr.mxu0 0.0
    %803 = vmatpush1.msra.mxu0 0.0
    %804 = vmatprep.subr.mxu0 0.0
    %805 = vmatpush1.msra.mxu0 0.0
    %806 = vmatprep.subr.mxu0 0.0
    %807 = vmatpush1.msra.mxu0 0.0
    %808 = vmatprep.subr.mxu0 0.0
    %809 = vmatpush1.msra.mxu0 0.0
    %810 = vmatprep.subr.mxu0 0.0
    %811 = vmatpush1.msra.mxu0 0.0
    %812 = vmatprep.subr.mxu0 0.0
    %813 = vmatpush1.msra.mxu0 0.0
    %814 = vmatprep.subr.mxu0 0.0
    %815 = vmatpush1.msra.mxu0 0.0
    %816 = vmatprep.subr.mxu0 0.0
    %817 = vmatpush1.msra.mxu0 0.0
    %818 = vmatprep.subr.mxu0 0.0
    %819 = vmatpush1.msra.mxu0 0.0
    %820 = vmatprep.subr.mxu0 0.0
    %821 = vmatpush1.msra.mxu0 0.0
    %822 = vmatprep.subr.mxu0 0.0
    %823 = vmatpush1.msra.mxu0 0.0
    %824 = vmatprep.subr.mxu0 0.0
    %825 = vmatpush1.msra.mxu0 0.0
    %826 = vmatprep.subr.mxu0 0.0
    %827 = vmatpush1.msra.mxu0 0.0
    %828 = vmatprep.subr.mxu0 0.0
    %829 = vmatpush1.msra.mxu0 0.0
    %830 = vmatprep.subr.mxu0 0.0
    %831 = vmatpush1.msra.mxu0 0.0
    %832 = vmatprep.subr.mxu0 0.0
    %833 = vmatpush1.msra.mxu0 0.0
    %834 = vmatprep.subr.mxu0 0.0
    %835 = vmatpush1.msra.mxu0 0.0
    %836 = vmatprep.subr.mxu0 0.0
    %837 = vmatpush1.msra.mxu0 0.0
    %838 = vmatprep.mubr.f32.mxu0 0.0
    %839 = vmatmul.mubr.f32.gmra.mrb[0].mxu0 %v701
    %v840 = vpop.f32.mrb[0].mxu0
    %v841 = vadd.f32 0.0, %v840
    %v842 = vpop.f32.mrb[0].mxu0
    %843 = vdwg.mxu0
    %v845 = vrot.slane %v770, 6
    %v846 = vrot.slane %v770, 7
    %v849 = vadd.f32 %v153, %v845
    %v850 = vadd.f32 %v159, %v846
    %v851 = vxor.u32 %v849, 2147483648
    %v852 = vxor.u32 %v850, 2147483648
    %v853 = vmul.f32 %v851, 1.442695
    %v854 = vpow.pop %v853
    %v855 = vmul.f32 %v852, 1.442695
    %v856 = vpow.pop %v855
    %v857 = vadd.f32 %v854, 1.0
    %v858 = vadd.f32 %v856, 1.0
    %v859 = vrcp.pop %v857
    %v860 = vmul.f32 1.0, %v859
    %v861 = vrcp.pop %v858
    %v862 = vmul.f32 1.0, %v861
    %v864 = vrot.slane %v772, 6
    %v865 = vrot.slane %v772, 7
    %v868 = vadd.f32 %v155, %v864
    %v869 = vadd.f32 %v161, %v865
    %v870 = vxor.u32 %v868, 2147483648
    %v871 = vxor.u32 %v869, 2147483648
    %v872 = vmul.f32 %v870, 1.442695
    %v873 = vpow.pop %v872
    %v874 = vmul.f32 %v871, 1.442695
    %v875 = vpow.pop %v874
    %v876 = vadd.f32 %v873, 1.0
    %v877 = vadd.f32 %v875, 1.0
    %v878 = vrcp.pop %v876
    %v879 = vmul.f32 1.0, %v878
    %v880 = vrcp.pop %v877
    %v881 = vmul.f32 1.0, %v880
    %v882 = vadd.f32 %v841, %v438
    %v884 = vrot.slane %v882, 6
    %v885 = vrot.slane %v882, 7
    %v888 = vmul.f32 %v860, %v884
    %v889 = vmul.f32 %v862, %v885
    %v890 = vadd.f32 %v230, %v888
    %v891 = vadd.f32 %v235, %v889
    %v892 = vtanh.pop %v890
    %v893 = vtanh.pop %v891
    %v894 = vsub.f32 1.0, %v879
    %v895 = vsub.f32 1.0, %v881
    %v896 = vmul.f32 %v894, %v892
    %v897 = vmul.f32 %v895, %v893
    %v898 = vrot.slane %v679, 7
    %v899 = vrot.slane %v680, 7
    %v902 = vmul.f32 %v879, %v898
    %v903 = vmul.f32 %v881, %v899
    %v904 = vadd.f32 %v896, %v902
    %v905 = vadd.f32 %v897, %v903
    %vm906 = vcmp.eq.s32.totalorder %v252, 2
    %vm907 = vcmp.eq.s32.totalorder %v253, 2
    %v908 = vlaneseq
    %v909 = vshrl.u32 %v908, 7
    %v910 = vsub.s32 2, %v909
    %v911 = vrot.slane %v904, %v910
    %v912 = vsel %vm906, %v911, %v695
    %v913 = vsel %vm907, %v911, %v696
    %vm914 = vcmp.eq.s32.totalorder %v252, 10
    %vm915 = vcmp.eq.s32.totalorder %v253, 10
    %v916 = vlaneseq
    %v917 = vshrl.u32 %v916, 7
    %v918 = vsub.s32 2, %v917
    %v919 = vrot.slane %v905, %v918
    %v920 = vsel %vm914, %v919, %v912
    %v921 = vsel %vm915, %v919, %v913
    %v924 = vrot.slane %v904, 2
    %v925 = vrot.slane %v905, 1
    %v926 = vsel %vm478, %v925, %v924
    %v927 = vsel %vm79, %v926, 0
    %929 = vmatprep.subr.mxu0 %v239
    %930 = vmatpush1.msra.mxu0 %v238
    %931 = vmatprep.subr.mxu0 %v242
    %932 = vmatpush1.msra.mxu0 %v241
    %933 = vmatprep.subr.mxu0 %v245
    %934 = vmatpush1.msra.mxu0 %v244
    %935 = vmatprep.subr.mxu0 %v248
    %936 = vmatpush1.msra.mxu0 %v247
    %937 = vmatprep.subr.mxu0 0.0
    %938 = vmatpush1.msra.mxu0 0.0
    %939 = vmatprep.subr.mxu0 0.0
    %940 = vmatpush1.msra.mxu0 0.0
    %941 = vmatprep.subr.mxu0 0.0
    %942 = vmatpush1.msra.mxu0 0.0
    %943 = vmatprep.subr.mxu0 0.0
    %944 = vmatpush1.msra.mxu0 0.0
    %945 = vmatprep.subr.mxu0 0.0
    %946 = vmatpush1.msra.mxu0 0.0
    %947 = vmatprep.subr.mxu0 0.0
    %948 = vmatpush1.msra.mxu0 0.0
    %949 = vmatprep.subr.mxu0 0.0
    %950 = vmatpush1.msra.mxu0 0.0
    %951 = vmatprep.subr.mxu0 0.0
    %952 = vmatpush1.msra.mxu0 0.0
    %953 = vmatprep.subr.mxu0 0.0
    %954 = vmatpush1.msra.mxu0 0.0
    %955 = vmatprep.subr.mxu0 0.0
    %956 = vmatpush1.msra.mxu0 0.0
    %957 = vmatprep.subr.mxu0 0.0
    %958 = vmatpush1.msra.mxu0 0.0
    %959 = vmatprep.subr.mxu0 0.0
    %960 = vmatpush1.msra.mxu0 0.0
    %961 = vmatprep.subr.mxu0 0.0
    %962 = vmatpush1.msra.mxu0 0.0
    %963 = vmatprep.subr.mxu0 0.0
    %964 = vmatpush1.msra.mxu0 0.0
    %965 = vmatprep.subr.mxu0 0.0
    %966 = vmatpush1.msra.mxu0 0.0
    %967 = vmatprep.subr.mxu0 0.0
    %968 = vmatpush1.msra.mxu0 0.0
    %969 = vmatprep.subr.mxu0 0.0
    %970 = vmatpush1.msra.mxu0 0.0
    %971 = vmatprep.subr.mxu0 0.0
    %972 = vmatpush1.msra.mxu0 0.0
    %973 = vmatprep.subr.mxu0 0.0
    %974 = vmatpush1.msra.mxu0 0.0
    %975 = vmatprep.subr.mxu0 0.0
    %976 = vmatpush1.msra.mxu0 0.0
    %977 = vmatprep.subr.mxu0 0.0
    %978 = vmatpush1.msra.mxu0 0.0
    %979 = vmatprep.subr.mxu0 0.0
    %980 = vmatpush1.msra.mxu0 0.0
    %981 = vmatprep.subr.mxu0 0.0
    %982 = vmatpush1.msra.mxu0 0.0
    %983 = vmatprep.subr.mxu0 0.0
    %984 = vmatpush1.msra.mxu0 0.0
    %985 = vmatprep.subr.mxu0 0.0
    %986 = vmatpush1.msra.mxu0 0.0
    %987 = vmatprep.subr.mxu0 0.0
    %988 = vmatpush1.msra.mxu0 0.0
    %989 = vmatprep.subr.mxu0 0.0
    %990 = vmatpush1.msra.mxu0 0.0
    %991 = vmatprep.subr.mxu0 0.0
    %992 = vmatpush1.msra.mxu0 0.0
    %993 = vmatprep.mubr.f32.mxu0 0.0
    %994 = vmatmul.mubr.f32.gmra.mrb[0].mxu0 %v927
    %v995 = vpop.f32.mrb[0].mxu0
    %v996 = vadd.f32 0.0, %v995
    %v997 = vpop.f32.mrb[0].mxu0
    %v998 = vadd.f32 0.0, %v997
    %999 = vdwg.mxu0
    %1000 = vmatprep.subr.mxu0 0.0
    %1001 = vmatpush1.msra.mxu0 %v240
    %1002 = vmatprep.subr.mxu0 0.0
    %1003 = vmatpush1.msra.mxu0 %v243
    %1004 = vmatprep.subr.mxu0 0.0
    %1005 = vmatpush1.msra.mxu0 %v246
    %1006 = vmatprep.subr.mxu0 0.0
    %1007 = vmatpush1.msra.mxu0 %v249
    %1008 = vmatprep.subr.mxu0 0.0
    %1009 = vmatpush1.msra.mxu0 0.0
    %1010 = vmatprep.subr.mxu0 0.0
    %1011 = vmatpush1.msra.mxu0 0.0
    %1012 = vmatprep.subr.mxu0 0.0
    %1013 = vmatpush1.msra.mxu0 0.0
    %1014 = vmatprep.subr.mxu0 0.0
    %1015 = vmatpush1.msra.mxu0 0.0
    %1016 = vmatprep.subr.mxu0 0.0
    %1017 = vmatpush1.msra.mxu0 0.0
    %1018 = vmatprep.subr.mxu0 0.0
    %1019 = vmatpush1.msra.mxu0 0.0
    %1020 = vmatprep.subr.mxu0 0.0
    %1021 = vmatpush1.msra.mxu0 0.0
    %1022 = vmatprep.subr.mxu0 0.0
    %1023 = vmatpush1.msra.mxu0 0.0
    %1024 = vmatprep.subr.mxu0 0.0
    %1025 = vmatpush1.msra.mxu0 0.0
    %1026 = vmatprep.subr.mxu0 0.0
    %1027 = vmatpush1.msra.mxu0 0.0
    %1028 = vmatprep.subr.mxu0 0.0
    %1029 = vmatpush1.msra.mxu0 0.0
    %1030 = vmatprep.subr.mxu0 0.0
    %1031 = vmatpush1.msra.mxu0 0.0
    %1032 = vmatprep.subr.mxu0 0.0
    %1033 = vmatpush1.msra.mxu0 0.0
    %1034 = vmatprep.subr.mxu0 0.0
    %1035 = vmatpush1.msra.mxu0 0.0
    %1036 = vmatprep.subr.mxu0 0.0
    %1037 = vmatpush1.msra.mxu0 0.0
    %1038 = vmatprep.subr.mxu0 0.0
    %1039 = vmatpush1.msra.mxu0 0.0
    %1040 = vmatprep.subr.mxu0 0.0
    %1041 = vmatpush1.msra.mxu0 0.0
    %1042 = vmatprep.subr.mxu0 0.0
    %1043 = vmatpush1.msra.mxu0 0.0
    %1044 = vmatprep.subr.mxu0 0.0
    %1045 = vmatpush1.msra.mxu0 0.0
    %1046 = vmatprep.subr.mxu0 0.0
    %1047 = vmatpush1.msra.mxu0 0.0
    %1048 = vmatprep.subr.mxu0 0.0
    %1049 = vmatpush1.msra.mxu0 0.0
    %1050 = vmatprep.subr.mxu0 0.0
    %1051 = vmatpush1.msra.mxu0 0.0
    %1052 = vmatprep.subr.mxu0 0.0
    %1053 = vmatpush1.msra.mxu0 0.0
    %1054 = vmatprep.subr.mxu0 0.0
    %1055 = vmatpush1.msra.mxu0 0.0
    %1056 = vmatprep.subr.mxu0 0.0
    %1057 = vmatpush1.msra.mxu0 0.0
    %1058 = vmatprep.subr.mxu0 0.0
    %1059 = vmatpush1.msra.mxu0 0.0
    %1060 = vmatprep.subr.mxu0 0.0
    %1061 = vmatpush1.msra.mxu0 0.0
    %1062 = vmatprep.subr.mxu0 0.0
    %1063 = vmatpush1.msra.mxu0 0.0
    %1064 = vmatprep.mubr.f32.mxu0 0.0
    %1065 = vmatmul.mubr.f32.gmra.mrb[0].mxu0 %v927
    %v1066 = vpop.f32.mrb[0].mxu0
    %v1067 = vadd.f32 0.0, %v1066
    %v1068 = vpop.f32.mrb[0].mxu0
    %1069 = vdwg.mxu0
    %v1071 = vrot.slane %v996, 5
    %v1072 = vrot.slane %v996, 6
    %v1075 = vadd.f32 %v153, %v1071
    %v1076 = vadd.f32 %v159, %v1072
    %v1077 = vxor.u32 %v1075, 2147483648
    %v1078 = vxor.u32 %v1076, 2147483648
    %v1079 = vmul.f32 %v1077, 1.442695
    %v1080 = vpow.pop %v1079
    %v1081 = vmul.f32 %v1078, 1.442695
    %v1082 = vpow.pop %v1081
    %v1083 = vadd.f32 %v1080, 1.0
    %v1084 = vadd.f32 %v1082, 1.0
    %v1085 = vrcp.pop %v1083
    %v1086 = vmul.f32 1.0, %v1085
    %v1087 = vrcp.pop %v1084
    %v1088 = vmul.f32 1.0, %v1087
    %v1090 = vrot.slane %v998, 5
    %v1091 = vrot.slane %v998, 6
    %v1094 = vadd.f32 %v155, %v1090
    %v1095 = vadd.f32 %v161, %v1091
    %v1096 = vxor.u32 %v1094, 2147483648
    %v1097 = vxor.u32 %v1095, 2147483648
    %v1098 = vmul.f32 %v1096, 1.442695
    %v1099 = vpow.pop %v1098
    %v1100 = vmul.f32 %v1097, 1.442695
    %v1101 = vpow.pop %v1100
    %v1102 = vadd.f32 %v1099, 1.0
    %v1103 = vadd.f32 %v1101, 1.0
    %v1104 = vrcp.pop %v1102
    %v1105 = vmul.f32 1.0, %v1104
    %v1106 = vrcp.pop %v1103
    %v1107 = vmul.f32 1.0, %v1106
    %v1108 = vadd.f32 %v1067, %v438
    %v1110 = vrot.slane %v1108, 5
    %v1111 = vrot.slane %v1108, 6
    %v1114 = vmul.f32 %v1086, %v1110
    %v1115 = vmul.f32 %v1088, %v1111
    %v1116 = vadd.f32 %v230, %v1114
    %v1117 = vadd.f32 %v235, %v1115
    %v1118 = vtanh.pop %v1116
    %v1119 = vtanh.pop %v1117
    %v1120 = vsub.f32 1.0, %v1105
    %v1121 = vsub.f32 1.0, %v1107
    %v1122 = vmul.f32 %v1120, %v1118
    %v1123 = vmul.f32 %v1121, %v1119
    %v1124 = vrot.slane %v904, 7
    %v1125 = vrot.slane %v905, 7
    %v1128 = vmul.f32 %v1105, %v1124
    %v1129 = vmul.f32 %v1107, %v1125
    %v1130 = vadd.f32 %v1122, %v1128
    %v1131 = vadd.f32 %v1123, %v1129
    %vm1132 = vcmp.eq.s32.totalorder %v252, 3
    %vm1133 = vcmp.eq.s32.totalorder %v253, 3
    %v1134 = vlaneseq
    %v1135 = vshrl.u32 %v1134, 7
    %v1136 = vsub.s32 3, %v1135
    %v1137 = vrot.slane %v1130, %v1136
    %v1138 = vsel %vm1132, %v1137, %v920
    %v1139 = vsel %vm1133, %v1137, %v921
    %vm1140 = vcmp.eq.s32.totalorder %v252, 11
    %vm1141 = vcmp.eq.s32.totalorder %v253, 11
    %v1142 = vlaneseq
    %v1143 = vshrl.u32 %v1142, 7
    %v1144 = vsub.s32 3, %v1143
    %v1145 = vrot.slane %v1131, %v1144
    %v1146 = vsel %vm1140, %v1145, %v1138
    %v1147 = vsel %vm1141, %v1145, %v1139
    %v1150 = vrot.slane %v1130, 3
    %v1151 = vrot.slane %v1131, 2
    %v1152 = vsel %vm478, %v1151, %v1150
    %v1153 = vsel %vm79, %v1152, 0
    %1155 = vmatprep.subr.mxu0 %v239
    %1156 = vmatpush1.msra.mxu0 %v238
    %1157 = vmatprep.subr.mxu0 %v242
    %1158 = vmatpush1.msra.mxu0 %v241
    %1159 = vmatprep.subr.mxu0 %v245
    %1160 = vmatpush1.msra.mxu0 %v244
    %1161 = vmatprep.subr.mxu0 %v248
    %1162 = vmatpush1.msra.mxu0 %v247
    %1163 = vmatprep.subr.mxu0 0.0
    %1164 = vmatpush1.msra.mxu0 0.0
    %1165 = vmatprep.subr.mxu0 0.0
    %1166 = vmatpush1.msra.mxu0 0.0
    %1167 = vmatprep.subr.mxu0 0.0
    %1168 = vmatpush1.msra.mxu0 0.0
    %1169 = vmatprep.subr.mxu0 0.0
    %1170 = vmatpush1.msra.mxu0 0.0
    %1171 = vmatprep.subr.mxu0 0.0
    %1172 = vmatpush1.msra.mxu0 0.0
    %1173 = vmatprep.subr.mxu0 0.0
    %1174 = vmatpush1.msra.mxu0 0.0
    %1175 = vmatprep.subr.mxu0 0.0
    %1176 = vmatpush1.msra.mxu0 0.0
    %1177 = vmatprep.subr.mxu0 0.0
    %1178 = vmatpush1.msra.mxu0 0.0
    %1179 = vmatprep.subr.mxu0 0.0
    %1180 = vmatpush1.msra.mxu0 0.0
    %1181 = vmatprep.subr.mxu0 0.0
    %1182 = vmatpush1.msra.mxu0 0.0
    %1183 = vmatprep.subr.mxu0 0.0
    %1184 = vmatpush1.msra.mxu0 0.0
    %1185 = vmatprep.subr.mxu0 0.0
    %1186 = vmatpush1.msra.mxu0 0.0
    %1187 = vmatprep.subr.mxu0 0.0
    %1188 = vmatpush1.msra.mxu0 0.0
    %1189 = vmatprep.subr.mxu0 0.0
    %1190 = vmatpush1.msra.mxu0 0.0
    %1191 = vmatprep.subr.mxu0 0.0
    %1192 = vmatpush1.msra.mxu0 0.0
    %1193 = vmatprep.subr.mxu0 0.0
    %1194 = vmatpush1.msra.mxu0 0.0
    %1195 = vmatprep.subr.mxu0 0.0
    %1196 = vmatpush1.msra.mxu0 0.0
    %1197 = vmatprep.subr.mxu0 0.0
    %1198 = vmatpush1.msra.mxu0 0.0
    %1199 = vmatprep.subr.mxu0 0.0
    %1200 = vmatpush1.msra.mxu0 0.0
    %1201 = vmatprep.subr.mxu0 0.0
    %1202 = vmatpush1.msra.mxu0 0.0
    %1203 = vmatprep.subr.mxu0 0.0
    %1204 = vmatpush1.msra.mxu0 0.0
    %1205 = vmatprep.subr.mxu0 0.0
    %1206 = vmatpush1.msra.mxu0 0.0
    %1207 = vmatprep.subr.mxu0 0.0
    %1208 = vmatpush1.msra.mxu0 0.0
    %1209 = vmatprep.subr.mxu0 0.0
    %1210 = vmatpush1.msra.mxu0 0.0
    %1211 = vmatprep.subr.mxu0 0.0
    %1212 = vmatpush1.msra.mxu0 0.0
    %1213 = vmatprep.subr.mxu0 0.0
    %1214 = vmatpush1.msra.mxu0 0.0
    %1215 = vmatprep.subr.mxu0 0.0
    %1216 = vmatpush1.msra.mxu0 0.0
    %1217 = vmatprep.subr.mxu0 0.0
    %1218 = vmatpush1.msra.mxu0 0.0
    %1219 = vmatprep.mubr.f32.mxu0 0.0
    %1220 = vmatmul.mubr.f32.gmra.mrb[0].mxu0 %v1153
    %v1221 = vpop.f32.mrb[0].mxu0
    %v1222 = vadd.f32 0.0, %v1221
    %v1223 = vpop.f32.mrb[0].mxu0
    %v1224 = vadd.f32 0.0, %v1223
    %1225 = vdwg.mxu0
    %1226 = vmatprep.subr.mxu0 0.0
    %1227 = vmatpush1.msra.mxu0 %v240
    %1228 = vmatprep.subr.mxu0 0.0
    %1229 = vmatpush1.msra.mxu0 %v243
    %1230 = vmatprep.subr.mxu0 0.0
    %1231 = vmatpush1.msra.mxu0 %v246
    %1232 = vmatprep.subr.mxu0 0.0
    %1233 = vmatpush1.msra.mxu0 %v249
    %1234 = vmatprep.subr.mxu0 0.0
    %1235 = vmatpush1.msra.mxu0 0.0
    %1236 = vmatprep.subr.mxu0 0.0
    %1237 = vmatpush1.msra.mxu0 0.0
    %1238 = vmatprep.subr.mxu0 0.0
    %1239 = vmatpush1.msra.mxu0 0.0
    %1240 = vmatprep.subr.mxu0 0.0
    %1241 = vmatpush1.msra.mxu0 0.0
    %1242 = vmatprep.subr.mxu0 0.0
    %1243 = vmatpush1.msra.mxu0 0.0
    %1244 = vmatprep.subr.mxu0 0.0
    %1245 = vmatpush1.msra.mxu0 0.0
    %1246 = vmatprep.subr.mxu0 0.0
    %1247 = vmatpush1.msra.mxu0 0.0
    %1248 = vmatprep.subr.mxu0 0.0
    %1249 = vmatpush1.msra.mxu0 0.0
    %1250 = vmatprep.subr.mxu0 0.0
    %1251 = vmatpush1.msra.mxu0 0.0
    %1252 = vmatprep.subr.mxu0 0.0
    %1253 = vmatpush1.msra.mxu0 0.0
    %1254 = vmatprep.subr.mxu0 0.0
    %1255 = vmatpush1.msra.mxu0 0.0
    %1256 = vmatprep.subr.mxu0 0.0
    %1257 = vmatpush1.msra.mxu0 0.0
    %1258 = vmatprep.subr.mxu0 0.0
    %1259 = vmatpush1.msra.mxu0 0.0
    %1260 = vmatprep.subr.mxu0 0.0
    %1261 = vmatpush1.msra.mxu0 0.0
    %1262 = vmatprep.subr.mxu0 0.0
    %1263 = vmatpush1.msra.mxu0 0.0
    %1264 = vmatprep.subr.mxu0 0.0
    %1265 = vmatpush1.msra.mxu0 0.0
    %1266 = vmatprep.subr.mxu0 0.0
    %1267 = vmatpush1.msra.mxu0 0.0
    %1268 = vmatprep.subr.mxu0 0.0
    %1269 = vmatpush1.msra.mxu0 0.0
    %1270 = vmatprep.subr.mxu0 0.0
    %1271 = vmatpush1.msra.mxu0 0.0
    %1272 = vmatprep.subr.mxu0 0.0
    %1273 = vmatpush1.msra.mxu0 0.0
    %1274 = vmatprep.subr.mxu0 0.0
    %1275 = vmatpush1.msra.mxu0 0.0
    %1276 = vmatprep.subr.mxu0 0.0
    %1277 = vmatpush1.msra.mxu0 0.0
    %1278 = vmatprep.subr.mxu0 0.0
    %1279 = vmatpush1.msra.mxu0 0.0
    %1280 = vmatprep.subr.mxu0 0.0
    %1281 = vmatpush1.msra.mxu0 0.0
    %1282 = vmatprep.subr.mxu0 0.0
    %1283 = vmatpush1.msra.mxu0 0.0
    %1284 = vmatprep.subr.mxu0 0.0
    %1285 = vmatpush1.msra.mxu0 0.0
    %1286 = vmatprep.subr.mxu0 0.0
    %1287 = vmatpush1.msra.mxu0 0.0
    %1288 = vmatprep.subr.mxu0 0.0
    %1289 = vmatpush1.msra.mxu0 0.0
    %1290 = vmatprep.mubr.f32.mxu0 0.0
    %1291 = vmatmul.mubr.f32.gmra.mrb[0].mxu0 %v1153
    %v1292 = vpop.f32.mrb[0].mxu0
    %v1293 = vadd.f32 0.0, %v1292
    %v1294 = vpop.f32.mrb[0].mxu0
    %1295 = vdwg.mxu0
    %v1297 = vrot.slane %v1222, 4
    %v1298 = vrot.slane %v1222, 5
    %v1301 = vadd.f32 %v153, %v1297
    %v1302 = vadd.f32 %v159, %v1298
    %v1303 = vxor.u32 %v1301, 2147483648
    %v1304 = vxor.u32 %v1302, 2147483648
    %v1305 = vmul.f32 %v1303, 1.442695
    %v1306 = vpow.pop %v1305
    %v1307 = vmul.f32 %v1304, 1.442695
    %v1308 = vpow.pop %v1307
    %v1309 = vadd.f32 %v1306, 1.0
    %v1310 = vadd.f32 %v1308, 1.0
    %v1311 = vrcp.pop %v1309
    %v1312 = vmul.f32 1.0, %v1311
    %v1313 = vrcp.pop %v1310
    %v1314 = vmul.f32 1.0, %v1313
    %v1316 = vrot.slane %v1224, 4
    %v1317 = vrot.slane %v1224, 5
    %v1320 = vadd.f32 %v155, %v1316
    %v1321 = vadd.f32 %v161, %v1317
    %v1322 = vxor.u32 %v1320, 2147483648
    %v1323 = vxor.u32 %v1321, 2147483648
    %v1324 = vmul.f32 %v1322, 1.442695
    %v1325 = vpow.pop %v1324
    %v1326 = vmul.f32 %v1323, 1.442695
    %v1327 = vpow.pop %v1326
    %v1328 = vadd.f32 %v1325, 1.0
    %v1329 = vadd.f32 %v1327, 1.0
    %v1330 = vrcp.pop %v1328
    %v1331 = vmul.f32 1.0, %v1330
    %v1332 = vrcp.pop %v1329
    %v1333 = vmul.f32 1.0, %v1332
    %v1334 = vadd.f32 %v1293, %v438
    %v1336 = vrot.slane %v1334, 4
    %v1337 = vrot.slane %v1334, 5
    %v1340 = vmul.f32 %v1312, %v1336
    %v1341 = vmul.f32 %v1314, %v1337
    %v1342 = vadd.f32 %v230, %v1340
    %v1343 = vadd.f32 %v235, %v1341
    %v1344 = vtanh.pop %v1342
    %v1345 = vtanh.pop %v1343
    %v1346 = vsub.f32 1.0, %v1331
    %v1347 = vsub.f32 1.0, %v1333
    %v1348 = vmul.f32 %v1346, %v1344
    %v1349 = vmul.f32 %v1347, %v1345
    %v1350 = vrot.slane %v1130, 7
    %v1351 = vrot.slane %v1131, 7
    %v1354 = vmul.f32 %v1331, %v1350
    %v1355 = vmul.f32 %v1333, %v1351
    %v1356 = vadd.f32 %v1348, %v1354
    %v1357 = vadd.f32 %v1349, %v1355
    %vm1358 = vcmp.eq.s32.totalorder %v252, 4
    %vm1359 = vcmp.eq.s32.totalorder %v253, 4
    %v1360 = vlaneseq
    %v1361 = vshrl.u32 %v1360, 7
    %v1362 = vsub.s32 4, %v1361
    %v1363 = vrot.slane %v1356, %v1362
    %v1364 = vsel %vm1358, %v1363, %v1146
    %v1365 = vsel %vm1359, %v1363, %v1147
    %vm1366 = vcmp.eq.s32.totalorder %v252, 12
    %vm1367 = vcmp.eq.s32.totalorder %v253, 12
    %v1368 = vlaneseq
    %v1369 = vshrl.u32 %v1368, 7
    %v1370 = vsub.s32 4, %v1369
    %v1371 = vrot.slane %v1357, %v1370
    %v1372 = vsel %vm1366, %v1371, %v1364
    %v1373 = vsel %vm1367, %v1371, %v1365
    %v1376 = vrot.slane %v1356, 4
    %v1377 = vrot.slane %v1357, 3
    %v1378 = vsel %vm478, %v1377, %v1376
    %v1379 = vsel %vm79, %v1378, 0
    %1381 = vmatprep.subr.mxu0 %v239
    %1382 = vmatpush1.msra.mxu0 %v238
    %1383 = vmatprep.subr.mxu0 %v242
    %1384 = vmatpush1.msra.mxu0 %v241
    %1385 = vmatprep.subr.mxu0 %v245
    %1386 = vmatpush1.msra.mxu0 %v244
    %1387 = vmatprep.subr.mxu0 %v248
    %1388 = vmatpush1.msra.mxu0 %v247
    %1389 = vmatprep.subr.mxu0 0.0
    %1390 = vmatpush1.msra.mxu0 0.0
    %1391 = vmatprep.subr.mxu0 0.0
    %1392 = vmatpush1.msra.mxu0 0.0
    %1393 = vmatprep.subr.mxu0 0.0
    %1394 = vmatpush1.msra.mxu0 0.0
    %1395 = vmatprep.subr.mxu0 0.0
    %1396 = vmatpush1.msra.mxu0 0.0
    %1397 = vmatprep.subr.mxu0 0.0
    %1398 = vmatpush1.msra.mxu0 0.0
    %1399 = vmatprep.subr.mxu0 0.0
    %1400 = vmatpush1.msra.mxu0 0.0
    %1401 = vmatprep.subr.mxu0 0.0
    %1402 = vmatpush1.msra.mxu0 0.0
    %1403 = vmatprep.subr.mxu0 0.0
    %1404 = vmatpush1.msra.mxu0 0.0
    %1405 = vmatprep.subr.mxu0 0.0
    %1406 = vmatpush1.msra.mxu0 0.0
    %1407 = vmatprep.subr.mxu0 0.0
    %1408 = vmatpush1.msra.mxu0 0.0
    %1409 = vmatprep.subr.mxu0 0.0
    %1410 = vmatpush1.msra.mxu0 0.0
    %1411 = vmatprep.subr.mxu0 0.0
    %1412 = vmatpush1.msra.mxu0 0.0
    %1413 = vmatprep.subr.mxu0 0.0
    %1414 = vmatpush1.msra.mxu0 0.0
    %1415 = vmatprep.subr.mxu0 0.0
    %1416 = vmatpush1.msra.mxu0 0.0
    %1417 = vmatprep.subr.mxu0 0.0
    %1418 = vmatpush1.msra.mxu0 0.0
    %1419 = vmatprep.subr.mxu0 0.0
    %1420 = vmatpush1.msra.mxu0 0.0
    %1421 = vmatprep.subr.mxu0 0.0
    %1422 = vmatpush1.msra.mxu0 0.0
    %1423 = vmatprep.subr.mxu0 0.0
    %1424 = vmatpush1.msra.mxu0 0.0
    %1425 = vmatprep.subr.mxu0 0.0
    %1426 = vmatpush1.msra.mxu0 0.0
    %1427 = vmatprep.subr.mxu0 0.0
    %1428 = vmatpush1.msra.mxu0 0.0
    %1429 = vmatprep.subr.mxu0 0.0
    %1430 = vmatpush1.msra.mxu0 0.0
    %1431 = vmatprep.subr.mxu0 0.0
    %1432 = vmatpush1.msra.mxu0 0.0
    %1433 = vmatprep.subr.mxu0 0.0
    %1434 = vmatpush1.msra.mxu0 0.0
    %1435 = vmatprep.subr.mxu0 0.0
    %1436 = vmatpush1.msra.mxu0 0.0
    %1437 = vmatprep.subr.mxu0 0.0
    %1438 = vmatpush1.msra.mxu0 0.0
    %1439 = vmatprep.subr.mxu0 0.0
    %1440 = vmatpush1.msra.mxu0 0.0
    %1441 = vmatprep.subr.mxu0 0.0
    %1442 = vmatpush1.msra.mxu0 0.0
    %1443 = vmatprep.subr.mxu0 0.0
    %1444 = vmatpush1.msra.mxu0 0.0
    %1445 = vmatprep.mubr.f32.mxu0 0.0
    %1446 = vmatmul.mubr.f32.gmra.mrb[0].mxu0 %v1379
    %v1447 = vpop.f32.mrb[0].mxu0
    %v1448 = vadd.f32 0.0, %v1447
    %v1449 = vpop.f32.mrb[0].mxu0
    %v1450 = vadd.f32 0.0, %v1449
    %1451 = vdwg.mxu0
    %1452 = vmatprep.subr.mxu0 0.0
    %1453 = vmatpush1.msra.mxu0 %v240
    %1454 = vmatprep.subr.mxu0 0.0
    %1455 = vmatpush1.msra.mxu0 %v243
    %1456 = vmatprep.subr.mxu0 0.0
    %1457 = vmatpush1.msra.mxu0 %v246
    %1458 = vmatprep.subr.mxu0 0.0
    %1459 = vmatpush1.msra.mxu0 %v249
    %1460 = vmatprep.subr.mxu0 0.0
    %1461 = vmatpush1.msra.mxu0 0.0
    %1462 = vmatprep.subr.mxu0 0.0
    %1463 = vmatpush1.msra.mxu0 0.0
    %1464 = vmatprep.subr.mxu0 0.0
    %1465 = vmatpush1.msra.mxu0 0.0
    %1466 = vmatprep.subr.mxu0 0.0
    %1467 = vmatpush1.msra.mxu0 0.0
    %1468 = vmatprep.subr.mxu0 0.0
    %1469 = vmatpush1.msra.mxu0 0.0
    %1470 = vmatprep.subr.mxu0 0.0
    %1471 = vmatpush1.msra.mxu0 0.0
    %1472 = vmatprep.subr.mxu0 0.0
    %1473 = vmatpush1.msra.mxu0 0.0
    %1474 = vmatprep.subr.mxu0 0.0
    %1475 = vmatpush1.msra.mxu0 0.0
    %1476 = vmatprep.subr.mxu0 0.0
    %1477 = vmatpush1.msra.mxu0 0.0
    %1478 = vmatprep.subr.mxu0 0.0
    %1479 = vmatpush1.msra.mxu0 0.0
    %1480 = vmatprep.subr.mxu0 0.0
    %1481 = vmatpush1.msra.mxu0 0.0
    %1482 = vmatprep.subr.mxu0 0.0
    %1483 = vmatpush1.msra.mxu0 0.0
    %1484 = vmatprep.subr.mxu0 0.0
    %1485 = vmatpush1.msra.mxu0 0.0
    %1486 = vmatprep.subr.mxu0 0.0
    %1487 = vmatpush1.msra.mxu0 0.0
    %1488 = vmatprep.subr.mxu0 0.0
    %1489 = vmatpush1.msra.mxu0 0.0
    %1490 = vmatprep.subr.mxu0 0.0
    %1491 = vmatpush1.msra.mxu0 0.0
    %1492 = vmatprep.subr.mxu0 0.0
    %1493 = vmatpush1.msra.mxu0 0.0
    %1494 = vmatprep.subr.mxu0 0.0
    %1495 = vmatpush1.msra.mxu0 0.0
    %1496 = vmatprep.subr.mxu0 0.0
    %1497 = vmatpush1.msra.mxu0 0.0
    %1498 = vmatprep.subr.mxu0 0.0
    %1499 = vmatpush1.msra.mxu0 0.0
    %1500 = vmatprep.subr.mxu0 0.0
    %1501 = vmatpush1.msra.mxu0 0.0
    %1502 = vmatprep.subr.mxu0 0.0
    %1503 = vmatpush1.msra.mxu0 0.0
    %1504 = vmatprep.subr.mxu0 0.0
    %1505 = vmatpush1.msra.mxu0 0.0
    %1506 = vmatprep.subr.mxu0 0.0
    %1507 = vmatpush1.msra.mxu0 0.0
    %1508 = vmatprep.subr.mxu0 0.0
    %1509 = vmatpush1.msra.mxu0 0.0
    %1510 = vmatprep.subr.mxu0 0.0
    %1511 = vmatpush1.msra.mxu0 0.0
    %1512 = vmatprep.subr.mxu0 0.0
    %1513 = vmatpush1.msra.mxu0 0.0
    %1514 = vmatprep.subr.mxu0 0.0
    %1515 = vmatpush1.msra.mxu0 0.0
    %1516 = vmatprep.mubr.f32.mxu0 0.0
    %1517 = vmatmul.mubr.f32.gmra.mrb[0].mxu0 %v1379
    %v1518 = vpop.f32.mrb[0].mxu0
    %v1519 = vadd.f32 0.0, %v1518
    %v1520 = vpop.f32.mrb[0].mxu0
    %1521 = vdwg.mxu0
    %v1523 = vrot.slane %v1448, 3
    %v1524 = vrot.slane %v1448, 4
    %v1527 = vadd.f32 %v153, %v1523
    %v1528 = vadd.f32 %v159, %v1524
    %v1529 = vxor.u32 %v1527, 2147483648
    %v1530 = vxor.u32 %v1528, 2147483648
    %v1531 = vmul.f32 %v1529, 1.442695
    %v1532 = vpow.pop %v1531
    %v1533 = vmul.f32 %v1530, 1.442695
    %v1534 = vpow.pop %v1533
    %v1535 = vadd.f32 %v1532, 1.0
    %v1536 = vadd.f32 %v1534, 1.0
    %v1537 = vrcp.pop %v1535
    %v1538 = vmul.f32 1.0, %v1537
    %v1539 = vrcp.pop %v1536
    %v1540 = vmul.f32 1.0, %v1539
    %v1542 = vrot.slane %v1450, 3
    %v1543 = vrot.slane %v1450, 4
    %v1546 = vadd.f32 %v155, %v1542
    %v1547 = vadd.f32 %v161, %v1543
    %v1548 = vxor.u32 %v1546, 2147483648
    %v1549 = vxor.u32 %v1547, 2147483648
    %v1550 = vmul.f32 %v1548, 1.442695
    %v1551 = vpow.pop %v1550
    %v1552 = vmul.f32 %v1549, 1.442695
    %v1553 = vpow.pop %v1552
    %v1554 = vadd.f32 %v1551, 1.0
    %v1555 = vadd.f32 %v1553, 1.0
    %v1556 = vrcp.pop %v1554
    %v1557 = vmul.f32 1.0, %v1556
    %v1558 = vrcp.pop %v1555
    %v1559 = vmul.f32 1.0, %v1558
    %v1560 = vadd.f32 %v1519, %v438
    %v1562 = vrot.slane %v1560, 3
    %v1563 = vrot.slane %v1560, 4
    %v1566 = vmul.f32 %v1538, %v1562
    %v1567 = vmul.f32 %v1540, %v1563
    %v1568 = vadd.f32 %v230, %v1566
    %v1569 = vadd.f32 %v235, %v1567
    %v1570 = vtanh.pop %v1568
    %v1571 = vtanh.pop %v1569
    %v1572 = vsub.f32 1.0, %v1557
    %v1573 = vsub.f32 1.0, %v1559
    %v1574 = vmul.f32 %v1572, %v1570
    %v1575 = vmul.f32 %v1573, %v1571
    %v1576 = vrot.slane %v1356, 7
    %v1577 = vrot.slane %v1357, 7
    %v1580 = vmul.f32 %v1557, %v1576
    %v1581 = vmul.f32 %v1559, %v1577
    %v1582 = vadd.f32 %v1574, %v1580
    %v1583 = vadd.f32 %v1575, %v1581
    %vm1584 = vcmp.eq.s32.totalorder %v252, 5
    %vm1585 = vcmp.eq.s32.totalorder %v253, 5
    %v1586 = vlaneseq
    %v1587 = vshrl.u32 %v1586, 7
    %v1588 = vsub.s32 5, %v1587
    %v1589 = vrot.slane %v1582, %v1588
    %v1590 = vsel %vm1584, %v1589, %v1372
    %v1591 = vsel %vm1585, %v1589, %v1373
    %vm1592 = vcmp.eq.s32.totalorder %v252, 13
    %vm1593 = vcmp.eq.s32.totalorder %v253, 13
    %v1594 = vlaneseq
    %v1595 = vshrl.u32 %v1594, 7
    %v1596 = vsub.s32 5, %v1595
    %v1597 = vrot.slane %v1583, %v1596
    %v1598 = vsel %vm1592, %v1597, %v1590
    %v1599 = vsel %vm1593, %v1597, %v1591
    %v1602 = vrot.slane %v1582, 5
    %v1603 = vrot.slane %v1583, 4
    %v1604 = vsel %vm478, %v1603, %v1602
    %v1605 = vsel %vm79, %v1604, 0
    %1607 = vmatprep.subr.mxu0 %v239
    %1608 = vmatpush1.msra.mxu0 %v238
    %1609 = vmatprep.subr.mxu0 %v242
    %1610 = vmatpush1.msra.mxu0 %v241
    %1611 = vmatprep.subr.mxu0 %v245
    %1612 = vmatpush1.msra.mxu0 %v244
    %1613 = vmatprep.subr.mxu0 %v248
    %1614 = vmatpush1.msra.mxu0 %v247
    %1615 = vmatprep.subr.mxu0 0.0
    %1616 = vmatpush1.msra.mxu0 0.0
    %1617 = vmatprep.subr.mxu0 0.0
    %1618 = vmatpush1.msra.mxu0 0.0
    %1619 = vmatprep.subr.mxu0 0.0
    %1620 = vmatpush1.msra.mxu0 0.0
    %1621 = vmatprep.subr.mxu0 0.0
    %1622 = vmatpush1.msra.mxu0 0.0
    %1623 = vmatprep.subr.mxu0 0.0
    %1624 = vmatpush1.msra.mxu0 0.0
    %1625 = vmatprep.subr.mxu0 0.0
    %1626 = vmatpush1.msra.mxu0 0.0
    %1627 = vmatprep.subr.mxu0 0.0
    %1628 = vmatpush1.msra.mxu0 0.0
    %1629 = vmatprep.subr.mxu0 0.0
    %1630 = vmatpush1.msra.mxu0 0.0
    %1631 = vmatprep.subr.mxu0 0.0
    %1632 = vmatpush1.msra.mxu0 0.0
    %1633 = vmatprep.subr.mxu0 0.0
    %1634 = vmatpush1.msra.mxu0 0.0
    %1635 = vmatprep.subr.mxu0 0.0
    %1636 = vmatpush1.msra.mxu0 0.0
    %1637 = vmatprep.subr.mxu0 0.0
    %1638 = vmatpush1.msra.mxu0 0.0
    %1639 = vmatprep.subr.mxu0 0.0
    %1640 = vmatpush1.msra.mxu0 0.0
    %1641 = vmatprep.subr.mxu0 0.0
    %1642 = vmatpush1.msra.mxu0 0.0
    %1643 = vmatprep.subr.mxu0 0.0
    %1644 = vmatpush1.msra.mxu0 0.0
    %1645 = vmatprep.subr.mxu0 0.0
    %1646 = vmatpush1.msra.mxu0 0.0
    %1647 = vmatprep.subr.mxu0 0.0
    %1648 = vmatpush1.msra.mxu0 0.0
    %1649 = vmatprep.subr.mxu0 0.0
    %1650 = vmatpush1.msra.mxu0 0.0
    %1651 = vmatprep.subr.mxu0 0.0
    %1652 = vmatpush1.msra.mxu0 0.0
    %1653 = vmatprep.subr.mxu0 0.0
    %1654 = vmatpush1.msra.mxu0 0.0
    %1655 = vmatprep.subr.mxu0 0.0
    %1656 = vmatpush1.msra.mxu0 0.0
    %1657 = vmatprep.subr.mxu0 0.0
    %1658 = vmatpush1.msra.mxu0 0.0
    %1659 = vmatprep.subr.mxu0 0.0
    %1660 = vmatpush1.msra.mxu0 0.0
    %1661 = vmatprep.subr.mxu0 0.0
    %1662 = vmatpush1.msra.mxu0 0.0
    %1663 = vmatprep.subr.mxu0 0.0
    %1664 = vmatpush1.msra.mxu0 0.0
    %1665 = vmatprep.subr.mxu0 0.0
    %1666 = vmatpush1.msra.mxu0 0.0
    %1667 = vmatprep.subr.mxu0 0.0
    %1668 = vmatpush1.msra.mxu0 0.0
    %1669 = vmatprep.subr.mxu0 0.0
    %1670 = vmatpush1.msra.mxu0 0.0
    %1671 = vmatprep.mubr.f32.mxu0 0.0
    %1672 = vmatmul.mubr.f32.gmra.mrb[0].mxu0 %v1605
    %v1673 = vpop.f32.mrb[0].mxu0
    %v1674 = vadd.f32 0.0, %v1673
    %v1675 = vpop.f32.mrb[0].mxu0
    %v1676 = vadd.f32 0.0, %v1675
    %1677 = vdwg.mxu0
    %1678 = vmatprep.subr.mxu0 0.0
    %1679 = vmatpush1.msra.mxu0 %v240
    %1680 = vmatprep.subr.mxu0 0.0
    %1681 = vmatpush1.msra.mxu0 %v243
    %1682 = vmatprep.subr.mxu0 0.0
    %1683 = vmatpush1.msra.mxu0 %v246
    %1684 = vmatprep.subr.mxu0 0.0
    %1685 = vmatpush1.msra.mxu0 %v249
    %1686 = vmatprep.subr.mxu0 0.0
    %1687 = vmatpush1.msra.mxu0 0.0
    %1688 = vmatprep.subr.mxu0 0.0
    %1689 = vmatpush1.msra.mxu0 0.0
    %1690 = vmatprep.subr.mxu0 0.0
    %1691 = vmatpush1.msra.mxu0 0.0
    %1692 = vmatprep.subr.mxu0 0.0
    %1693 = vmatpush1.msra.mxu0 0.0
    %1694 = vmatprep.subr.mxu0 0.0
    %1695 = vmatpush1.msra.mxu0 0.0
    %1696 = vmatprep.subr.mxu0 0.0
    %1697 = vmatpush1.msra.mxu0 0.0
    %1698 = vmatprep.subr.mxu0 0.0
    %1699 = vmatpush1.msra.mxu0 0.0
    %1700 = vmatprep.subr.mxu0 0.0
    %1701 = vmatpush1.msra.mxu0 0.0
    %1702 = vmatprep.subr.mxu0 0.0
    %1703 = vmatpush1.msra.mxu0 0.0
    %1704 = vmatprep.subr.mxu0 0.0
    %1705 = vmatpush1.msra.mxu0 0.0
    %1706 = vmatprep.subr.mxu0 0.0
    %1707 = vmatpush1.msra.mxu0 0.0
    %1708 = vmatprep.subr.mxu0 0.0
    %1709 = vmatpush1.msra.mxu0 0.0
    %1710 = vmatprep.subr.mxu0 0.0
    %1711 = vmatpush1.msra.mxu0 0.0
    %1712 = vmatprep.subr.mxu0 0.0
    %1713 = vmatpush1.msra.mxu0 0.0
    %1714 = vmatprep.subr.mxu0 0.0
    %1715 = vmatpush1.msra.mxu0 0.0
    %1716 = vmatprep.subr.mxu0 0.0
    %1717 = vmatpush1.msra.mxu0 0.0
    %1718 = vmatprep.subr.mxu0 0.0
    %1719 = vmatpush1.msra.mxu0 0.0
    %1720 = vmatprep.subr.mxu0 0.0
    %1721 = vmatpush1.msra.mxu0 0.0
    %1722 = vmatprep.subr.mxu0 0.0
    %1723 = vmatpush1.msra.mxu0 0.0
    %1724 = vmatprep.subr.mxu0 0.0
    %1725 = vmatpush1.msra.mxu0 0.0
    %1726 = vmatprep.subr.mxu0 0.0
    %1727 = vmatpush1.msra.mxu0 0.0
    %1728 = vmatprep.subr.mxu0 0.0
    %1729 = vmatpush1.msra.mxu0 0.0
    %1730 = vmatprep.subr.mxu0 0.0
    %1731 = vmatpush1.msra.mxu0 0.0
    %1732 = vmatprep.subr.mxu0 0.0
    %1733 = vmatpush1.msra.mxu0 0.0
    %1734 = vmatprep.subr.mxu0 0.0
    %1735 = vmatpush1.msra.mxu0 0.0
    %1736 = vmatprep.subr.mxu0 0.0
    %1737 = vmatpush1.msra.mxu0 0.0
    %1738 = vmatprep.subr.mxu0 0.0
    %1739 = vmatpush1.msra.mxu0 0.0
    %1740 = vmatprep.subr.mxu0 0.0
    %1741 = vmatpush1.msra.mxu0 0.0
    %1742 = vmatprep.mubr.f32.mxu0 0.0
    %1743 = vmatmul.mubr.f32.gmra.mrb[0].mxu0 %v1605
    %v1744 = vpop.f32.mrb[0].mxu0
    %v1745 = vadd.f32 0.0, %v1744
    %v1746 = vpop.f32.mrb[0].mxu0
    %1747 = vdwg.mxu0
    %v1749 = vrot.slane %v1674, 2
    %v1750 = vrot.slane %v1674, 3
    %v1753 = vadd.f32 %v153, %v1749
    %v1754 = vadd.f32 %v159, %v1750
    %v1755 = vxor.u32 %v1753, 2147483648
    %v1756 = vxor.u32 %v1754, 2147483648
    %v1757 = vmul.f32 %v1755, 1.442695
    %v1758 = vpow.pop %v1757
    %v1759 = vmul.f32 %v1756, 1.442695
    %v1760 = vpow.pop %v1759
    %v1761 = vadd.f32 %v1758, 1.0
    %v1762 = vadd.f32 %v1760, 1.0
    %v1763 = vrcp.pop %v1761
    %v1764 = vmul.f32 1.0, %v1763
    %v1765 = vrcp.pop %v1762
    %v1766 = vmul.f32 1.0, %v1765
    %v1768 = vrot.slane %v1676, 2
    %v1769 = vrot.slane %v1676, 3
    %v1772 = vadd.f32 %v155, %v1768
    %v1773 = vadd.f32 %v161, %v1769
    %v1774 = vxor.u32 %v1772, 2147483648
    %v1775 = vxor.u32 %v1773, 2147483648
    %v1776 = vmul.f32 %v1774, 1.442695
    %v1777 = vpow.pop %v1776
    %v1778 = vmul.f32 %v1775, 1.442695
    %v1779 = vpow.pop %v1778
    %v1780 = vadd.f32 %v1777, 1.0
    %v1781 = vadd.f32 %v1779, 1.0
    %v1782 = vrcp.pop %v1780
    %v1783 = vmul.f32 1.0, %v1782
    %v1784 = vrcp.pop %v1781
    %v1785 = vmul.f32 1.0, %v1784
    %v1786 = vadd.f32 %v1745, %v438
    %v1788 = vrot.slane %v1786, 2
    %v1789 = vrot.slane %v1786, 3
    %v1792 = vmul.f32 %v1764, %v1788
    %v1793 = vmul.f32 %v1766, %v1789
    %v1794 = vadd.f32 %v230, %v1792
    %v1795 = vadd.f32 %v235, %v1793
    %v1796 = vtanh.pop %v1794
    %v1797 = vtanh.pop %v1795
    %v1798 = vsub.f32 1.0, %v1783
    %v1799 = vsub.f32 1.0, %v1785
    %v1800 = vmul.f32 %v1798, %v1796
    %v1801 = vmul.f32 %v1799, %v1797
    %v1802 = vrot.slane %v1582, 7
    %v1803 = vrot.slane %v1583, 7
    %v1806 = vmul.f32 %v1783, %v1802
    %v1807 = vmul.f32 %v1785, %v1803
    %v1808 = vadd.f32 %v1800, %v1806
    %v1809 = vadd.f32 %v1801, %v1807
    %vm1810 = vcmp.eq.s32.totalorder %v252, 6
    %vm1811 = vcmp.eq.s32.totalorder %v253, 6
    %v1812 = vlaneseq
    %v1813 = vshrl.u32 %v1812, 7
    %v1814 = vsub.s32 6, %v1813
    %v1815 = vrot.slane %v1808, %v1814
    %v1816 = vsel %vm1810, %v1815, %v1598
    %v1817 = vsel %vm1811, %v1815, %v1599
    %vm1818 = vcmp.eq.s32.totalorder %v252, 14
    %vm1819 = vcmp.eq.s32.totalorder %v253, 14
    %v1820 = vlaneseq
    %v1821 = vshrl.u32 %v1820, 7
    %v1822 = vsub.s32 6, %v1821
    %v1823 = vrot.slane %v1809, %v1822
    %v1824 = vsel %vm1818, %v1823, %v1816
    %v1825 = vsel %vm1819, %v1823, %v1817
    %v1828 = vrot.slane %v1808, 6
    %v1829 = vrot.slane %v1809, 5
    %v1830 = vsel %vm478, %v1829, %v1828
    %v1831 = vsel %vm79, %v1830, 0
    %1833 = vmatprep.subr.mxu0 %v239
    %1834 = vmatpush1.msra.mxu0 %v238
    %1835 = vmatprep.subr.mxu0 %v242
    %1836 = vmatpush1.msra.mxu0 %v241
    %1837 = vmatprep.subr.mxu0 %v245
    %1838 = vmatpush1.msra.mxu0 %v244
    %1839 = vmatprep.subr.mxu0 %v248
    %1840 = vmatpush1.msra.mxu0 %v247
    %1841 = vmatprep.subr.mxu0 0.0
    %1842 = vmatpush1.msra.mxu0 0.0
    %1843 = vmatprep.subr.mxu0 0.0
    %1844 = vmatpush1.msra.mxu0 0.0
    %1845 = vmatprep.subr.mxu0 0.0
    %1846 = vmatpush1.msra.mxu0 0.0
    %1847 = vmatprep.subr.mxu0 0.0
    %1848 = vmatpush1.msra.mxu0 0.0
    %1849 = vmatprep.subr.mxu0 0.0
    %1850 = vmatpush1.msra.mxu0 0.0
    %1851 = vmatprep.subr.mxu0 0.0
    %1852 = vmatpush1.msra.mxu0 0.0
    %1853 = vmatprep.subr.mxu0 0.0
    %1854 = vmatpush1.msra.mxu0 0.0
    %1855 = vmatprep.subr.mxu0 0.0
    %1856 = vmatpush1.msra.mxu0 0.0
    %1857 = vmatprep.subr.mxu0 0.0
    %1858 = vmatpush1.msra.mxu0 0.0
    %1859 = vmatprep.subr.mxu0 0.0
    %1860 = vmatpush1.msra.mxu0 0.0
    %1861 = vmatprep.subr.mxu0 0.0
    %1862 = vmatpush1.msra.mxu0 0.0
    %1863 = vmatprep.subr.mxu0 0.0
    %1864 = vmatpush1.msra.mxu0 0.0
    %1865 = vmatprep.subr.mxu0 0.0
    %1866 = vmatpush1.msra.mxu0 0.0
    %1867 = vmatprep.subr.mxu0 0.0
    %1868 = vmatpush1.msra.mxu0 0.0
    %1869 = vmatprep.subr.mxu0 0.0
    %1870 = vmatpush1.msra.mxu0 0.0
    %1871 = vmatprep.subr.mxu0 0.0
    %1872 = vmatpush1.msra.mxu0 0.0
    %1873 = vmatprep.subr.mxu0 0.0
    %1874 = vmatpush1.msra.mxu0 0.0
    %1875 = vmatprep.subr.mxu0 0.0
    %1876 = vmatpush1.msra.mxu0 0.0
    %1877 = vmatprep.subr.mxu0 0.0
    %1878 = vmatpush1.msra.mxu0 0.0
    %1879 = vmatprep.subr.mxu0 0.0
    %1880 = vmatpush1.msra.mxu0 0.0
    %1881 = vmatprep.subr.mxu0 0.0
    %1882 = vmatpush1.msra.mxu0 0.0
    %1883 = vmatprep.subr.mxu0 0.0
    %1884 = vmatpush1.msra.mxu0 0.0
    %1885 = vmatprep.subr.mxu0 0.0
    %1886 = vmatpush1.msra.mxu0 0.0
    %1887 = vmatprep.subr.mxu0 0.0
    %1888 = vmatpush1.msra.mxu0 0.0
    %1889 = vmatprep.subr.mxu0 0.0
    %1890 = vmatpush1.msra.mxu0 0.0
    %1891 = vmatprep.subr.mxu0 0.0
    %1892 = vmatpush1.msra.mxu0 0.0
    %1893 = vmatprep.subr.mxu0 0.0
    %1894 = vmatpush1.msra.mxu0 0.0
    %1895 = vmatprep.subr.mxu0 0.0
    %1896 = vmatpush1.msra.mxu0 0.0
    %1897 = vmatprep.mubr.f32.mxu0 0.0
    %1898 = vmatmul.mubr.f32.gmra.mrb[0].mxu0 %v1831
    %v1899 = vpop.f32.mrb[0].mxu0
    %v1900 = vadd.f32 0.0, %v1899
    %v1901 = vpop.f32.mrb[0].mxu0
    %v1902 = vadd.f32 0.0, %v1901
    %1903 = vdwg.mxu0
    %1904 = vmatprep.subr.mxu0 0.0
    %1905 = vmatpush1.msra.mxu0 %v240
    %1906 = vmatprep.subr.mxu0 0.0
    %1907 = vmatpush1.msra.mxu0 %v243
    %1908 = vmatprep.subr.mxu0 0.0
    %1909 = vmatpush1.msra.mxu0 %v246
    %1910 = vmatprep.subr.mxu0 0.0
    %1911 = vmatpush1.msra.mxu0 %v249
    %1912 = vmatprep.subr.mxu0 0.0
    %1913 = vmatpush1.msra.mxu0 0.0
    %1914 = vmatprep.subr.mxu0 0.0
    %1915 = vmatpush1.msra.mxu0 0.0
    %1916 = vmatprep.subr.mxu0 0.0
    %1917 = vmatpush1.msra.mxu0 0.0
    %1918 = vmatprep.subr.mxu0 0.0
    %1919 = vmatpush1.msra.mxu0 0.0
    %1920 = vmatprep.subr.mxu0 0.0
    %1921 = vmatpush1.msra.mxu0 0.0
    %1922 = vmatprep.subr.mxu0 0.0
    %1923 = vmatpush1.msra.mxu0 0.0
    %1924 = vmatprep.subr.mxu0 0.0
    %1925 = vmatpush1.msra.mxu0 0.0
    %1926 = vmatprep.subr.mxu0 0.0
    %1927 = vmatpush1.msra.mxu0 0.0
    %1928 = vmatprep.subr.mxu0 0.0
    %1929 = vmatpush1.msra.mxu0 0.0
    %1930 = vmatprep.subr.mxu0 0.0
    %1931 = vmatpush1.msra.mxu0 0.0
    %1932 = vmatprep.subr.mxu0 0.0
    %1933 = vmatpush1.msra.mxu0 0.0
    %1934 = vmatprep.subr.mxu0 0.0
    %1935 = vmatpush1.msra.mxu0 0.0
    %1936 = vmatprep.subr.mxu0 0.0
    %1937 = vmatpush1.msra.mxu0 0.0
    %1938 = vmatprep.subr.mxu0 0.0
    %1939 = vmatpush1.msra.mxu0 0.0
    %1940 = vmatprep.subr.mxu0 0.0
    %1941 = vmatpush1.msra.mxu0 0.0
    %1942 = vmatprep.subr.mxu0 0.0
    %1943 = vmatpush1.msra.mxu0 0.0
    %1944 = vmatprep.subr.mxu0 0.0
    %1945 = vmatpush1.msra.mxu0 0.0
    %1946 = vmatprep.subr.mxu0 0.0
    %1947 = vmatpush1.msra.mxu0 0.0
    %1948 = vmatprep.subr.mxu0 0.0
    %1949 = vmatpush1.msra.mxu0 0.0
    %1950 = vmatprep.subr.mxu0 0.0
    %1951 = vmatpush1.msra.mxu0 0.0
    %1952 = vmatprep.subr.mxu0 0.0
    %1953 = vmatpush1.msra.mxu0 0.0
    %1954 = vmatprep.subr.mxu0 0.0
    %1955 = vmatpush1.msra.mxu0 0.0
    %1956 = vmatprep.subr.mxu0 0.0
    %1957 = vmatpush1.msra.mxu0 0.0
    %1958 = vmatprep.subr.mxu0 0.0
    %1959 = vmatpush1.msra.mxu0 0.0
    %1960 = vmatprep.subr.mxu0 0.0
    %1961 = vmatpush1.msra.mxu0 0.0
    %1962 = vmatprep.subr.mxu0 0.0
    %1963 = vmatpush1.msra.mxu0 0.0
    %1964 = vmatprep.subr.mxu0 0.0
    %1965 = vmatpush1.msra.mxu0 0.0
    %1966 = vmatprep.subr.mxu0 0.0
    %1967 = vmatpush1.msra.mxu0 0.0
    %1968 = vmatprep.mubr.f32.mxu0 0.0
    %1969 = vmatmul.mubr.f32.gmra.mrb[0].mxu0 %v1831
    %v1970 = vpop.f32.mrb[0].mxu0
    %v1971 = vadd.f32 0.0, %v1970
    %v1972 = vpop.f32.mrb[0].mxu0
    %1973 = vdwg.mxu0
    %v1975 = vrot.slane %v1900, 1
    %v1976 = vrot.slane %v1900, 2
    %v1979 = vadd.f32 %v153, %v1975
    %v1980 = vadd.f32 %v159, %v1976
    %v1981 = vxor.u32 %v1979, 2147483648
    %v1982 = vxor.u32 %v1980, 2147483648
    %v1983 = vmul.f32 %v1981, 1.442695
    %v1984 = vpow.pop %v1983
    %v1985 = vmul.f32 %v1982, 1.442695
    %v1986 = vpow.pop %v1985
    %v1987 = vadd.f32 %v1984, 1.0
    %v1988 = vadd.f32 %v1986, 1.0
    %v1989 = vrcp.pop %v1987
    %v1990 = vmul.f32 1.0, %v1989
    %v1991 = vrcp.pop %v1988
    %v1992 = vmul.f32 1.0, %v1991
    %v1994 = vrot.slane %v1902, 1
    %v1995 = vrot.slane %v1902, 2
    %v1998 = vadd.f32 %v155, %v1994
    %v1999 = vadd.f32 %v161, %v1995
    %v2000 = vxor.u32 %v1998, 2147483648
    %v2001 = vxor.u32 %v1999, 2147483648
    %v2002 = vmul.f32 %v2000, 1.442695
    %v2003 = vpow.pop %v2002
    %v2004 = vmul.f32 %v2001, 1.442695
    %v2005 = vpow.pop %v2004
    %v2006 = vadd.f32 %v2003, 1.0
    %v2007 = vadd.f32 %v2005, 1.0
    %v2008 = vrcp.pop %v2006
    %v2009 = vmul.f32 1.0, %v2008
    %v2010 = vrcp.pop %v2007
    %v2011 = vmul.f32 1.0, %v2010
    %v2012 = vadd.f32 %v1971, %v438
    %v2014 = vrot.slane %v2012, 1
    %v2015 = vrot.slane %v2012, 2
    %v2018 = vmul.f32 %v1990, %v2014
    %v2019 = vmul.f32 %v1992, %v2015
    %v2020 = vadd.f32 %v230, %v2018
    %v2021 = vadd.f32 %v235, %v2019
    %v2022 = vtanh.pop %v2020
    %v2023 = vtanh.pop %v2021
    %v2024 = vsub.f32 1.0, %v2009
    %v2025 = vsub.f32 1.0, %v2011
    %v2026 = vmul.f32 %v2024, %v2022
    %v2027 = vmul.f32 %v2025, %v2023
    %v2028 = vrot.slane %v1808, 7
    %v2029 = vrot.slane %v1809, 7
    %v2032 = vmul.f32 %v2009, %v2028
    %v2033 = vmul.f32 %v2011, %v2029
    %v2034 = vadd.f32 %v2026, %v2032
    %v2035 = vadd.f32 %v2027, %v2033
    %vm2036 = vcmp.eq.s32.totalorder %v252, 7
    %vm2037 = vcmp.eq.s32.totalorder %v253, 7
    %v2038 = vlaneseq
    %v2039 = vshrl.u32 %v2038, 7
    %v2040 = vsub.s32 7, %v2039
    %v2041 = vrot.slane %v2034, %v2040
    %v2042 = vsel %vm2036, %v2041, %v1824
    %v2043 = vsel %vm2037, %v2041, %v1825
    %vm2044 = vcmp.eq.s32.totalorder %v252, 15
    %vm2045 = vcmp.eq.s32.totalorder %v253, 15
    %v2046 = vlaneseq
    %v2047 = vshrl.u32 %v2046, 7
    %v2048 = vsub.s32 7, %v2047
    %v2049 = vrot.slane %v2035, %v2048
    %v2050 = vsel %vm2044, %v2049, %v2042
    %v2051 = vsel %vm2045, %v2049, %v2043
    %v2052 = vld [vmem:[%s6] sm:$0xff]
    %v2053 = vld [vmem:[%s6 + $0x8] sm:$0xff]
    %v2054 = vld [vmem:[%s6 + $0x10] sm:$0xff]
    %v2055 = vld [vmem:[%s6 + $0x18] sm:$0xff]
    %v2056 = vld [vmem:[%s6 + $0x20] sm:$0xff]
    %v2057 = vld [vmem:[%s6 + $0x28] sm:$0xff]
    %v2058 = vld [vmem:[%s6 + $0x30] sm:$0xff]
    %v2059 = vld [vmem:[%s6 + $0x38] sm:$0xff]
    %v2060 = vld [vmem:[%s6 + $0x40] sm:$0xff]
    %v2061 = vld [vmem:[%s6 + $0x48] sm:$0xff]
    %v2062 = vld [vmem:[%s6 + $0x50] sm:$0xff]
    %v2063 = vld [vmem:[%s6 + $0x58] sm:$0xff]
    %v2064 = vld [vmem:[%s6 + $0x60] sm:$0xff]
    %v2065 = vld [vmem:[%s6 + $0x68] sm:$0xff]
    %v2066 = vld [vmem:[%s6 + $0x70] sm:$0xff]
    %v2067 = vld [vmem:[%s6 + $0x78] sm:$0xff]
    %v2068 = vld [vmem:[%s6 + $0x80] sm:$0xff]
    %v2069 = vld [vmem:[%s6 + $0x88] sm:$0xff]
    %v2070 = vld [vmem:[%s6 + $0x90] sm:$0xff]
    %v2071 = vld [vmem:[%s6 + $0x98] sm:$0xff]
    %v2072 = vld [vmem:[%s7] sm:$0x1f]
    %v2074 = vlaneseq
    %v2075 = vshrl.u32 %v2074, 7
    %v2076 = vsub.s32 0, %v2075
    %v2077 = vrot.slane %v2072, %v2076
    %v2078 = vlaneseq
    %v2079 = vshrl.u32 %v2078, 7
    %v2080 = vsub.s32 1, %v2079
    %v2081 = vrot.slane %v2072, %v2080
    %v2082 = vlaneseq
    %v2083 = vshrl.u32 %v2082, 7
    %v2084 = vsub.s32 2, %v2083
    %v2085 = vrot.slane %v2072, %v2084
    %v2086 = vlaneseq
    %v2087 = vshrl.u32 %v2086, 7
    %v2088 = vsub.s32 3, %v2087
    %v2089 = vrot.slane %v2072, %v2088
    %v2090 = vlaneseq
    %v2091 = vshrl.u32 %v2090, 7
    %v2092 = vsub.s32 4, %v2091
    %v2093 = vrot.slane %v2072, %v2092
    %v2100 = vsel %vm79, %v2050, 0
    %v2103 = vsel %vm79, %v2051, 0
    %2105 = vmatprep.subr.mxu0 %v2053
    %2106 = vmatpush1.msra.mxu0 %v2052
    %2107 = vmatprep.subr.mxu0 %v2058
    %2108 = vmatpush1.msra.mxu0 %v2057
    %2109 = vmatprep.subr.mxu0 %v2063
    %2110 = vmatpush1.msra.mxu0 %v2062
    %2111 = vmatprep.subr.mxu0 %v2068
    %2112 = vmatpush1.msra.mxu0 %v2067
    %2113 = vmatprep.subr.mxu0 0.0
    %2114 = vmatpush1.msra.mxu0 0.0
    %2115 = vmatprep.subr.mxu0 0.0
    %2116 = vmatpush1.msra.mxu0 0.0
    %2117 = vmatprep.subr.mxu0 0.0
    %2118 = vmatpush1.msra.mxu0 0.0
    %2119 = vmatprep.subr.mxu0 0.0
    %2120 = vmatpush1.msra.mxu0 0.0
    %2121 = vmatprep.subr.mxu0 0.0
    %2122 = vmatpush1.msra.mxu0 0.0
    %2123 = vmatprep.subr.mxu0 0.0
    %2124 = vmatpush1.msra.mxu0 0.0
    %2125 = vmatprep.subr.mxu0 0.0
    %2126 = vmatpush1.msra.mxu0 0.0
    %2127 = vmatprep.subr.mxu0 0.0
    %2128 = vmatpush1.msra.mxu0 0.0
    %2129 = vmatprep.subr.mxu0 0.0
    %2130 = vmatpush1.msra.mxu0 0.0
    %2131 = vmatprep.subr.mxu0 0.0
    %2132 = vmatpush1.msra.mxu0 0.0
    %2133 = vmatprep.subr.mxu0 0.0
    %2134 = vmatpush1.msra.mxu0 0.0
    %2135 = vmatprep.subr.mxu0 0.0
    %2136 = vmatpush1.msra.mxu0 0.0
    %2137 = vmatprep.subr.mxu0 0.0
    %2138 = vmatpush1.msra.mxu0 0.0
    %2139 = vmatprep.subr.mxu0 0.0
    %2140 = vmatpush1.msra.mxu0 0.0
    %2141 = vmatprep.subr.mxu0 0.0
    %2142 = vmatpush1.msra.mxu0 0.0
    %2143 = vmatprep.subr.mxu0 0.0
    %2144 = vmatpush1.msra.mxu0 0.0
    %2145 = vmatprep.subr.mxu0 0.0
    %2146 = vmatpush1.msra.mxu0 0.0
    %2147 = vmatprep.subr.mxu0 0.0
    %2148 = vmatpush1.msra.mxu0 0.0
    %2149 = vmatprep.subr.mxu0 0.0
    %2150 = vmatpush1.msra.mxu0 0.0
    %2151 = vmatprep.subr.mxu0 0.0
    %2152 = vmatpush1.msra.mxu0 0.0
    %2153 = vmatprep.subr.mxu0 0.0
    %2154 = vmatpush1.msra.mxu0 0.0
    %2155 = vmatprep.subr.mxu0 0.0
    %2156 = vmatpush1.msra.mxu0 0.0
    %2157 = vmatprep.subr.mxu0 0.0
    %2158 = vmatpush1.msra.mxu0 0.0
    %2159 = vmatprep.subr.mxu0 0.0
    %2160 = vmatpush1.msra.mxu0 0.0
    %2161 = vmatprep.subr.mxu0 0.0
    %2162 = vmatpush1.msra.mxu0 0.0
    %2163 = vmatprep.subr.mxu0 0.0
    %2164 = vmatpush1.msra.mxu0 0.0
    %2165 = vmatprep.subr.mxu0 0.0
    %2166 = vmatpush1.msra.mxu0 0.0
    %2167 = vmatprep.subr.mxu0 0.0
    %2168 = vmatpush1.msra.mxu0 0.0
    %2169 = vmatprep.mubr.f32.mxu0 0.0
    %2170 = vmatmul.mubr.f32.gmra.mrb[0].mxu0 %v2100
    %v2171 = vpop.f32.mrb[0].mxu0
    %v2172 = vadd.f32 %v2077, %v2171
    %v2173 = vpop.f32.mrb[0].mxu0
    %v2174 = vadd.f32 %v2081, %v2173
    %2175 = vmatprep.mubr.f32.mxu0 0.0
    %2176 = vmatmul.mubr.f32.gmra.mrb[0].mxu0 %v2103
    %v2177 = vpop.f32.mrb[0].mxu0
    %v2178 = vadd.f32 %v2077, %v2177
    %v2179 = vpop.f32.mrb[0].mxu0
    %v2180 = vadd.f32 %v2081, %v2179
    %2181 = vdwg.mxu0
    %2182 = vmatprep.subr.mxu0 %v2055
    %2183 = vmatpush1.msra.mxu0 %v2054
    %2184 = vmatprep.subr.mxu0 %v2060
    %2185 = vmatpush1.msra.mxu0 %v2059
    %2186 = vmatprep.subr.mxu0 %v2065
    %2187 = vmatpush1.msra.mxu0 %v2064
    %2188 = vmatprep.subr.mxu0 %v2070
    %2189 = vmatpush1.msra.mxu0 %v2069
    %2190 = vmatprep.subr.mxu0 0.0
    %2191 = vmatpush1.msra.mxu0 0.0
    %2192 = vmatprep.subr.mxu0 0.0
    %2193 = vmatpush1.msra.mxu0 0.0
    %2194 = vmatprep.subr.mxu0 0.0
    %2195 = vmatpush1.msra.mxu0 0.0
    %2196 = vmatprep.subr.mxu0 0.0
    %2197 = vmatpush1.msra.mxu0 0.0
    %2198 = vmatprep.subr.mxu0 0.0
    %2199 = vmatpush1.msra.mxu0 0.0
    %2200 = vmatprep.subr.mxu0 0.0
    %2201 = vmatpush1.msra.mxu0 0.0
    %2202 = vmatprep.subr.mxu0 0.0
    %2203 = vmatpush1.msra.mxu0 0.0
    %2204 = vmatprep.subr.mxu0 0.0
    %2205 = vmatpush1.msra.mxu0 0.0
    %2206 = vmatprep.subr.mxu0 0.0
    %2207 = vmatpush1.msra.mxu0 0.0
    %2208 = vmatprep.subr.mxu0 0.0
    %2209 = vmatpush1.msra.mxu0 0.0
    %2210 = vmatprep.subr.mxu0 0.0
    %2211 = vmatpush1.msra.mxu0 0.0
    %2212 = vmatprep.subr.mxu0 0.0
    %2213 = vmatpush1.msra.mxu0 0.0
    %2214 = vmatprep.subr.mxu0 0.0
    %2215 = vmatpush1.msra.mxu0 0.0
    %2216 = vmatprep.subr.mxu0 0.0
    %2217 = vmatpush1.msra.mxu0 0.0
    %2218 = vmatprep.subr.mxu0 0.0
    %2219 = vmatpush1.msra.mxu0 0.0
    %2220 = vmatprep.subr.mxu0 0.0
    %2221 = vmatpush1.msra.mxu0 0.0
    %2222 = vmatprep.subr.mxu0 0.0
    %2223 = vmatpush1.msra.mxu0 0.0
    %2224 = vmatprep.subr.mxu0 0.0
    %2225 = vmatpush1.msra.mxu0 0.0
    %2226 = vmatprep.subr.mxu0 0.0
    %2227 = vmatpush1.msra.mxu0 0.0
    %2228 = vmatprep.subr.mxu0 0.0
    %2229 = vmatpush1.msra.mxu0 0.0
    %2230 = vmatprep.subr.mxu0 0.0
    %2231 = vmatpush1.msra.mxu0 0.0
    %2232 = vmatprep.subr.mxu0 0.0
    %2233 = vmatpush1.msra.mxu0 0.0
    %2234 = vmatprep.subr.mxu0 0.0
    %2235 = vmatpush1.msra.mxu0 0.0
    %2236 = vmatprep.subr.mxu0 0.0
    %2237 = vmatpush1.msra.mxu0 0.0
    %2238 = vmatprep.subr.mxu0 0.0
    %2239 = vmatpush1.msra.mxu0 0.0
    %2240 = vmatprep.subr.mxu0 0.0
    %2241 = vmatpush1.msra.mxu0 0.0
    %2242 = vmatprep.subr.mxu0 0.0
    %2243 = vmatpush1.msra.mxu0 0.0
    %2244 = vmatprep.subr.mxu0 0.0
    %2245 = vmatpush1.msra.mxu0 0.0
    %2246 = vmatprep.mubr.f32.mxu0 0.0
    %2247 = vmatmul.mubr.f32.gmra.mrb[0].mxu0 %v2100
    %v2248 = vpop.f32.mrb[0].mxu0
    %v2249 = vadd.f32 %v2085, %v2248
    %v2250 = vpop.f32.mrb[0].mxu0
    %v2251 = vadd.f32 %v2089, %v2250
    %2252 = vmatprep.mubr.f32.mxu0 0.0
    %2253 = vmatmul.mubr.f32.gmra.mrb[0].mxu0 %v2103
    %v2254 = vpop.f32.mrb[0].mxu0
    %v2255 = vadd.f32 %v2085, %v2254
    %v2256 = vpop.f32.mrb[0].mxu0
    %v2257 = vadd.f32 %v2089, %v2256
    %2258 = vdwg.mxu0
    %2259 = vmatprep.subr.mxu0 0.0
    %2260 = vmatpush1.msra.mxu0 %v2056
    %2261 = vmatprep.subr.mxu0 0.0
    %2262 = vmatpush1.msra.mxu0 %v2061
    %2263 = vmatprep.subr.mxu0 0.0
    %2264 = vmatpush1.msra.mxu0 %v2066
    %2265 = vmatprep.subr.mxu0 0.0
    %2266 = vmatpush1.msra.mxu0 %v2071
    %2267 = vmatprep.subr.mxu0 0.0
    %2268 = vmatpush1.msra.mxu0 0.0
    %2269 = vmatprep.subr.mxu0 0.0
    %2270 = vmatpush1.msra.mxu0 0.0
    %2271 = vmatprep.subr.mxu0 0.0
    %2272 = vmatpush1.msra.mxu0 0.0
    %2273 = vmatprep.subr.mxu0 0.0
    %2274 = vmatpush1.msra.mxu0 0.0
    %2275 = vmatprep.subr.mxu0 0.0
    %2276 = vmatpush1.msra.mxu0 0.0
    %2277 = vmatprep.subr.mxu0 0.0
    %2278 = vmatpush1.msra.mxu0 0.0
    %2279 = vmatprep.subr.mxu0 0.0
    %2280 = vmatpush1.msra.mxu0 0.0
    %2281 = vmatprep.subr.mxu0 0.0
    %2282 = vmatpush1.msra.mxu0 0.0
    %2283 = vmatprep.subr.mxu0 0.0
    %2284 = vmatpush1.msra.mxu0 0.0
    %2285 = vmatprep.subr.mxu0 0.0
    %2286 = vmatpush1.msra.mxu0 0.0
    %2287 = vmatprep.subr.mxu0 0.0
    %2288 = vmatpush1.msra.mxu0 0.0
    %2289 = vmatprep.subr.mxu0 0.0
    %2290 = vmatpush1.msra.mxu0 0.0
    %2291 = vmatprep.subr.mxu0 0.0
    %2292 = vmatpush1.msra.mxu0 0.0
    %2293 = vmatprep.subr.mxu0 0.0
    %2294 = vmatpush1.msra.mxu0 0.0
    %2295 = vmatprep.subr.mxu0 0.0
    %2296 = vmatpush1.msra.mxu0 0.0
    %2297 = vmatprep.subr.mxu0 0.0
    %2298 = vmatpush1.msra.mxu0 0.0
    %2299 = vmatprep.subr.mxu0 0.0
    %2300 = vmatpush1.msra.mxu0 0.0
    %2301 = vmatprep.subr.mxu0 0.0
    %2302 = vmatpush1.msra.mxu0 0.0
    %2303 = vmatprep.subr.mxu0 0.0
    %2304 = vmatpush1.msra.mxu0 0.0
    %2305 = vmatprep.subr.mxu0 0.0
    %2306 = vmatpush1.msra.mxu0 0.0
    %2307 = vmatprep.subr.mxu0 0.0
    %2308 = vmatpush1.msra.mxu0 0.0
    %2309 = vmatprep.subr.mxu0 0.0
    %2310 = vmatpush1.msra.mxu0 0.0
    %2311 = vmatprep.subr.mxu0 0.0
    %2312 = vmatpush1.msra.mxu0 0.0
    %2313 = vmatprep.subr.mxu0 0.0
    %2314 = vmatpush1.msra.mxu0 0.0
    %2315 = vmatprep.subr.mxu0 0.0
    %2316 = vmatpush1.msra.mxu0 0.0
    %2317 = vmatprep.subr.mxu0 0.0
    %2318 = vmatpush1.msra.mxu0 0.0
    %2319 = vmatprep.subr.mxu0 0.0
    %2320 = vmatpush1.msra.mxu0 0.0
    %2321 = vmatprep.subr.mxu0 0.0
    %2322 = vmatpush1.msra.mxu0 0.0
    %2323 = vmatprep.mubr.f32.mxu0 0.0
    %2324 = vmatmul.mubr.f32.gmra.mrb[0].mxu0 %v2100
    %v2325 = vpop.f32.mrb[0].mxu0
    %v2326 = vadd.f32 %v2093, %v2325
    %v2327 = vpop.f32.mrb[0].mxu0
    %2328 = vmatprep.mubr.f32.mxu0 0.0
    %2329 = vmatmul.mubr.f32.gmra.mrb[0].mxu0 %v2103
    %v2330 = vpop.f32.mrb[0].mxu0
    %v2331 = vadd.f32 %v2093, %v2330
    %v2332 = vpop.f32.mrb[0].mxu0
    %2333 = vdwg.mxu0
    %v2334 = vld [vmem:[%s1] sm:$0xff]
    %v2335 = vld [vmem:[%s1 + $0x8] sm:$0xff]
    %v2336 = vld [vmem:[%s1 + $0x10] sm:$0xff]
    %v2337 = vld [vmem:[%s1 + $0x18] sm:$0xff]
    %v2338 = vld [vmem:[%s8] sm:$0xff]
    %v2339 = vld [vmem:[%s8 + $0x8] sm:$0xff]
    %v2340 = vld [vmem:[%s8 + $0x10] sm:$0xff]
    %v2341 = vld [vmem:[%s8 + $0x18] sm:$0xff]
    %v2342 = vld [vmem:[%s8 + $0x20] sm:$0xff]
    %v2343 = vld [vmem:[%s8 + $0x28] sm:$0xff]
    %v2344 = vld [vmem:[%s8 + $0x30] sm:$0xff]
    %v2345 = vld [vmem:[%s8 + $0x38] sm:$0xff]
    %v2346 = vld [vmem:[%s8 + $0x40] sm:$0xff]
    %v2347 = vld [vmem:[%s8 + $0x48] sm:$0xff]
    %v2348 = vld [vmem:[%s8 + $0x50] sm:$0xff]
    %v2349 = vld [vmem:[%s8 + $0x58] sm:$0xff]
    %v2350 = vld [vmem:[%s8 + $0x60] sm:$0xff]
    %v2351 = vld [vmem:[%s8 + $0x68] sm:$0xff]
    %v2352 = vld [vmem:[%s8 + $0x70] sm:$0xff]
    %v2353 = vld [vmem:[%s8 + $0x78] sm:$0xff]
    %v2354 = vld [vmem:[%s9] sm:$0xf]
    %v2356 = vlaneseq
    %v2357 = vshrl.u32 %v2356, 7
    %v2358 = vsub.s32 0, %v2357
    %v2359 = vrot.slane %v2354, %v2358
    %v2360 = vlaneseq
    %v2361 = vshrl.u32 %v2360, 7
    %v2362 = vsub.s32 1, %v2361
    %v2363 = vrot.slane %v2354, %v2362
    %v2364 = vlaneseq
    %v2365 = vshrl.u32 %v2364, 7
    %v2366 = vsub.s32 2, %v2365
    %v2367 = vrot.slane %v2354, %v2366
    %v2368 = vlaneseq
    %v2369 = vshrl.u32 %v2368, 7
    %v2370 = vsub.s32 3, %v2369
    %v2371 = vrot.slane %v2354, %v2370
    %v2377 = vsel %vm79, %v2334, 0
    %v2380 = vsel %vm79, %v2335, 0
    %v2383 = vsel %vm79, %v2336, 0
    %v2386 = vsel %vm79, %v2337, 0
    %2388 = vmatprep.subr.mxu0 %v2339
    %2389 = vmatpush1.msra.mxu0 %v2338
    %2390 = vmatprep.subr.mxu0 %v2343
    %2391 = vmatpush1.msra.mxu0 %v2342
    %2392 = vmatprep.subr.mxu0 %v2347
    %2393 = vmatpush1.msra.mxu0 %v2346
    %2394 = vmatprep.subr.mxu0 %v2351
    %2395 = vmatpush1.msra.mxu0 %v2350
    %2396 = vmatprep.subr.mxu0 0.0
    %2397 = vmatpush1.msra.mxu0 0.0
    %2398 = vmatprep.subr.mxu0 0.0
    %2399 = vmatpush1.msra.mxu0 0.0
    %2400 = vmatprep.subr.mxu0 0.0
    %2401 = vmatpush1.msra.mxu0 0.0
    %2402 = vmatprep.subr.mxu0 0.0
    %2403 = vmatpush1.msra.mxu0 0.0
    %2404 = vmatprep.subr.mxu0 0.0
    %2405 = vmatpush1.msra.mxu0 0.0
    %2406 = vmatprep.subr.mxu0 0.0
    %2407 = vmatpush1.msra.mxu0 0.0
    %2408 = vmatprep.subr.mxu0 0.0
    %2409 = vmatpush1.msra.mxu0 0.0
    %2410 = vmatprep.subr.mxu0 0.0
    %2411 = vmatpush1.msra.mxu0 0.0
    %2412 = vmatprep.subr.mxu0 0.0
    %2413 = vmatpush1.msra.mxu0 0.0
    %2414 = vmatprep.subr.mxu0 0.0
    %2415 = vmatpush1.msra.mxu0 0.0
    %2416 = vmatprep.subr.mxu0 0.0
    %2417 = vmatpush1.msra.mxu0 0.0
    %2418 = vmatprep.subr.mxu0 0.0
    %2419 = vmatpush1.msra.mxu0 0.0
    %2420 = vmatprep.subr.mxu0 0.0
    %2421 = vmatpush1.msra.mxu0 0.0
    %2422 = vmatprep.subr.mxu0 0.0
    %2423 = vmatpush1.msra.mxu0 0.0
    %2424 = vmatprep.subr.mxu0 0.0
    %2425 = vmatpush1.msra.mxu0 0.0
    %2426 = vmatprep.subr.mxu0 0.0
    %2427 = vmatpush1.msra.mxu0 0.0
    %2428 = vmatprep.subr.mxu0 0.0
    %2429 = vmatpush1.msra.mxu0 0.0
    %2430 = vmatprep.subr.mxu0 0.0
    %2431 = vmatpush1.msra.mxu0 0.0
    %2432 = vmatprep.subr.mxu0 0.0
    %2433 = vmatpush1.msra.mxu0 0.0
    %2434 = vmatprep.subr.mxu0 0.0
    %2435 = vmatpush1.msra.mxu0 0.0
    %2436 = vmatprep.subr.mxu0 0.0
    %2437 = vmatpush1.msra.mxu0 0.0
    %2438 = vmatprep.subr.mxu0 0.0
    %2439 = vmatpush1.msra.mxu0 0.0
    %2440 = vmatprep.subr.mxu0 0.0
    %2441 = vmatpush1.msra.mxu0 0.0
    %2442 = vmatprep.subr.mxu0 0.0
    %2443 = vmatpush1.msra.mxu0 0.0
    %2444 = vmatprep.subr.mxu0 0.0
    %2445 = vmatpush1.msra.mxu0 0.0
    %2446 = vmatprep.subr.mxu0 0.0
    %2447 = vmatpush1.msra.mxu0 0.0
    %2448 = vmatprep.subr.mxu0 0.0
    %2449 = vmatpush1.msra.mxu0 0.0
    %2450 = vmatprep.subr.mxu0 0.0
    %2451 = vmatpush1.msra.mxu0 0.0
    %2452 = vmatprep.mubr.f32.mxu0 0.0
    %2453 = vmatmul.mubr.f32.gmra.mrb[0].mxu0 %v2377
    %v2454 = vpop.f32.mrb[0].mxu0
    %v2455 = vadd.f32 %v2359, %v2454
    %v2456 = vpop.f32.mrb[0].mxu0
    %v2457 = vadd.f32 %v2363, %v2456
    %2458 = vmatprep.mubr.f32.mxu0 0.0
    %2459 = vmatmul.mubr.f32.gmra.mrb[0].mxu0 %v2380
    %v2460 = vpop.f32.mrb[0].mxu0
    %v2461 = vadd.f32 %v2359, %v2460
    %v2462 = vpop.f32.mrb[0].mxu0
    %v2463 = vadd.f32 %v2363, %v2462
    %2464 = vmatprep.mubr.f32.mxu0 0.0
    %2465 = vmatmul.mubr.f32.gmra.mrb[0].mxu0 %v2383
    %v2466 = vpop.f32.mrb[0].mxu0
    %v2467 = vadd.f32 %v2359, %v2466
    %v2468 = vpop.f32.mrb[0].mxu0
    %v2469 = vadd.f32 %v2363, %v2468
    %2470 = vmatprep.mubr.f32.mxu0 0.0
    %2471 = vmatmul.mubr.f32.gmra.mrb[0].mxu0 %v2386
    %v2472 = vpop.f32.mrb[0].mxu0
    %v2473 = vadd.f32 %v2359, %v2472
    %v2474 = vpop.f32.mrb[0].mxu0
    %v2475 = vadd.f32 %v2363, %v2474
    %2476 = vdwg.mxu0
    %2477 = vmatprep.subr.mxu0 %v2341
    %2478 = vmatpush1.msra.mxu0 %v2340
    %2479 = vmatprep.subr.mxu0 %v2345
    %2480 = vmatpush1.msra.mxu0 %v2344
    %2481 = vmatprep.subr.mxu0 %v2349
    %2482 = vmatpush1.msra.mxu0 %v2348
    %2483 = vmatprep.subr.mxu0 %v2353
    %2484 = vmatpush1.msra.mxu0 %v2352
    %2485 = vmatprep.subr.mxu0 0.0
    %2486 = vmatpush1.msra.mxu0 0.0
    %2487 = vmatprep.subr.mxu0 0.0
    %2488 = vmatpush1.msra.mxu0 0.0
    %2489 = vmatprep.subr.mxu0 0.0
    %2490 = vmatpush1.msra.mxu0 0.0
    %2491 = vmatprep.subr.mxu0 0.0
    %2492 = vmatpush1.msra.mxu0 0.0
    %2493 = vmatprep.subr.mxu0 0.0
    %2494 = vmatpush1.msra.mxu0 0.0
    %2495 = vmatprep.subr.mxu0 0.0
    %2496 = vmatpush1.msra.mxu0 0.0
    %2497 = vmatprep.subr.mxu0 0.0
    %2498 = vmatpush1.msra.mxu0 0.0
    %2499 = vmatprep.subr.mxu0 0.0
    %2500 = vmatpush1.msra.mxu0 0.0
    %2501 = vmatprep.subr.mxu0 0.0
    %2502 = vmatpush1.msra.mxu0 0.0
    %2503 = vmatprep.subr.mxu0 0.0
    %2504 = vmatpush1.msra.mxu0 0.0
    %2505 = vmatprep.subr.mxu0 0.0
    %2506 = vmatpush1.msra.mxu0 0.0
    %2507 = vmatprep.subr.mxu0 0.0
    %2508 = vmatpush1.msra.mxu0 0.0
    %2509 = vmatprep.subr.mxu0 0.0
    %2510 = vmatpush1.msra.mxu0 0.0
    %2511 = vmatprep.subr.mxu0 0.0
    %2512 = vmatpush1.msra.mxu0 0.0
    %2513 = vmatprep.subr.mxu0 0.0
    %2514 = vmatpush1.msra.mxu0 0.0
    %2515 = vmatprep.subr.mxu0 0.0
    %2516 = vmatpush1.msra.mxu0 0.0
    %2517 = vmatprep.subr.mxu0 0.0
    %2518 = vmatpush1.msra.mxu0 0.0
    %2519 = vmatprep.subr.mxu0 0.0
    %2520 = vmatpush1.msra.mxu0 0.0
    %2521 = vmatprep.subr.mxu0 0.0
    %2522 = vmatpush1.msra.mxu0 0.0
    %2523 = vmatprep.subr.mxu0 0.0
    %2524 = vmatpush1.msra.mxu0 0.0
    %2525 = vmatprep.subr.mxu0 0.0
    %2526 = vmatpush1.msra.mxu0 0.0
    %2527 = vmatprep.subr.mxu0 0.0
    %2528 = vmatpush1.msra.mxu0 0.0
    %2529 = vmatprep.subr.mxu0 0.0
    %2530 = vmatpush1.msra.mxu0 0.0
    %2531 = vmatprep.subr.mxu0 0.0
    %2532 = vmatpush1.msra.mxu0 0.0
    %2533 = vmatprep.subr.mxu0 0.0
    %2534 = vmatpush1.msra.mxu0 0.0
    %2535 = vmatprep.subr.mxu0 0.0
    %2536 = vmatpush1.msra.mxu0 0.0
    %2537 = vmatprep.subr.mxu0 0.0
    %2538 = vmatpush1.msra.mxu0 0.0
    %2539 = vmatprep.subr.mxu0 0.0
    %2540 = vmatpush1.msra.mxu0 0.0
    %2541 = vmatprep.mubr.f32.mxu0 0.0
    %2542 = vmatmul.mubr.f32.gmra.mrb[0].mxu0 %v2377
    %v2543 = vpop.f32.mrb[0].mxu0
    %v2544 = vadd.f32 %v2367, %v2543
    %v2545 = vpop.f32.mrb[0].mxu0
    %v2546 = vadd.f32 %v2371, %v2545
    %2547 = vmatprep.mubr.f32.mxu0 0.0
    %2548 = vmatmul.mubr.f32.gmra.mrb[0].mxu0 %v2380
    %v2549 = vpop.f32.mrb[0].mxu0
    %v2550 = vadd.f32 %v2367, %v2549
    %v2551 = vpop.f32.mrb[0].mxu0
    %v2552 = vadd.f32 %v2371, %v2551
    %2553 = vmatprep.mubr.f32.mxu0 0.0
    %2554 = vmatmul.mubr.f32.gmra.mrb[0].mxu0 %v2383
    %v2555 = vpop.f32.mrb[0].mxu0
    %v2556 = vadd.f32 %v2367, %v2555
    %v2557 = vpop.f32.mrb[0].mxu0
    %v2558 = vadd.f32 %v2371, %v2557
    %2559 = vmatprep.mubr.f32.mxu0 0.0
    %2560 = vmatmul.mubr.f32.gmra.mrb[0].mxu0 %v2386
    %v2561 = vpop.f32.mrb[0].mxu0
    %v2562 = vadd.f32 %v2367, %v2561
    %v2563 = vpop.f32.mrb[0].mxu0
    %v2564 = vadd.f32 %v2371, %v2563
    %2565 = vdwg.mxu0
    %2566 = vmatprep.subr.mxu0 0.0
    %2567 = vmatpush1.xpose.msra.mxu0 %v2455
    %2568 = vmatprep.subr.mxu0 0.0
    %2569 = vmatpush1.xpose.msra.mxu0 %v2461
    %2570 = vmatprep.subr.mxu0 0.0
    %2571 = vmatpush1.xpose.msra.mxu0 0.0
    %2572 = vmatprep.subr.mxu0 0.0
    %2573 = vmatpush1.xpose.msra.mxu0 0.0
    %2574 = vmatprep.subr.mxu0 0.0
    %2575 = vmatpush1.xpose.msra.mxu0 0.0
    %2576 = vmatprep.subr.mxu0 0.0
    %2577 = vmatpush1.xpose.msra.mxu0 0.0
    %2578 = vmatprep.subr.mxu0 0.0
    %2579 = vmatpush1.xpose.msra.mxu0 0.0
    %2580 = vmatprep.subr.mxu0 0.0
    %2581 = vmatpush1.xpose.msra.mxu0 0.0
    %2582 = vmatprep.subr.mxu0 0.0
    %2583 = vmatpush1.xpose.msra.mxu0 0.0
    %2584 = vmatprep.subr.mxu0 0.0
    %2585 = vmatpush1.xpose.msra.mxu0 0.0
    %2586 = vmatprep.subr.mxu0 0.0
    %2587 = vmatpush1.xpose.msra.mxu0 0.0
    %2588 = vmatprep.subr.mxu0 0.0
    %2589 = vmatpush1.xpose.msra.mxu0 0.0
    %2590 = vmatprep.subr.mxu0 0.0
    %2591 = vmatpush1.xpose.msra.mxu0 0.0
    %2592 = vmatprep.subr.mxu0 0.0
    %2593 = vmatpush1.xpose.msra.mxu0 0.0
    %2594 = vmatprep.subr.mxu0 0.0
    %2595 = vmatpush1.xpose.msra.mxu0 0.0
    %2596 = vmatprep.subr.mxu0 0.0
    %2597 = vmatpush1.xpose.msra.mxu0 0.0
    %2598 = vmatprep.subr.mxu0 0.0
    %2599 = vmatpush1.xpose.msra.mxu0 0.0
    %2600 = vmatprep.subr.mxu0 0.0
    %2601 = vmatpush1.xpose.msra.mxu0 0.0
    %2602 = vmatprep.subr.mxu0 0.0
    %2603 = vmatpush1.xpose.msra.mxu0 0.0
    %2604 = vmatprep.subr.mxu0 0.0
    %2605 = vmatpush1.xpose.msra.mxu0 0.0
    %2606 = vmatprep.subr.mxu0 0.0
    %2607 = vmatpush1.xpose.msra.mxu0 0.0
    %2608 = vmatprep.subr.mxu0 0.0
    %2609 = vmatpush1.xpose.msra.mxu0 0.0
    %2610 = vmatprep.subr.mxu0 0.0
    %2611 = vmatpush1.xpose.msra.mxu0 0.0
    %2612 = vmatprep.subr.mxu0 0.0
    %2613 = vmatpush1.xpose.msra.mxu0 0.0
    %2614 = vmatprep.subr.mxu0 0.0
    %2615 = vmatpush1.xpose.msra.mxu0 0.0
    %2616 = vmatprep.subr.mxu0 0.0
    %2617 = vmatpush1.xpose.msra.mxu0 0.0
    %2618 = vmatprep.subr.mxu0 0.0
    %2619 = vmatpush1.xpose.msra.mxu0 0.0
    %2620 = vmatprep.subr.mxu0 0.0
    %2621 = vmatpush1.xpose.msra.mxu0 0.0
    %2622 = vmatprep.subr.mxu0 0.0
    %2623 = vmatpush1.xpose.msra.mxu0 0.0
    %2624 = vmatprep.subr.mxu0 0.0
    %2625 = vmatpush1.xpose.msra.mxu0 0.0
    %2626 = vmatprep.subr.mxu0 0.0
    %2627 = vmatpush1.xpose.msra.mxu0 0.0
    %2628 = vmatprep.subr.mxu0 0.0
    %2629 = vmatpush1.xpose.msra.mxu0 0.0
    %2630 = vmatprep.mubr.f32.mxu0 0.0
    %2631 = vmatmul.mubr.f32.gmra.mrb[0].mxu0 %v2172
    %v2632 = vpop.f32.mrb[0].mxu0
    %v2633 = vadd.f32 0.0, %v2632
    %v2634 = vpop.f32.mrb[0].mxu0
    %2635 = vdwg.mxu0
    %2636 = vmatprep.subr.mxu0 0.0
    %2637 = vmatpush1.xpose.msra.mxu0 %v2457
    %2638 = vmatprep.subr.mxu0 0.0
    %2639 = vmatpush1.xpose.msra.mxu0 %v2463
    %2640 = vmatprep.subr.mxu0 0.0
    %2641 = vmatpush1.xpose.msra.mxu0 0.0
    %2642 = vmatprep.subr.mxu0 0.0
    %2643 = vmatpush1.xpose.msra.mxu0 0.0
    %2644 = vmatprep.subr.mxu0 0.0
    %2645 = vmatpush1.xpose.msra.mxu0 0.0
    %2646 = vmatprep.subr.mxu0 0.0
    %2647 = vmatpush1.xpose.msra.mxu0 0.0
    %2648 = vmatprep.subr.mxu0 0.0
    %2649 = vmatpush1.xpose.msra.mxu0 0.0
    %2650 = vmatprep.subr.mxu0 0.0
    %2651 = vmatpush1.xpose.msra.mxu0 0.0
    %2652 = vmatprep.subr.mxu0 0.0
    %2653 = vmatpush1.xpose.msra.mxu0 0.0
    %2654 = vmatprep.subr.mxu0 0.0
    %2655 = vmatpush1.xpose.msra.mxu0 0.0
    %2656 = vmatprep.subr.mxu0 0.0
    %2657 = vmatpush1.xpose.msra.mxu0 0.0
    %2658 = vmatprep.subr.mxu0 0.0
    %2659 = vmatpush1.xpose.msra.mxu0 0.0
    %2660 = vmatprep.subr.mxu0 0.0
    %2661 = vmatpush1.xpose.msra.mxu0 0.0
    %2662 = vmatprep.subr.mxu0 0.0
    %2663 = vmatpush1.xpose.msra.mxu0 0.0
    %2664 = vmatprep.subr.mxu0 0.0
    %2665 = vmatpush1.xpose.msra.mxu0 0.0
    %2666 = vmatprep.subr.mxu0 0.0
    %2667 = vmatpush1.xpose.msra.mxu0 0.0
    %2668 = vmatprep.subr.mxu0 0.0
    %2669 = vmatpush1.xpose.msra.mxu0 0.0
    %2670 = vmatprep.subr.mxu0 0.0
    %2671 = vmatpush1.xpose.msra.mxu0 0.0
    %2672 = vmatprep.subr.mxu0 0.0
    %2673 = vmatpush1.xpose.msra.mxu0 0.0
    %2674 = vmatprep.subr.mxu0 0.0
    %2675 = vmatpush1.xpose.msra.mxu0 0.0
    %2676 = vmatprep.subr.mxu0 0.0
    %2677 = vmatpush1.xpose.msra.mxu0 0.0
    %2678 = vmatprep.subr.mxu0 0.0
    %2679 = vmatpush1.xpose.msra.mxu0 0.0
    %2680 = vmatprep.subr.mxu0 0.0
    %2681 = vmatpush1.xpose.msra.mxu0 0.0
    %2682 = vmatprep.subr.mxu0 0.0
    %2683 = vmatpush1.xpose.msra.mxu0 0.0
    %2684 = vmatprep.subr.mxu0 0.0
    %2685 = vmatpush1.xpose.msra.mxu0 0.0
    %2686 = vmatprep.subr.mxu0 0.0
    %2687 = vmatpush1.xpose.msra.mxu0 0.0
    %2688 = vmatprep.subr.mxu0 0.0
    %2689 = vmatpush1.xpose.msra.mxu0 0.0
    %2690 = vmatprep.subr.mxu0 0.0
    %2691 = vmatpush1.xpose.msra.mxu0 0.0
    %2692 = vmatprep.subr.mxu0 0.0
    %2693 = vmatpush1.xpose.msra.mxu0 0.0
    %2694 = vmatprep.subr.mxu0 0.0
    %2695 = vmatpush1.xpose.msra.mxu0 0.0
    %2696 = vmatprep.subr.mxu0 0.0
    %2697 = vmatpush1.xpose.msra.mxu0 0.0
    %2698 = vmatprep.subr.mxu0 0.0
    %2699 = vmatpush1.xpose.msra.mxu0 0.0
    %2700 = vmatprep.mubr.f32.mxu0 0.0
    %2701 = vmatmul.mubr.f32.gmra.mrb[0].mxu0 %v2174
    %v2702 = vpop.f32.mrb[0].mxu0
    %v2703 = vadd.f32 0.0, %v2702
    %v2704 = vpop.f32.mrb[0].mxu0
    %2705 = vdwg.mxu0
    %2706 = vmatprep.subr.mxu0 0.0
    %2707 = vmatpush1.xpose.msra.mxu0 %v2544
    %2708 = vmatprep.subr.mxu0 0.0
    %2709 = vmatpush1.xpose.msra.mxu0 %v2550
    %2710 = vmatprep.subr.mxu0 0.0
    %2711 = vmatpush1.xpose.msra.mxu0 0.0
    %2712 = vmatprep.subr.mxu0 0.0
    %2713 = vmatpush1.xpose.msra.mxu0 0.0
    %2714 = vmatprep.subr.mxu0 0.0
    %2715 = vmatpush1.xpose.msra.mxu0 0.0
    %2716 = vmatprep.subr.mxu0 0.0
    %2717 = vmatpush1.xpose.msra.mxu0 0.0
    %2718 = vmatprep.subr.mxu0 0.0
    %2719 = vmatpush1.xpose.msra.mxu0 0.0
    %2720 = vmatprep.subr.mxu0 0.0
    %2721 = vmatpush1.xpose.msra.mxu0 0.0
    %2722 = vmatprep.subr.mxu0 0.0
    %2723 = vmatpush1.xpose.msra.mxu0 0.0
    %2724 = vmatprep.subr.mxu0 0.0
    %2725 = vmatpush1.xpose.msra.mxu0 0.0
    %2726 = vmatprep.subr.mxu0 0.0
    %2727 = vmatpush1.xpose.msra.mxu0 0.0
    %2728 = vmatprep.subr.mxu0 0.0
    %2729 = vmatpush1.xpose.msra.mxu0 0.0
    %2730 = vmatprep.subr.mxu0 0.0
    %2731 = vmatpush1.xpose.msra.mxu0 0.0
    %2732 = vmatprep.subr.mxu0 0.0
    %2733 = vmatpush1.xpose.msra.mxu0 0.0
    %2734 = vmatprep.subr.mxu0 0.0
    %2735 = vmatpush1.xpose.msra.mxu0 0.0
    %2736 = vmatprep.subr.mxu0 0.0
    %2737 = vmatpush1.xpose.msra.mxu0 0.0
    %2738 = vmatprep.subr.mxu0 0.0
    %2739 = vmatpush1.xpose.msra.mxu0 0.0
    %2740 = vmatprep.subr.mxu0 0.0
    %2741 = vmatpush1.xpose.msra.mxu0 0.0
    %2742 = vmatprep.subr.mxu0 0.0
    %2743 = vmatpush1.xpose.msra.mxu0 0.0
    %2744 = vmatprep.subr.mxu0 0.0
    %2745 = vmatpush1.xpose.msra.mxu0 0.0
    %2746 = vmatprep.subr.mxu0 0.0
    %2747 = vmatpush1.xpose.msra.mxu0 0.0
    %2748 = vmatprep.subr.mxu0 0.0
    %2749 = vmatpush1.xpose.msra.mxu0 0.0
    %2750 = vmatprep.subr.mxu0 0.0
    %2751 = vmatpush1.xpose.msra.mxu0 0.0
    %2752 = vmatprep.subr.mxu0 0.0
    %2753 = vmatpush1.xpose.msra.mxu0 0.0
    %2754 = vmatprep.subr.mxu0 0.0
    %2755 = vmatpush1.xpose.msra.mxu0 0.0
    %2756 = vmatprep.subr.mxu0 0.0
    %2757 = vmatpush1.xpose.msra.mxu0 0.0
    %2758 = vmatprep.subr.mxu0 0.0
    %2759 = vmatpush1.xpose.msra.mxu0 0.0
    %2760 = vmatprep.subr.mxu0 0.0
    %2761 = vmatpush1.xpose.msra.mxu0 0.0
    %2762 = vmatprep.subr.mxu0 0.0
    %2763 = vmatpush1.xpose.msra.mxu0 0.0
    %2764 = vmatprep.subr.mxu0 0.0
    %2765 = vmatpush1.xpose.msra.mxu0 0.0
    %2766 = vmatprep.subr.mxu0 0.0
    %2767 = vmatpush1.xpose.msra.mxu0 0.0
    %2768 = vmatprep.subr.mxu0 0.0
    %2769 = vmatpush1.xpose.msra.mxu0 0.0
    %2770 = vmatprep.mubr.f32.mxu0 0.0
    %2771 = vmatmul.mubr.f32.gmra.mrb[0].mxu0 %v2249
    %v2772 = vpop.f32.mrb[0].mxu0
    %v2773 = vadd.f32 0.0, %v2772
    %v2774 = vpop.f32.mrb[0].mxu0
    %2775 = vdwg.mxu0
    %2776 = vmatprep.subr.mxu0 0.0
    %2777 = vmatpush1.xpose.msra.mxu0 %v2546
    %2778 = vmatprep.subr.mxu0 0.0
    %2779 = vmatpush1.xpose.msra.mxu0 %v2552
    %2780 = vmatprep.subr.mxu0 0.0
    %2781 = vmatpush1.xpose.msra.mxu0 0.0
    %2782 = vmatprep.subr.mxu0 0.0
    %2783 = vmatpush1.xpose.msra.mxu0 0.0
    %2784 = vmatprep.subr.mxu0 0.0
    %2785 = vmatpush1.xpose.msra.mxu0 0.0
    %2786 = vmatprep.subr.mxu0 0.0
    %2787 = vmatpush1.xpose.msra.mxu0 0.0
    %2788 = vmatprep.subr.mxu0 0.0
    %2789 = vmatpush1.xpose.msra.mxu0 0.0
    %2790 = vmatprep.subr.mxu0 0.0
    %2791 = vmatpush1.xpose.msra.mxu0 0.0
    %2792 = vmatprep.subr.mxu0 0.0
    %2793 = vmatpush1.xpose.msra.mxu0 0.0
    %2794 = vmatprep.subr.mxu0 0.0
    %2795 = vmatpush1.xpose.msra.mxu0 0.0
    %2796 = vmatprep.subr.mxu0 0.0
    %2797 = vmatpush1.xpose.msra.mxu0 0.0
    %2798 = vmatprep.subr.mxu0 0.0
    %2799 = vmatpush1.xpose.msra.mxu0 0.0
    %2800 = vmatprep.subr.mxu0 0.0
    %2801 = vmatpush1.xpose.msra.mxu0 0.0
    %2802 = vmatprep.subr.mxu0 0.0
    %2803 = vmatpush1.xpose.msra.mxu0 0.0
    %2804 = vmatprep.subr.mxu0 0.0
    %2805 = vmatpush1.xpose.msra.mxu0 0.0
    %2806 = vmatprep.subr.mxu0 0.0
    %2807 = vmatpush1.xpose.msra.mxu0 0.0
    %2808 = vmatprep.subr.mxu0 0.0
    %2809 = vmatpush1.xpose.msra.mxu0 0.0
    %2810 = vmatprep.subr.mxu0 0.0
    %2811 = vmatpush1.xpose.msra.mxu0 0.0
    %2812 = vmatprep.subr.mxu0 0.0
    %2813 = vmatpush1.xpose.msra.mxu0 0.0
    %2814 = vmatprep.subr.mxu0 0.0
    %2815 = vmatpush1.xpose.msra.mxu0 0.0
    %2816 = vmatprep.subr.mxu0 0.0
    %2817 = vmatpush1.xpose.msra.mxu0 0.0
    %2818 = vmatprep.subr.mxu0 0.0
    %2819 = vmatpush1.xpose.msra.mxu0 0.0
    %2820 = vmatprep.subr.mxu0 0.0
    %2821 = vmatpush1.xpose.msra.mxu0 0.0
    %2822 = vmatprep.subr.mxu0 0.0
    %2823 = vmatpush1.xpose.msra.mxu0 0.0
    %2824 = vmatprep.subr.mxu0 0.0
    %2825 = vmatpush1.xpose.msra.mxu0 0.0
    %2826 = vmatprep.subr.mxu0 0.0
    %2827 = vmatpush1.xpose.msra.mxu0 0.0
    %2828 = vmatprep.subr.mxu0 0.0
    %2829 = vmatpush1.xpose.msra.mxu0 0.0
    %2830 = vmatprep.subr.mxu0 0.0
    %2831 = vmatpush1.xpose.msra.mxu0 0.0
    %2832 = vmatprep.subr.mxu0 0.0
    %2833 = vmatpush1.xpose.msra.mxu0 0.0
    %2834 = vmatprep.subr.mxu0 0.0
    %2835 = vmatpush1.xpose.msra.mxu0 0.0
    %2836 = vmatprep.subr.mxu0 0.0
    %2837 = vmatpush1.xpose.msra.mxu0 0.0
    %2838 = vmatprep.subr.mxu0 0.0
    %2839 = vmatpush1.xpose.msra.mxu0 0.0
    %2840 = vmatprep.mubr.f32.mxu0 0.0
    %2841 = vmatmul.mubr.f32.gmra.mrb[0].mxu0 %v2251
    %v2842 = vpop.f32.mrb[0].mxu0
    %v2843 = vadd.f32 0.0, %v2842
    %v2844 = vpop.f32.mrb[0].mxu0
    %2845 = vdwg.mxu0
    %2846 = vmatprep.subr.mxu0 0.0
    %2847 = vmatpush1.xpose.msra.mxu0 %v2467
    %2848 = vmatprep.subr.mxu0 0.0
    %2849 = vmatpush1.xpose.msra.mxu0 %v2473
    %2850 = vmatprep.subr.mxu0 0.0
    %2851 = vmatpush1.xpose.msra.mxu0 0.0
    %2852 = vmatprep.subr.mxu0 0.0
    %2853 = vmatpush1.xpose.msra.mxu0 0.0
    %2854 = vmatprep.subr.mxu0 0.0
    %2855 = vmatpush1.xpose.msra.mxu0 0.0
    %2856 = vmatprep.subr.mxu0 0.0
    %2857 = vmatpush1.xpose.msra.mxu0 0.0
    %2858 = vmatprep.subr.mxu0 0.0
    %2859 = vmatpush1.xpose.msra.mxu0 0.0
    %2860 = vmatprep.subr.mxu0 0.0
    %2861 = vmatpush1.xpose.msra.mxu0 0.0
    %2862 = vmatprep.subr.mxu0 0.0
    %2863 = vmatpush1.xpose.msra.mxu0 0.0
    %2864 = vmatprep.subr.mxu0 0.0
    %2865 = vmatpush1.xpose.msra.mxu0 0.0
    %2866 = vmatprep.subr.mxu0 0.0
    %2867 = vmatpush1.xpose.msra.mxu0 0.0
    %2868 = vmatprep.subr.mxu0 0.0
    %2869 = vmatpush1.xpose.msra.mxu0 0.0
    %2870 = vmatprep.subr.mxu0 0.0
    %2871 = vmatpush1.xpose.msra.mxu0 0.0
    %2872 = vmatprep.subr.mxu0 0.0
    %2873 = vmatpush1.xpose.msra.mxu0 0.0
    %2874 = vmatprep.subr.mxu0 0.0
    %2875 = vmatpush1.xpose.msra.mxu0 0.0
    %2876 = vmatprep.subr.mxu0 0.0
    %2877 = vmatpush1.xpose.msra.mxu0 0.0
    %2878 = vmatprep.subr.mxu0 0.0
    %2879 = vmatpush1.xpose.msra.mxu0 0.0
    %2880 = vmatprep.subr.mxu0 0.0
    %2881 = vmatpush1.xpose.msra.mxu0 0.0
    %2882 = vmatprep.subr.mxu0 0.0
    %2883 = vmatpush1.xpose.msra.mxu0 0.0
    %2884 = vmatprep.subr.mxu0 0.0
    %2885 = vmatpush1.xpose.msra.mxu0 0.0
    %2886 = vmatprep.subr.mxu0 0.0
    %2887 = vmatpush1.xpose.msra.mxu0 0.0
    %2888 = vmatprep.subr.mxu0 0.0
    %2889 = vmatpush1.xpose.msra.mxu0 0.0
    %2890 = vmatprep.subr.mxu0 0.0
    %2891 = vmatpush1.xpose.msra.mxu0 0.0
    %2892 = vmatprep.subr.mxu0 0.0
    %2893 = vmatpush1.xpose.msra.mxu0 0.0
    %2894 = vmatprep.subr.mxu0 0.0
    %2895 = vmatpush1.xpose.msra.mxu0 0.0
    %2896 = vmatprep.subr.mxu0 0.0
    %2897 = vmatpush1.xpose.msra.mxu0 0.0
    %2898 = vmatprep.subr.mxu0 0.0
    %2899 = vmatpush1.xpose.msra.mxu0 0.0
    %2900 = vmatprep.subr.mxu0 0.0
    %2901 = vmatpush1.xpose.msra.mxu0 0.0
    %2902 = vmatprep.subr.mxu0 0.0
    %2903 = vmatpush1.xpose.msra.mxu0 0.0
    %2904 = vmatprep.subr.mxu0 0.0
    %2905 = vmatpush1.xpose.msra.mxu0 0.0
    %2906 = vmatprep.subr.mxu0 0.0
    %2907 = vmatpush1.xpose.msra.mxu0 0.0
    %2908 = vmatprep.subr.mxu0 0.0
    %2909 = vmatpush1.xpose.msra.mxu0 0.0
    %2910 = vmatprep.mubr.f32.mxu0 0.0
    %2911 = vmatmul.mubr.f32.gmra.mrb[0].mxu0 %v2178
    %v2912 = vpop.f32.mrb[0].mxu0
    %v2913 = vadd.f32 0.0, %v2912
    %v2914 = vpop.f32.mrb[0].mxu0
    %2915 = vdwg.mxu0
    %2916 = vmatprep.subr.mxu0 0.0
    %2917 = vmatpush1.xpose.msra.mxu0 %v2469
    %2918 = vmatprep.subr.mxu0 0.0
    %2919 = vmatpush1.xpose.msra.mxu0 %v2475
    %2920 = vmatprep.subr.mxu0 0.0
    %2921 = vmatpush1.xpose.msra.mxu0 0.0
    %2922 = vmatprep.subr.mxu0 0.0
    %2923 = vmatpush1.xpose.msra.mxu0 0.0
    %2924 = vmatprep.subr.mxu0 0.0
    %2925 = vmatpush1.xpose.msra.mxu0 0.0
    %2926 = vmatprep.subr.mxu0 0.0
    %2927 = vmatpush1.xpose.msra.mxu0 0.0
    %2928 = vmatprep.subr.mxu0 0.0
    %2929 = vmatpush1.xpose.msra.mxu0 0.0
    %2930 = vmatprep.subr.mxu0 0.0
    %2931 = vmatpush1.xpose.msra.mxu0 0.0
    %2932 = vmatprep.subr.mxu0 0.0
    %2933 = vmatpush1.xpose.msra.mxu0 0.0
    %2934 = vmatprep.subr.mxu0 0.0
    %2935 = vmatpush1.xpose.msra.mxu0 0.0
    %2936 = vmatprep.subr.mxu0 0.0
    %2937 = vmatpush1.xpose.msra.mxu0 0.0
    %2938 = vmatprep.subr.mxu0 0.0
    %2939 = vmatpush1.xpose.msra.mxu0 0.0
    %2940 = vmatprep.subr.mxu0 0.0
    %2941 = vmatpush1.xpose.msra.mxu0 0.0
    %2942 = vmatprep.subr.mxu0 0.0
    %2943 = vmatpush1.xpose.msra.mxu0 0.0
    %2944 = vmatprep.subr.mxu0 0.0
    %2945 = vmatpush1.xpose.msra.mxu0 0.0
    %2946 = vmatprep.subr.mxu0 0.0
    %2947 = vmatpush1.xpose.msra.mxu0 0.0
    %2948 = vmatprep.subr.mxu0 0.0
    %2949 = vmatpush1.xpose.msra.mxu0 0.0
    %2950 = vmatprep.subr.mxu0 0.0
    %2951 = vmatpush1.xpose.msra.mxu0 0.0
    %2952 = vmatprep.subr.mxu0 0.0
    %2953 = vmatpush1.xpose.msra.mxu0 0.0
    %2954 = vmatprep.subr.mxu0 0.0
    %2955 = vmatpush1.xpose.msra.mxu0 0.0
    %2956 = vmatprep.subr.mxu0 0.0
    %2957 = vmatpush1.xpose.msra.mxu0 0.0
    %2958 = vmatprep.subr.mxu0 0.0
    %2959 = vmatpush1.xpose.msra.mxu0 0.0
    %2960 = vmatprep.subr.mxu0 0.0
    %2961 = vmatpush1.xpose.msra.mxu0 0.0
    %2962 = vmatprep.subr.mxu0 0.0
    %2963 = vmatpush1.xpose.msra.mxu0 0.0
    %2964 = vmatprep.subr.mxu0 0.0
    %2965 = vmatpush1.xpose.msra.mxu0 0.0
    %2966 = vmatprep.subr.mxu0 0.0
    %2967 = vmatpush1.xpose.msra.mxu0 0.0
    %2968 = vmatprep.subr.mxu0 0.0
    %2969 = vmatpush1.xpose.msra.mxu0 0.0
    %2970 = vmatprep.subr.mxu0 0.0
    %2971 = vmatpush1.xpose.msra.mxu0 0.0
    %2972 = vmatprep.subr.mxu0 0.0
    %2973 = vmatpush1.xpose.msra.mxu0 0.0
    %2974 = vmatprep.subr.mxu0 0.0
    %2975 = vmatpush1.xpose.msra.mxu0 0.0
    %2976 = vmatprep.subr.mxu0 0.0
    %2977 = vmatpush1.xpose.msra.mxu0 0.0
    %2978 = vmatprep.subr.mxu0 0.0
    %2979 = vmatpush1.xpose.msra.mxu0 0.0
    %2980 = vmatprep.mubr.f32.mxu0 0.0
    %2981 = vmatmul.mubr.f32.gmra.mrb[0].mxu0 %v2180
    %v2982 = vpop.f32.mrb[0].mxu0
    %v2983 = vadd.f32 0.0, %v2982
    %v2984 = vpop.f32.mrb[0].mxu0
    %2985 = vdwg.mxu0
    %2986 = vmatprep.subr.mxu0 0.0
    %2987 = vmatpush1.xpose.msra.mxu0 %v2556
    %2988 = vmatprep.subr.mxu0 0.0
    %2989 = vmatpush1.xpose.msra.mxu0 %v2562
    %2990 = vmatprep.subr.mxu0 0.0
    %2991 = vmatpush1.xpose.msra.mxu0 0.0
    %2992 = vmatprep.subr.mxu0 0.0
    %2993 = vmatpush1.xpose.msra.mxu0 0.0
    %2994 = vmatprep.subr.mxu0 0.0
    %2995 = vmatpush1.xpose.msra.mxu0 0.0
    %2996 = vmatprep.subr.mxu0 0.0
    %2997 = vmatpush1.xpose.msra.mxu0 0.0
    %2998 = vmatprep.subr.mxu0 0.0
    %2999 = vmatpush1.xpose.msra.mxu0 0.0
    %3000 = vmatprep.subr.mxu0 0.0
    %3001 = vmatpush1.xpose.msra.mxu0 0.0
    %3002 = vmatprep.subr.mxu0 0.0
    %3003 = vmatpush1.xpose.msra.mxu0 0.0
    %3004 = vmatprep.subr.mxu0 0.0
    %3005 = vmatpush1.xpose.msra.mxu0 0.0
    %3006 = vmatprep.subr.mxu0 0.0
    %3007 = vmatpush1.xpose.msra.mxu0 0.0
    %3008 = vmatprep.subr.mxu0 0.0
    %3009 = vmatpush1.xpose.msra.mxu0 0.0
    %3010 = vmatprep.subr.mxu0 0.0
    %3011 = vmatpush1.xpose.msra.mxu0 0.0
    %3012 = vmatprep.subr.mxu0 0.0
    %3013 = vmatpush1.xpose.msra.mxu0 0.0
    %3014 = vmatprep.subr.mxu0 0.0
    %3015 = vmatpush1.xpose.msra.mxu0 0.0
    %3016 = vmatprep.subr.mxu0 0.0
    %3017 = vmatpush1.xpose.msra.mxu0 0.0
    %3018 = vmatprep.subr.mxu0 0.0
    %3019 = vmatpush1.xpose.msra.mxu0 0.0
    %3020 = vmatprep.subr.mxu0 0.0
    %3021 = vmatpush1.xpose.msra.mxu0 0.0
    %3022 = vmatprep.subr.mxu0 0.0
    %3023 = vmatpush1.xpose.msra.mxu0 0.0
    %3024 = vmatprep.subr.mxu0 0.0
    %3025 = vmatpush1.xpose.msra.mxu0 0.0
    %3026 = vmatprep.subr.mxu0 0.0
    %3027 = vmatpush1.xpose.msra.mxu0 0.0
    %3028 = vmatprep.subr.mxu0 0.0
    %3029 = vmatpush1.xpose.msra.mxu0 0.0
    %3030 = vmatprep.subr.mxu0 0.0
    %3031 = vmatpush1.xpose.msra.mxu0 0.0
    %3032 = vmatprep.subr.mxu0 0.0
    %3033 = vmatpush1.xpose.msra.mxu0 0.0
    %3034 = vmatprep.subr.mxu0 0.0
    %3035 = vmatpush1.xpose.msra.mxu0 0.0
    %3036 = vmatprep.subr.mxu0 0.0
    %3037 = vmatpush1.xpose.msra.mxu0 0.0
    %3038 = vmatprep.subr.mxu0 0.0
    %3039 = vmatpush1.xpose.msra.mxu0 0.0
    %3040 = vmatprep.subr.mxu0 0.0
    %3041 = vmatpush1.xpose.msra.mxu0 0.0
    %3042 = vmatprep.subr.mxu0 0.0
    %3043 = vmatpush1.xpose.msra.mxu0 0.0
    %3044 = vmatprep.subr.mxu0 0.0
    %3045 = vmatpush1.xpose.msra.mxu0 0.0
    %3046 = vmatprep.subr.mxu0 0.0
    %3047 = vmatpush1.xpose.msra.mxu0 0.0
    %3048 = vmatprep.subr.mxu0 0.0
    %3049 = vmatpush1.xpose.msra.mxu0 0.0
    %3050 = vmatprep.mubr.f32.mxu0 0.0
    %3051 = vmatmul.mubr.f32.gmra.mrb[0].mxu0 %v2255
    %v3052 = vpop.f32.mrb[0].mxu0
    %v3053 = vadd.f32 0.0, %v3052
    %v3054 = vpop.f32.mrb[0].mxu0
    %3055 = vdwg.mxu0
    %3056 = vmatprep.subr.mxu0 0.0
    %3057 = vmatpush1.xpose.msra.mxu0 %v2558
    %3058 = vmatprep.subr.mxu0 0.0
    %3059 = vmatpush1.xpose.msra.mxu0 %v2564
    %3060 = vmatprep.subr.mxu0 0.0
    %3061 = vmatpush1.xpose.msra.mxu0 0.0
    %3062 = vmatprep.subr.mxu0 0.0
    %3063 = vmatpush1.xpose.msra.mxu0 0.0
    %3064 = vmatprep.subr.mxu0 0.0
    %3065 = vmatpush1.xpose.msra.mxu0 0.0
    %3066 = vmatprep.subr.mxu0 0.0
    %3067 = vmatpush1.xpose.msra.mxu0 0.0
    %3068 = vmatprep.subr.mxu0 0.0
    %3069 = vmatpush1.xpose.msra.mxu0 0.0
    %3070 = vmatprep.subr.mxu0 0.0
    %3071 = vmatpush1.xpose.msra.mxu0 0.0
    %3072 = vmatprep.subr.mxu0 0.0
    %3073 = vmatpush1.xpose.msra.mxu0 0.0
    %3074 = vmatprep.subr.mxu0 0.0
    %3075 = vmatpush1.xpose.msra.mxu0 0.0
    %3076 = vmatprep.subr.mxu0 0.0
    %3077 = vmatpush1.xpose.msra.mxu0 0.0
    %3078 = vmatprep.subr.mxu0 0.0
    %3079 = vmatpush1.xpose.msra.mxu0 0.0
    %3080 = vmatprep.subr.mxu0 0.0
    %3081 = vmatpush1.xpose.msra.mxu0 0.0
    %3082 = vmatprep.subr.mxu0 0.0
    %3083 = vmatpush1.xpose.msra.mxu0 0.0
    %3084 = vmatprep.subr.mxu0 0.0
    %3085 = vmatpush1.xpose.msra.mxu0 0.0
    %3086 = vmatprep.subr.mxu0 0.0
    %3087 = vmatpush1.xpose.msra.mxu0 0.0
    %3088 = vmatprep.subr.mxu0 0.0
    %3089 = vmatpush1.xpose.msra.mxu0 0.0
    %3090 = vmatprep.subr.mxu0 0.0
    %3091 = vmatpush1.xpose.msra.mxu0 0.0
    %3092 = vmatprep.subr.mxu0 0.0
    %3093 = vmatpush1.xpose.msra.mxu0 0.0
    %3094 = vmatprep.subr.mxu0 0.0
    %3095 = vmatpush1.xpose.msra.mxu0 0.0
    %3096 = vmatprep.subr.mxu0 0.0
    %3097 = vmatpush1.xpose.msra.mxu0 0.0
    %3098 = vmatprep.subr.mxu0 0.0
    %3099 = vmatpush1.xpose.msra.mxu0 0.0
    %3100 = vmatprep.subr.mxu0 0.0
    %3101 = vmatpush1.xpose.msra.mxu0 0.0
    %3102 = vmatprep.subr.mxu0 0.0
    %3103 = vmatpush1.xpose.msra.mxu0 0.0
    %3104 = vmatprep.subr.mxu0 0.0
    %3105 = vmatpush1.xpose.msra.mxu0 0.0
    %3106 = vmatprep.subr.mxu0 0.0
    %3107 = vmatpush1.xpose.msra.mxu0 0.0
    %3108 = vmatprep.subr.mxu0 0.0
    %3109 = vmatpush1.xpose.msra.mxu0 0.0
    %3110 = vmatprep.subr.mxu0 0.0
    %3111 = vmatpush1.xpose.msra.mxu0 0.0
    %3112 = vmatprep.subr.mxu0 0.0
    %3113 = vmatpush1.xpose.msra.mxu0 0.0
    %3114 = vmatprep.subr.mxu0 0.0
    %3115 = vmatpush1.xpose.msra.mxu0 0.0
    %3116 = vmatprep.subr.mxu0 0.0
    %3117 = vmatpush1.xpose.msra.mxu0 0.0
    %3118 = vmatprep.subr.mxu0 0.0
    %3119 = vmatpush1.xpose.msra.mxu0 0.0
    %3120 = vmatprep.mubr.f32.mxu0 0.0
    %3121 = vmatmul.mubr.f32.gmra.mrb[0].mxu0 %v2257
    %v3122 = vpop.f32.mrb[0].mxu0
    %v3123 = vadd.f32 0.0, %v3122
    %v3124 = vpop.f32.mrb[0].mxu0
    %3125 = vdwg.mxu0
    %vm3126 = vcmask 130048
    %v3127 = vsel %vm3126, %v2633, -inf
    %3128 = vmax.xlane.f32.xlu0 %v3127
    %v3129 = vpop.xlane.xlu0 %3128
    %v3130 = vsel %vm3126, %v2703, -inf
    %3131 = vmax.xlane.f32.xlu0 %v3130
    %v3132 = vpop.xlane.xlu0 %3131
    %v3133 = vsel %vm3126, %v2773, -inf
    %3134 = vmax.xlane.f32.xlu0 %v3133
    %v3135 = vpop.xlane.xlu0 %3134
    %v3136 = vsel %vm3126, %v2843, -inf
    %3137 = vmax.xlane.f32.xlu0 %v3136
    %v3138 = vpop.xlane.xlu0 %3137
    %v3139 = vsel %vm3126, %v2913, -inf
    %3140 = vmax.xlane.f32.xlu0 %v3139
    %v3141 = vpop.xlane.xlu0 %3140
    %v3142 = vsel %vm3126, %v2983, -inf
    %3143 = vmax.xlane.f32.xlu0 %v3142
    %v3144 = vpop.xlane.xlu0 %3143
    %v3145 = vsel %vm3126, %v3053, -inf
    %3146 = vmax.xlane.f32.xlu0 %v3145
    %v3147 = vpop.xlane.xlu0 %3146
    %v3148 = vsel %vm3126, %v3123, -inf
    %3149 = vmax.xlane.f32.xlu0 %v3148
    %v3150 = vpop.xlane.xlu0 %3149
    %v3151 = vsub.f32 %v2633, %v3129
    %v3152 = vsub.f32 %v2703, %v3132
    %v3153 = vsub.f32 %v2773, %v3135
    %v3154 = vsub.f32 %v2843, %v3138
    %v3155 = vsub.f32 %v2913, %v3141
    %v3156 = vsub.f32 %v2983, %v3144
    %v3157 = vsub.f32 %v3053, %v3147
    %v3158 = vsub.f32 %v3123, %v3150
    %v3159 = vmul.f32 %v3151, 1.442695
    %v3160 = vpow.pop %v3159
    %v3161 = vmul.f32 %v3152, 1.442695
    %v3162 = vpow.pop %v3161
    %v3163 = vmul.f32 %v3153, 1.442695
    %v3164 = vpow.pop %v3163
    %v3165 = vmul.f32 %v3154, 1.442695
    %v3166 = vpow.pop %v3165
    %v3167 = vmul.f32 %v3155, 1.442695
    %v3168 = vpow.pop %v3167
    %v3169 = vmul.f32 %v3156, 1.442695
    %v3170 = vpow.pop %v3169
    %v3171 = vmul.f32 %v3157, 1.442695
    %v3172 = vpow.pop %v3171
    %v3173 = vmul.f32 %v3158, 1.442695
    %v3174 = vpow.pop %v3173
    %v3175 = vsel %vm3126, %v3160, 0.0
    %3176 = vadd.xlane.f32.xlu0 %v3175
    %v3177 = vpop.xlane.xlu0 %3176
    %v3178 = vsel %vm3126, %v3162, 0.0
    %3179 = vadd.xlane.f32.xlu0 %v3178
    %v3180 = vpop.xlane.xlu0 %3179
    %v3181 = vsel %vm3126, %v3164, 0.0
    %3182 = vadd.xlane.f32.xlu0 %v3181
    %v3183 = vpop.xlane.xlu0 %3182
    %v3184 = vsel %vm3126, %v3166, 0.0
    %3185 = vadd.xlane.f32.xlu0 %v3184
    %v3186 = vpop.xlane.xlu0 %3185
    %v3187 = vsel %vm3126, %v3168, 0.0
    %3188 = vadd.xlane.f32.xlu0 %v3187
    %v3189 = vpop.xlane.xlu0 %3188
    %v3190 = vsel %vm3126, %v3170, 0.0
    %3191 = vadd.xlane.f32.xlu0 %v3190
    %v3192 = vpop.xlane.xlu0 %3191
    %v3193 = vsel %vm3126, %v3172, 0.0
    %3194 = vadd.xlane.f32.xlu0 %v3193
    %v3195 = vpop.xlane.xlu0 %3194
    %v3196 = vsel %vm3126, %v3174, 0.0
    %3197 = vadd.xlane.f32.xlu0 %v3196
    %v3198 = vpop.xlane.xlu0 %3197
    %v3199 = vrcp.pop %v3177
    %v3200 = vrcp.pop %v3180
    %v3201 = vrcp.pop %v3183
    %v3202 = vrcp.pop %v3186
    %v3203 = vrcp.pop %v3189
    %v3204 = vrcp.pop %v3192
    %v3205 = vrcp.pop %v3195
    %v3206 = vrcp.pop %v3198
    %v3207 = vmul.f32 %v3160, %v3199
    %v3208 = vmul.f32 %v3162, %v3200
    %v3209 = vmul.f32 %v3164, %v3201
    %v3210 = vmul.f32 %v3166, %v3202
    %v3211 = vmul.f32 %v3168, %v3203
    %v3212 = vmul.f32 %v3170, %v3204
    %v3213 = vmul.f32 %v3172, %v3205
    %v3214 = vmul.f32 %v3174, %v3206
    %v3216 = vsel %vm3126, %v3207, 0
    %3218 = vmatprep.subr.mxu0 0.0
    %3219 = vmatpush1.msra.mxu0 %v2455
    %3220 = vmatprep.subr.mxu0 0.0
    %3221 = vmatpush1.msra.mxu0 %v2461
    %3222 = vmatprep.subr.mxu0 0.0
    %3223 = vmatpush1.msra.mxu0 0.0
    %3224 = vmatprep.subr.mxu0 0.0
    %3225 = vmatpush1.msra.mxu0 0.0
    %3226 = vmatprep.subr.mxu0 0.0
    %3227 = vmatpush1.msra.mxu0 0.0
    %3228 = vmatprep.subr.mxu0 0.0
    %3229 = vmatpush1.msra.mxu0 0.0
    %3230 = vmatprep.subr.mxu0 0.0
    %3231 = vmatpush1.msra.mxu0 0.0
    %3232 = vmatprep.subr.mxu0 0.0
    %3233 = vmatpush1.msra.mxu0 0.0
    %3234 = vmatprep.subr.mxu0 0.0
    %3235 = vmatpush1.msra.mxu0 0.0
    %3236 = vmatprep.subr.mxu0 0.0
    %3237 = vmatpush1.msra.mxu0 0.0
    %3238 = vmatprep.subr.mxu0 0.0
    %3239 = vmatpush1.msra.mxu0 0.0
    %3240 = vmatprep.subr.mxu0 0.0
    %3241 = vmatpush1.msra.mxu0 0.0
    %3242 = vmatprep.subr.mxu0 0.0
    %3243 = vmatpush1.msra.mxu0 0.0
    %3244 = vmatprep.subr.mxu0 0.0
    %3245 = vmatpush1.msra.mxu0 0.0
    %3246 = vmatprep.subr.mxu0 0.0
    %3247 = vmatpush1.msra.mxu0 0.0
    %3248 = vmatprep.subr.mxu0 0.0
    %3249 = vmatpush1.msra.mxu0 0.0
    %3250 = vmatprep.subr.mxu0 0.0
    %3251 = vmatpush1.msra.mxu0 0.0
    %3252 = vmatprep.subr.mxu0 0.0
    %3253 = vmatpush1.msra.mxu0 0.0
    %3254 = vmatprep.subr.mxu0 0.0
    %3255 = vmatpush1.msra.mxu0 0.0
    %3256 = vmatprep.subr.mxu0 0.0
    %3257 = vmatpush1.msra.mxu0 0.0
    %3258 = vmatprep.subr.mxu0 0.0
    %3259 = vmatpush1.msra.mxu0 0.0
    %3260 = vmatprep.subr.mxu0 0.0
    %3261 = vmatpush1.msra.mxu0 0.0
    %3262 = vmatprep.subr.mxu0 0.0
    %3263 = vmatpush1.msra.mxu0 0.0
    %3264 = vmatprep.subr.mxu0 0.0
    %3265 = vmatpush1.msra.mxu0 0.0
    %3266 = vmatprep.subr.mxu0 0.0
    %3267 = vmatpush1.msra.mxu0 0.0
    %3268 = vmatprep.subr.mxu0 0.0
    %3269 = vmatpush1.msra.mxu0 0.0
    %3270 = vmatprep.subr.mxu0 0.0
    %3271 = vmatpush1.msra.mxu0 0.0
    %3272 = vmatprep.subr.mxu0 0.0
    %3273 = vmatpush1.msra.mxu0 0.0
    %3274 = vmatprep.subr.mxu0 0.0
    %3275 = vmatpush1.msra.mxu0 0.0
    %3276 = vmatprep.subr.mxu0 0.0
    %3277 = vmatpush1.msra.mxu0 0.0
    %3278 = vmatprep.subr.mxu0 0.0
    %3279 = vmatpush1.msra.mxu0 0.0
    %3280 = vmatprep.subr.mxu0 0.0
    %3281 = vmatpush1.msra.mxu0 0.0
    %3282 = vmatprep.mubr.f32.mxu0 0.0
    %3283 = vmatmul.mubr.f32.gmra.mrb[0].mxu0 %v3216
    %v3284 = vpop.f32.mrb[0].mxu0
    %v3285 = vadd.f32 0.0, %v3284
    %v3286 = vpop.f32.mrb[0].mxu0
    %3287 = vdwg.mxu0
    %v3289 = vsel %vm3126, %v3208, 0
    %3291 = vmatprep.subr.mxu0 0.0
    %3292 = vmatpush1.msra.mxu0 %v2457
    %3293 = vmatprep.subr.mxu0 0.0
    %3294 = vmatpush1.msra.mxu0 %v2463
    %3295 = vmatprep.subr.mxu0 0.0
    %3296 = vmatpush1.msra.mxu0 0.0
    %3297 = vmatprep.subr.mxu0 0.0
    %3298 = vmatpush1.msra.mxu0 0.0
    %3299 = vmatprep.subr.mxu0 0.0
    %3300 = vmatpush1.msra.mxu0 0.0
    %3301 = vmatprep.subr.mxu0 0.0
    %3302 = vmatpush1.msra.mxu0 0.0
    %3303 = vmatprep.subr.mxu0 0.0
    %3304 = vmatpush1.msra.mxu0 0.0
    %3305 = vmatprep.subr.mxu0 0.0
    %3306 = vmatpush1.msra.mxu0 0.0
    %3307 = vmatprep.subr.mxu0 0.0
    %3308 = vmatpush1.msra.mxu0 0.0
    %3309 = vmatprep.subr.mxu0 0.0
    %3310 = vmatpush1.msra.mxu0 0.0
    %3311 = vmatprep.subr.mxu0 0.0
    %3312 = vmatpush1.msra.mxu0 0.0
    %3313 = vmatprep.subr.mxu0 0.0
    %3314 = vmatpush1.msra.mxu0 0.0
    %3315 = vmatprep.subr.mxu0 0.0
    %3316 = vmatpush1.msra.mxu0 0.0
    %3317 = vmatprep.subr.mxu0 0.0
    %3318 = vmatpush1.msra.mxu0 0.0
    %3319 = vmatprep.subr.mxu0 0.0
    %3320 = vmatpush1.msra.mxu0 0.0
    %3321 = vmatprep.subr.mxu0 0.0
    %3322 = vmatpush1.msra.mxu0 0.0
    %3323 = vmatprep.subr.mxu0 0.0
    %3324 = vmatpush1.msra.mxu0 0.0
    %3325 = vmatprep.subr.mxu0 0.0
    %3326 = vmatpush1.msra.mxu0 0.0
    %3327 = vmatprep.subr.mxu0 0.0
    %3328 = vmatpush1.msra.mxu0 0.0
    %3329 = vmatprep.subr.mxu0 0.0
    %3330 = vmatpush1.msra.mxu0 0.0
    %3331 = vmatprep.subr.mxu0 0.0
    %3332 = vmatpush1.msra.mxu0 0.0
    %3333 = vmatprep.subr.mxu0 0.0
    %3334 = vmatpush1.msra.mxu0 0.0
    %3335 = vmatprep.subr.mxu0 0.0
    %3336 = vmatpush1.msra.mxu0 0.0
    %3337 = vmatprep.subr.mxu0 0.0
    %3338 = vmatpush1.msra.mxu0 0.0
    %3339 = vmatprep.subr.mxu0 0.0
    %3340 = vmatpush1.msra.mxu0 0.0
    %3341 = vmatprep.subr.mxu0 0.0
    %3342 = vmatpush1.msra.mxu0 0.0
    %3343 = vmatprep.subr.mxu0 0.0
    %3344 = vmatpush1.msra.mxu0 0.0
    %3345 = vmatprep.subr.mxu0 0.0
    %3346 = vmatpush1.msra.mxu0 0.0
    %3347 = vmatprep.subr.mxu0 0.0
    %3348 = vmatpush1.msra.mxu0 0.0
    %3349 = vmatprep.subr.mxu0 0.0
    %3350 = vmatpush1.msra.mxu0 0.0
    %3351 = vmatprep.subr.mxu0 0.0
    %3352 = vmatpush1.msra.mxu0 0.0
    %3353 = vmatprep.subr.mxu0 0.0
    %3354 = vmatpush1.msra.mxu0 0.0
    %3355 = vmatprep.mubr.f32.mxu0 0.0
    %3356 = vmatmul.mubr.f32.gmra.mrb[0].mxu0 %v3289
    %v3357 = vpop.f32.mrb[0].mxu0
    %v3358 = vadd.f32 0.0, %v3357
    %v3359 = vpop.f32.mrb[0].mxu0
    %3360 = vdwg.mxu0
    %v3362 = vsel %vm3126, %v3209, 0
    %3364 = vmatprep.subr.mxu0 0.0
    %3365 = vmatpush1.msra.mxu0 %v2544
    %3366 = vmatprep.subr.mxu0 0.0
    %3367 = vmatpush1.msra.mxu0 %v2550
    %3368 = vmatprep.subr.mxu0 0.0
    %3369 = vmatpush1.msra.mxu0 0.0
    %3370 = vmatprep.subr.mxu0 0.0
    %3371 = vmatpush1.msra.mxu0 0.0
    %3372 = vmatprep.subr.mxu0 0.0
    %3373 = vmatpush1.msra.mxu0 0.0
    %3374 = vmatprep.subr.mxu0 0.0
    %3375 = vmatpush1.msra.mxu0 0.0
    %3376 = vmatprep.subr.mxu0 0.0
    %3377 = vmatpush1.msra.mxu0 0.0
    %3378 = vmatprep.subr.mxu0 0.0
    %3379 = vmatpush1.msra.mxu0 0.0
    %3380 = vmatprep.subr.mxu0 0.0
    %3381 = vmatpush1.msra.mxu0 0.0
    %3382 = vmatprep.subr.mxu0 0.0
    %3383 = vmatpush1.msra.mxu0 0.0
    %3384 = vmatprep.subr.mxu0 0.0
    %3385 = vmatpush1.msra.mxu0 0.0
    %3386 = vmatprep.subr.mxu0 0.0
    %3387 = vmatpush1.msra.mxu0 0.0
    %3388 = vmatprep.subr.mxu0 0.0
    %3389 = vmatpush1.msra.mxu0 0.0
    %3390 = vmatprep.subr.mxu0 0.0
    %3391 = vmatpush1.msra.mxu0 0.0
    %3392 = vmatprep.subr.mxu0 0.0
    %3393 = vmatpush1.msra.mxu0 0.0
    %3394 = vmatprep.subr.mxu0 0.0
    %3395 = vmatpush1.msra.mxu0 0.0
    %3396 = vmatprep.subr.mxu0 0.0
    %3397 = vmatpush1.msra.mxu0 0.0
    %3398 = vmatprep.subr.mxu0 0.0
    %3399 = vmatpush1.msra.mxu0 0.0
    %3400 = vmatprep.subr.mxu0 0.0
    %3401 = vmatpush1.msra.mxu0 0.0
    %3402 = vmatprep.subr.mxu0 0.0
    %3403 = vmatpush1.msra.mxu0 0.0
    %3404 = vmatprep.subr.mxu0 0.0
    %3405 = vmatpush1.msra.mxu0 0.0
    %3406 = vmatprep.subr.mxu0 0.0
    %3407 = vmatpush1.msra.mxu0 0.0
    %3408 = vmatprep.subr.mxu0 0.0
    %3409 = vmatpush1.msra.mxu0 0.0
    %3410 = vmatprep.subr.mxu0 0.0
    %3411 = vmatpush1.msra.mxu0 0.0
    %3412 = vmatprep.subr.mxu0 0.0
    %3413 = vmatpush1.msra.mxu0 0.0
    %3414 = vmatprep.subr.mxu0 0.0
    %3415 = vmatpush1.msra.mxu0 0.0
    %3416 = vmatprep.subr.mxu0 0.0
    %3417 = vmatpush1.msra.mxu0 0.0
    %3418 = vmatprep.subr.mxu0 0.0
    %3419 = vmatpush1.msra.mxu0 0.0
    %3420 = vmatprep.subr.mxu0 0.0
    %3421 = vmatpush1.msra.mxu0 0.0
    %3422 = vmatprep.subr.mxu0 0.0
    %3423 = vmatpush1.msra.mxu0 0.0
    %3424 = vmatprep.subr.mxu0 0.0
    %3425 = vmatpush1.msra.mxu0 0.0
    %3426 = vmatprep.subr.mxu0 0.0
    %3427 = vmatpush1.msra.mxu0 0.0
    %3428 = vmatprep.mubr.f32.mxu0 0.0
    %3429 = vmatmul.mubr.f32.gmra.mrb[0].mxu0 %v3362
    %v3430 = vpop.f32.mrb[0].mxu0
    %v3431 = vadd.f32 0.0, %v3430
    %v3432 = vpop.f32.mrb[0].mxu0
    %3433 = vdwg.mxu0
    %v3435 = vsel %vm3126, %v3210, 0
    %3437 = vmatprep.subr.mxu0 0.0
    %3438 = vmatpush1.msra.mxu0 %v2546
    %3439 = vmatprep.subr.mxu0 0.0
    %3440 = vmatpush1.msra.mxu0 %v2552
    %3441 = vmatprep.subr.mxu0 0.0
    %3442 = vmatpush1.msra.mxu0 0.0
    %3443 = vmatprep.subr.mxu0 0.0
    %3444 = vmatpush1.msra.mxu0 0.0
    %3445 = vmatprep.subr.mxu0 0.0
    %3446 = vmatpush1.msra.mxu0 0.0
    %3447 = vmatprep.subr.mxu0 0.0
    %3448 = vmatpush1.msra.mxu0 0.0
    %3449 = vmatprep.subr.mxu0 0.0
    %3450 = vmatpush1.msra.mxu0 0.0
    %3451 = vmatprep.subr.mxu0 0.0
    %3452 = vmatpush1.msra.mxu0 0.0
    %3453 = vmatprep.subr.mxu0 0.0
    %3454 = vmatpush1.msra.mxu0 0.0
    %3455 = vmatprep.subr.mxu0 0.0
    %3456 = vmatpush1.msra.mxu0 0.0
    %3457 = vmatprep.subr.mxu0 0.0
    %3458 = vmatpush1.msra.mxu0 0.0
    %3459 = vmatprep.subr.mxu0 0.0
    %3460 = vmatpush1.msra.mxu0 0.0
    %3461 = vmatprep.subr.mxu0 0.0
    %3462 = vmatpush1.msra.mxu0 0.0
    %3463 = vmatprep.subr.mxu0 0.0
    %3464 = vmatpush1.msra.mxu0 0.0
    %3465 = vmatprep.subr.mxu0 0.0
    %3466 = vmatpush1.msra.mxu0 0.0
    %3467 = vmatprep.subr.mxu0 0.0
    %3468 = vmatpush1.msra.mxu0 0.0
    %3469 = vmatprep.subr.mxu0 0.0
    %3470 = vmatpush1.msra.mxu0 0.0
    %3471 = vmatprep.subr.mxu0 0.0
    %3472 = vmatpush1.msra.mxu0 0.0
    %3473 = vmatprep.subr.mxu0 0.0
    %3474 = vmatpush1.msra.mxu0 0.0
    %3475 = vmatprep.subr.mxu0 0.0
    %3476 = vmatpush1.msra.mxu0 0.0
    %3477 = vmatprep.subr.mxu0 0.0
    %3478 = vmatpush1.msra.mxu0 0.0
    %3479 = vmatprep.subr.mxu0 0.0
    %3480 = vmatpush1.msra.mxu0 0.0
    %3481 = vmatprep.subr.mxu0 0.0
    %3482 = vmatpush1.msra.mxu0 0.0
    %3483 = vmatprep.subr.mxu0 0.0
    %3484 = vmatpush1.msra.mxu0 0.0
    %3485 = vmatprep.subr.mxu0 0.0
    %3486 = vmatpush1.msra.mxu0 0.0
    %3487 = vmatprep.subr.mxu0 0.0
    %3488 = vmatpush1.msra.mxu0 0.0
    %3489 = vmatprep.subr.mxu0 0.0
    %3490 = vmatpush1.msra.mxu0 0.0
    %3491 = vmatprep.subr.mxu0 0.0
    %3492 = vmatpush1.msra.mxu0 0.0
    %3493 = vmatprep.subr.mxu0 0.0
    %3494 = vmatpush1.msra.mxu0 0.0
    %3495 = vmatprep.subr.mxu0 0.0
    %3496 = vmatpush1.msra.mxu0 0.0
    %3497 = vmatprep.subr.mxu0 0.0
    %3498 = vmatpush1.msra.mxu0 0.0
    %3499 = vmatprep.subr.mxu0 0.0
    %3500 = vmatpush1.msra.mxu0 0.0
    %3501 = vmatprep.mubr.f32.mxu0 0.0
    %3502 = vmatmul.mubr.f32.gmra.mrb[0].mxu0 %v3435
    %v3503 = vpop.f32.mrb[0].mxu0
    %v3504 = vadd.f32 0.0, %v3503
    %v3505 = vpop.f32.mrb[0].mxu0
    %3506 = vdwg.mxu0
    %v3508 = vsel %vm3126, %v3211, 0
    %3510 = vmatprep.subr.mxu0 0.0
    %3511 = vmatpush1.msra.mxu0 %v2467
    %3512 = vmatprep.subr.mxu0 0.0
    %3513 = vmatpush1.msra.mxu0 %v2473
    %3514 = vmatprep.subr.mxu0 0.0
    %3515 = vmatpush1.msra.mxu0 0.0
    %3516 = vmatprep.subr.mxu0 0.0
    %3517 = vmatpush1.msra.mxu0 0.0
    %3518 = vmatprep.subr.mxu0 0.0
    %3519 = vmatpush1.msra.mxu0 0.0
    %3520 = vmatprep.subr.mxu0 0.0
    %3521 = vmatpush1.msra.mxu0 0.0
    %3522 = vmatprep.subr.mxu0 0.0
    %3523 = vmatpush1.msra.mxu0 0.0
    %3524 = vmatprep.subr.mxu0 0.0
    %3525 = vmatpush1.msra.mxu0 0.0
    %3526 = vmatprep.subr.mxu0 0.0
    %3527 = vmatpush1.msra.mxu0 0.0
    %3528 = vmatprep.subr.mxu0 0.0
    %3529 = vmatpush1.msra.mxu0 0.0
    %3530 = vmatprep.subr.mxu0 0.0
    %3531 = vmatpush1.msra.mxu0 0.0
    %3532 = vmatprep.subr.mxu0 0.0
    %3533 = vmatpush1.msra.mxu0 0.0
    %3534 = vmatprep.subr.mxu0 0.0
    %3535 = vmatpush1.msra.mxu0 0.0
    %3536 = vmatprep.subr.mxu0 0.0
    %3537 = vmatpush1.msra.mxu0 0.0
    %3538 = vmatprep.subr.mxu0 0.0
    %3539 = vmatpush1.msra.mxu0 0.0
    %3540 = vmatprep.subr.mxu0 0.0
    %3541 = vmatpush1.msra.mxu0 0.0
    %3542 = vmatprep.subr.mxu0 0.0
    %3543 = vmatpush1.msra.mxu0 0.0
    %3544 = vmatprep.subr.mxu0 0.0
    %3545 = vmatpush1.msra.mxu0 0.0
    %3546 = vmatprep.subr.mxu0 0.0
    %3547 = vmatpush1.msra.mxu0 0.0
    %3548 = vmatprep.subr.mxu0 0.0
    %3549 = vmatpush1.msra.mxu0 0.0
    %3550 = vmatprep.subr.mxu0 0.0
    %3551 = vmatpush1.msra.mxu0 0.0
    %3552 = vmatprep.subr.mxu0 0.0
    %3553 = vmatpush1.msra.mxu0 0.0
    %3554 = vmatprep.subr.mxu0 0.0
    %3555 = vmatpush1.msra.mxu0 0.0
    %3556 = vmatprep.subr.mxu0 0.0
    %3557 = vmatpush1.msra.mxu0 0.0
    %3558 = vmatprep.subr.mxu0 0.0
    %3559 = vmatpush1.msra.mxu0 0.0
    %3560 = vmatprep.subr.mxu0 0.0
    %3561 = vmatpush1.msra.mxu0 0.0
    %3562 = vmatprep.subr.mxu0 0.0
    %3563 = vmatpush1.msra.mxu0 0.0
    %3564 = vmatprep.subr.mxu0 0.0
    %3565 = vmatpush1.msra.mxu0 0.0
    %3566 = vmatprep.subr.mxu0 0.0
    %3567 = vmatpush1.msra.mxu0 0.0
    %3568 = vmatprep.subr.mxu0 0.0
    %3569 = vmatpush1.msra.mxu0 0.0
    %3570 = vmatprep.subr.mxu0 0.0
    %3571 = vmatpush1.msra.mxu0 0.0
    %3572 = vmatprep.subr.mxu0 0.0
    %3573 = vmatpush1.msra.mxu0 0.0
    %3574 = vmatprep.mubr.f32.mxu0 0.0
    %3575 = vmatmul.mubr.f32.gmra.mrb[0].mxu0 %v3508
    %v3576 = vpop.f32.mrb[0].mxu0
    %v3577 = vadd.f32 0.0, %v3576
    %v3578 = vpop.f32.mrb[0].mxu0
    %3579 = vdwg.mxu0
    %v3581 = vsel %vm3126, %v3212, 0
    %3583 = vmatprep.subr.mxu0 0.0
    %3584 = vmatpush1.msra.mxu0 %v2469
    %3585 = vmatprep.subr.mxu0 0.0
    %3586 = vmatpush1.msra.mxu0 %v2475
    %3587 = vmatprep.subr.mxu0 0.0
    %3588 = vmatpush1.msra.mxu0 0.0
    %3589 = vmatprep.subr.mxu0 0.0
    %3590 = vmatpush1.msra.mxu0 0.0
    %3591 = vmatprep.subr.mxu0 0.0
    %3592 = vmatpush1.msra.mxu0 0.0
    %3593 = vmatprep.subr.mxu0 0.0
    %3594 = vmatpush1.msra.mxu0 0.0
    %3595 = vmatprep.subr.mxu0 0.0
    %3596 = vmatpush1.msra.mxu0 0.0
    %3597 = vmatprep.subr.mxu0 0.0
    %3598 = vmatpush1.msra.mxu0 0.0
    %3599 = vmatprep.subr.mxu0 0.0
    %3600 = vmatpush1.msra.mxu0 0.0
    %3601 = vmatprep.subr.mxu0 0.0
    %3602 = vmatpush1.msra.mxu0 0.0
    %3603 = vmatprep.subr.mxu0 0.0
    %3604 = vmatpush1.msra.mxu0 0.0
    %3605 = vmatprep.subr.mxu0 0.0
    %3606 = vmatpush1.msra.mxu0 0.0
    %3607 = vmatprep.subr.mxu0 0.0
    %3608 = vmatpush1.msra.mxu0 0.0
    %3609 = vmatprep.subr.mxu0 0.0
    %3610 = vmatpush1.msra.mxu0 0.0
    %3611 = vmatprep.subr.mxu0 0.0
    %3612 = vmatpush1.msra.mxu0 0.0
    %3613 = vmatprep.subr.mxu0 0.0
    %3614 = vmatpush1.msra.mxu0 0.0
    %3615 = vmatprep.subr.mxu0 0.0
    %3616 = vmatpush1.msra.mxu0 0.0
    %3617 = vmatprep.subr.mxu0 0.0
    %3618 = vmatpush1.msra.mxu0 0.0
    %3619 = vmatprep.subr.mxu0 0.0
    %3620 = vmatpush1.msra.mxu0 0.0
    %3621 = vmatprep.subr.mxu0 0.0
    %3622 = vmatpush1.msra.mxu0 0.0
    %3623 = vmatprep.subr.mxu0 0.0
    %3624 = vmatpush1.msra.mxu0 0.0
    %3625 = vmatprep.subr.mxu0 0.0
    %3626 = vmatpush1.msra.mxu0 0.0
    %3627 = vmatprep.subr.mxu0 0.0
    %3628 = vmatpush1.msra.mxu0 0.0
    %3629 = vmatprep.subr.mxu0 0.0
    %3630 = vmatpush1.msra.mxu0 0.0
    %3631 = vmatprep.subr.mxu0 0.0
    %3632 = vmatpush1.msra.mxu0 0.0
    %3633 = vmatprep.subr.mxu0 0.0
    %3634 = vmatpush1.msra.mxu0 0.0
    %3635 = vmatprep.subr.mxu0 0.0
    %3636 = vmatpush1.msra.mxu0 0.0
    %3637 = vmatprep.subr.mxu0 0.0
    %3638 = vmatpush1.msra.mxu0 0.0
    %3639 = vmatprep.subr.mxu0 0.0
    %3640 = vmatpush1.msra.mxu0 0.0
    %3641 = vmatprep.subr.mxu0 0.0
    %3642 = vmatpush1.msra.mxu0 0.0
    %3643 = vmatprep.subr.mxu0 0.0
    %3644 = vmatpush1.msra.mxu0 0.0
    %3645 = vmatprep.subr.mxu0 0.0
    %3646 = vmatpush1.msra.mxu0 0.0
    %3647 = vmatprep.mubr.f32.mxu0 0.0
    %3648 = vmatmul.mubr.f32.gmra.mrb[0].mxu0 %v3581
    %v3649 = vpop.f32.mrb[0].mxu0
    %v3650 = vadd.f32 0.0, %v3649
    %v3651 = vpop.f32.mrb[0].mxu0
    %3652 = vdwg.mxu0
    %v3654 = vsel %vm3126, %v3213, 0
    %3656 = vmatprep.subr.mxu0 0.0
    %3657 = vmatpush1.msra.mxu0 %v2556
    %3658 = vmatprep.subr.mxu0 0.0
    %3659 = vmatpush1.msra.mxu0 %v2562
    %3660 = vmatprep.subr.mxu0 0.0
    %3661 = vmatpush1.msra.mxu0 0.0
    %3662 = vmatprep.subr.mxu0 0.0
    %3663 = vmatpush1.msra.mxu0 0.0
    %3664 = vmatprep.subr.mxu0 0.0
    %3665 = vmatpush1.msra.mxu0 0.0
    %3666 = vmatprep.subr.mxu0 0.0
    %3667 = vmatpush1.msra.mxu0 0.0
    %3668 = vmatprep.subr.mxu0 0.0
    %3669 = vmatpush1.msra.mxu0 0.0
    %3670 = vmatprep.subr.mxu0 0.0
    %3671 = vmatpush1.msra.mxu0 0.0
    %3672 = vmatprep.subr.mxu0 0.0
    %3673 = vmatpush1.msra.mxu0 0.0
    %3674 = vmatprep.subr.mxu0 0.0
    %3675 = vmatpush1.msra.mxu0 0.0
    %3676 = vmatprep.subr.mxu0 0.0
    %3677 = vmatpush1.msra.mxu0 0.0
    %3678 = vmatprep.subr.mxu0 0.0
    %3679 = vmatpush1.msra.mxu0 0.0
    %3680 = vmatprep.subr.mxu0 0.0
    %3681 = vmatpush1.msra.mxu0 0.0
    %3682 = vmatprep.subr.mxu0 0.0
    %3683 = vmatpush1.msra.mxu0 0.0
    %3684 = vmatprep.subr.mxu0 0.0
    %3685 = vmatpush1.msra.mxu0 0.0
    %3686 = vmatprep.subr.mxu0 0.0
    %3687 = vmatpush1.msra.mxu0 0.0
    %3688 = vmatprep.subr.mxu0 0.0
    %3689 = vmatpush1.msra.mxu0 0.0
    %3690 = vmatprep.subr.mxu0 0.0
    %3691 = vmatpush1.msra.mxu0 0.0
    %3692 = vmatprep.subr.mxu0 0.0
    %3693 = vmatpush1.msra.mxu0 0.0
    %3694 = vmatprep.subr.mxu0 0.0
    %3695 = vmatpush1.msra.mxu0 0.0
    %3696 = vmatprep.subr.mxu0 0.0
    %3697 = vmatpush1.msra.mxu0 0.0
    %3698 = vmatprep.subr.mxu0 0.0
    %3699 = vmatpush1.msra.mxu0 0.0
    %3700 = vmatprep.subr.mxu0 0.0
    %3701 = vmatpush1.msra.mxu0 0.0
    %3702 = vmatprep.subr.mxu0 0.0
    %3703 = vmatpush1.msra.mxu0 0.0
    %3704 = vmatprep.subr.mxu0 0.0
    %3705 = vmatpush1.msra.mxu0 0.0
    %3706 = vmatprep.subr.mxu0 0.0
    %3707 = vmatpush1.msra.mxu0 0.0
    %3708 = vmatprep.subr.mxu0 0.0
    %3709 = vmatpush1.msra.mxu0 0.0
    %3710 = vmatprep.subr.mxu0 0.0
    %3711 = vmatpush1.msra.mxu0 0.0
    %3712 = vmatprep.subr.mxu0 0.0
    %3713 = vmatpush1.msra.mxu0 0.0
    %3714 = vmatprep.subr.mxu0 0.0
    %3715 = vmatpush1.msra.mxu0 0.0
    %3716 = vmatprep.subr.mxu0 0.0
    %3717 = vmatpush1.msra.mxu0 0.0
    %3718 = vmatprep.subr.mxu0 0.0
    %3719 = vmatpush1.msra.mxu0 0.0
    %3720 = vmatprep.mubr.f32.mxu0 0.0
    %3721 = vmatmul.mubr.f32.gmra.mrb[0].mxu0 %v3654
    %v3722 = vpop.f32.mrb[0].mxu0
    %v3723 = vadd.f32 0.0, %v3722
    %v3724 = vpop.f32.mrb[0].mxu0
    %3725 = vdwg.mxu0
    %v3727 = vsel %vm3126, %v3214, 0
    %3729 = vmatprep.subr.mxu0 0.0
    %3730 = vmatpush1.msra.mxu0 %v2558
    %3731 = vmatprep.subr.mxu0 0.0
    %3732 = vmatpush1.msra.mxu0 %v2564
    %3733 = vmatprep.subr.mxu0 0.0
    %3734 = vmatpush1.msra.mxu0 0.0
    %3735 = vmatprep.subr.mxu0 0.0
    %3736 = vmatpush1.msra.mxu0 0.0
    %3737 = vmatprep.subr.mxu0 0.0
    %3738 = vmatpush1.msra.mxu0 0.0
    %3739 = vmatprep.subr.mxu0 0.0
    %3740 = vmatpush1.msra.mxu0 0.0
    %3741 = vmatprep.subr.mxu0 0.0
    %3742 = vmatpush1.msra.mxu0 0.0
    %3743 = vmatprep.subr.mxu0 0.0
    %3744 = vmatpush1.msra.mxu0 0.0
    %3745 = vmatprep.subr.mxu0 0.0
    %3746 = vmatpush1.msra.mxu0 0.0
    %3747 = vmatprep.subr.mxu0 0.0
    %3748 = vmatpush1.msra.mxu0 0.0
    %3749 = vmatprep.subr.mxu0 0.0
    %3750 = vmatpush1.msra.mxu0 0.0
    %3751 = vmatprep.subr.mxu0 0.0
    %3752 = vmatpush1.msra.mxu0 0.0
    %3753 = vmatprep.subr.mxu0 0.0
    %3754 = vmatpush1.msra.mxu0 0.0
    %3755 = vmatprep.subr.mxu0 0.0
    %3756 = vmatpush1.msra.mxu0 0.0
    %3757 = vmatprep.subr.mxu0 0.0
    %3758 = vmatpush1.msra.mxu0 0.0
    %3759 = vmatprep.subr.mxu0 0.0
    %3760 = vmatpush1.msra.mxu0 0.0
    %3761 = vmatprep.subr.mxu0 0.0
    %3762 = vmatpush1.msra.mxu0 0.0
    %3763 = vmatprep.subr.mxu0 0.0
    %3764 = vmatpush1.msra.mxu0 0.0
    %3765 = vmatprep.subr.mxu0 0.0
    %3766 = vmatpush1.msra.mxu0 0.0
    %3767 = vmatprep.subr.mxu0 0.0
    %3768 = vmatpush1.msra.mxu0 0.0
    %3769 = vmatprep.subr.mxu0 0.0
    %3770 = vmatpush1.msra.mxu0 0.0
    %3771 = vmatprep.subr.mxu0 0.0
    %3772 = vmatpush1.msra.mxu0 0.0
    %3773 = vmatprep.subr.mxu0 0.0
    %3774 = vmatpush1.msra.mxu0 0.0
    %3775 = vmatprep.subr.mxu0 0.0
    %3776 = vmatpush1.msra.mxu0 0.0
    %3777 = vmatprep.subr.mxu0 0.0
    %3778 = vmatpush1.msra.mxu0 0.0
    %3779 = vmatprep.subr.mxu0 0.0
    %3780 = vmatpush1.msra.mxu0 0.0
    %3781 = vmatprep.subr.mxu0 0.0
    %3782 = vmatpush1.msra.mxu0 0.0
    %3783 = vmatprep.subr.mxu0 0.0
    %3784 = vmatpush1.msra.mxu0 0.0
    %3785 = vmatprep.subr.mxu0 0.0
    %3786 = vmatpush1.msra.mxu0 0.0
    %3787 = vmatprep.subr.mxu0 0.0
    %3788 = vmatpush1.msra.mxu0 0.0
    %3789 = vmatprep.subr.mxu0 0.0
    %3790 = vmatpush1.msra.mxu0 0.0
    %3791 = vmatprep.subr.mxu0 0.0
    %3792 = vmatpush1.msra.mxu0 0.0
    %3793 = vmatprep.mubr.f32.mxu0 0.0
    %3794 = vmatmul.mubr.f32.gmra.mrb[0].mxu0 %v3727
    %v3795 = vpop.f32.mrb[0].mxu0
    %v3796 = vadd.f32 0.0, %v3795
    %v3797 = vpop.f32.mrb[0].mxu0
    %3798 = vdwg.mxu0
    %v3799 = vld [vmem:[%s10] sm:$0xff]
    %v3800 = vld [vmem:[%s10 + $0x8] sm:$0xff]
    %v3801 = vld [vmem:[%s10 + $0x10] sm:$0xff]
    %v3802 = vld [vmem:[%s10 + $0x18] sm:$0xff]
    %v3803 = vld [vmem:[%s10 + $0x20] sm:$0xff]
    %v3804 = vld [vmem:[%s10 + $0x28] sm:$0xff]
    %v3805 = vld [vmem:[%s10 + $0x30] sm:$0xff]
    %v3806 = vld [vmem:[%s10 + $0x38] sm:$0xff]
    %v3807 = vld [vmem:[%s10 + $0x40] sm:$0xff]
    %v3808 = vld [vmem:[%s10 + $0x48] sm:$0xff]
    %v3809 = vld [vmem:[%s10 + $0x50] sm:$0xff]
    %v3810 = vld [vmem:[%s10 + $0x58] sm:$0xff]
    %v3811 = vld [vmem:[%s10 + $0x60] sm:$0xff]
    %v3812 = vld [vmem:[%s10 + $0x68] sm:$0xff]
    %v3813 = vld [vmem:[%s10 + $0x70] sm:$0xff]
    %v3814 = vld [vmem:[%s10 + $0x78] sm:$0xff]
    %v3815 = vld [vmem:[%s10 + $0x80] sm:$0xff]
    %v3816 = vld [vmem:[%s10 + $0x88] sm:$0xff]
    %v3817 = vld [vmem:[%s10 + $0x90] sm:$0xff]
    %v3818 = vld [vmem:[%s10 + $0x98] sm:$0xff]
    %v3819 = vld [vmem:[%s10 + $0xa0] sm:$0xff]
    %v3820 = vld [vmem:[%s10 + $0xa8] sm:$0xff]
    %v3821 = vld [vmem:[%s10 + $0xb0] sm:$0xff]
    %v3822 = vld [vmem:[%s10 + $0xb8] sm:$0xff]
    %v3823 = vld [vmem:[%s10 + $0xc0] sm:$0xff]
    %v3824 = vld [vmem:[%s10 + $0xc8] sm:$0xff]
    %v3825 = vld [vmem:[%s10 + $0xd0] sm:$0xff]
    %v3826 = vld [vmem:[%s10 + $0xd8] sm:$0xff]
    %v3827 = vld [vmem:[%s10 + $0xe0] sm:$0xff]
    %v3828 = vld [vmem:[%s10 + $0xe8] sm:$0xff]
    %v3829 = vld [vmem:[%s10 + $0xf0] sm:$0xff]
    %v3830 = vld [vmem:[%s10 + $0xf8] sm:$0xff]
    %v3831 = vld [vmem:[%s10 + $0x100] sm:$0xff]
    %v3832 = vld [vmem:[%s10 + $0x108] sm:$0xff]
    %v3833 = vld [vmem:[%s10 + $0x110] sm:$0xff]
    %v3834 = vld [vmem:[%s10 + $0x118] sm:$0xff]
    %v3835 = vld [vmem:[%s10 + $0x120] sm:$0xff]
    %v3836 = vld [vmem:[%s10 + $0x128] sm:$0xff]
    %v3837 = vld [vmem:[%s10 + $0x130] sm:$0xff]
    %v3838 = vld [vmem:[%s10 + $0x138] sm:$0xff]
    %v3839 = vld [vmem:[%s10 + $0x140] sm:$0xff]
    %v3840 = vld [vmem:[%s10 + $0x148] sm:$0xff]
    %v3841 = vld [vmem:[%s10 + $0x150] sm:$0xff]
    %v3842 = vld [vmem:[%s10 + $0x158] sm:$0xff]
    %v3843 = vld [vmem:[%s10 + $0x160] sm:$0xff]
    %v3844 = vld [vmem:[%s10 + $0x168] sm:$0xff]
    %v3845 = vld [vmem:[%s10 + $0x170] sm:$0xff]
    %v3846 = vld [vmem:[%s10 + $0x178] sm:$0xff]
    %v3847 = vld [vmem:[%s10 + $0x180] sm:$0xff]
    %v3848 = vld [vmem:[%s10 + $0x188] sm:$0xff]
    %v3849 = vld [vmem:[%s10 + $0x190] sm:$0xff]
    %v3850 = vld [vmem:[%s10 + $0x198] sm:$0xff]
    %v3851 = vld [vmem:[%s10 + $0x1a0] sm:$0xff]
    %v3852 = vld [vmem:[%s10 + $0x1a8] sm:$0xff]
    %v3853 = vld [vmem:[%s10 + $0x1b0] sm:$0xff]
    %v3854 = vld [vmem:[%s10 + $0x1b8] sm:$0xff]
    %v3855 = vld [vmem:[%s10 + $0x1c0] sm:$0xff]
    %v3856 = vld [vmem:[%s10 + $0x1c8] sm:$0xff]
    %v3857 = vld [vmem:[%s10 + $0x1d0] sm:$0xff]
    %v3858 = vld [vmem:[%s10 + $0x1d8] sm:$0xff]
    %v3859 = vld [vmem:[%s10 + $0x1e0] sm:$0xff]
    %v3860 = vld [vmem:[%s10 + $0x1e8] sm:$0xff]
    %v3861 = vld [vmem:[%s10 + $0x1f0] sm:$0xff]
    %v3862 = vld [vmem:[%s10 + $0x1f8] sm:$0xff]
    %3863 = vmatprep.subr.mxu0 0.0
    %3864 = vmatpush1.msra.mxu0 %v3799
    %3865 = vmatprep.subr.mxu0 0.0
    %3866 = vmatpush1.msra.mxu0 %v3800
    %3867 = vmatprep.subr.mxu0 0.0
    %3868 = vmatpush1.msra.mxu0 %v3801
    %3869 = vmatprep.subr.mxu0 0.0
    %3870 = vmatpush1.msra.mxu0 %v3802
    %3871 = vmatprep.subr.mxu0 0.0
    %3872 = vmatpush1.msra.mxu0 %v3803
    %3873 = vmatprep.subr.mxu0 0.0
    %3874 = vmatpush1.msra.mxu0 %v3804
    %3875 = vmatprep.subr.mxu0 0.0
    %3876 = vmatpush1.msra.mxu0 %v3805
    %3877 = vmatprep.subr.mxu0 0.0
    %3878 = vmatpush1.msra.mxu0 %v3806
    %3879 = vmatprep.subr.mxu0 0.0
    %3880 = vmatpush1.msra.mxu0 %v3807
    %3881 = vmatprep.subr.mxu0 0.0
    %3882 = vmatpush1.msra.mxu0 %v3808
    %3883 = vmatprep.subr.mxu0 0.0
    %3884 = vmatpush1.msra.mxu0 %v3809
    %3885 = vmatprep.subr.mxu0 0.0
    %3886 = vmatpush1.msra.mxu0 %v3810
    %3887 = vmatprep.subr.mxu0 0.0
    %3888 = vmatpush1.msra.mxu0 %v3811
    %3889 = vmatprep.subr.mxu0 0.0
    %3890 = vmatpush1.msra.mxu0 %v3812
    %3891 = vmatprep.subr.mxu0 0.0
    %3892 = vmatpush1.msra.mxu0 %v3813
    %3893 = vmatprep.subr.mxu0 0.0
    %3894 = vmatpush1.msra.mxu0 %v3814
    %3895 = vmatprep.subr.mxu0 0.0
    %3896 = vmatpush1.msra.mxu0 %v3815
    %3897 = vmatprep.subr.mxu0 0.0
    %3898 = vmatpush1.msra.mxu0 %v3816
    %3899 = vmatprep.subr.mxu0 0.0
    %3900 = vmatpush1.msra.mxu0 %v3817
    %3901 = vmatprep.subr.mxu0 0.0
    %3902 = vmatpush1.msra.mxu0 %v3818
    %3903 = vmatprep.subr.mxu0 0.0
    %3904 = vmatpush1.msra.mxu0 %v3819
    %3905 = vmatprep.subr.mxu0 0.0
    %3906 = vmatpush1.msra.mxu0 %v3820
    %3907 = vmatprep.subr.mxu0 0.0
    %3908 = vmatpush1.msra.mxu0 %v3821
    %3909 = vmatprep.subr.mxu0 0.0
    %3910 = vmatpush1.msra.mxu0 %v3822
    %3911 = vmatprep.subr.mxu0 0.0
    %3912 = vmatpush1.msra.mxu0 %v3823
    %3913 = vmatprep.subr.mxu0 0.0
    %3914 = vmatpush1.msra.mxu0 %v3824
    %3915 = vmatprep.subr.mxu0 0.0
    %3916 = vmatpush1.msra.mxu0 %v3825
    %3917 = vmatprep.subr.mxu0 0.0
    %3918 = vmatpush1.msra.mxu0 %v3826
    %3919 = vmatprep.subr.mxu0 0.0
    %3920 = vmatpush1.msra.mxu0 %v3827
    %3921 = vmatprep.subr.mxu0 0.0
    %3922 = vmatpush1.msra.mxu0 %v3828
    %3923 = vmatprep.subr.mxu0 0.0
    %3924 = vmatpush1.msra.mxu0 %v3829
    %3925 = vmatprep.subr.mxu0 0.0
    %3926 = vmatpush1.msra.mxu0 %v3830
    %3927 = vmatprep.mubr.f32.mxu0 %v3358
    %3928 = vmatmul.mubr.f32.gmra.mrb[0].mxu0 %v3285
    %v3929 = vpop.f32.mrb[0].mxu0
    %v3930 = vadd.f32 %v2326, %v3929
    %v3931 = vpop.f32.mrb[0].mxu0
    %3932 = vmatprep.mubr.f32.mxu0 %v3650
    %3933 = vmatmul.mubr.f32.gmra.mrb[0].mxu0 %v3577
    %v3934 = vpop.f32.mrb[0].mxu0
    %v3935 = vadd.f32 %v2331, %v3934
    %v3936 = vpop.f32.mrb[0].mxu0
    %3937 = vdwg.mxu0
    %3938 = vmatprep.subr.mxu0 0.0
    %3939 = vmatpush1.msra.mxu0 %v3831
    %3940 = vmatprep.subr.mxu0 0.0
    %3941 = vmatpush1.msra.mxu0 %v3832
    %3942 = vmatprep.subr.mxu0 0.0
    %3943 = vmatpush1.msra.mxu0 %v3833
    %3944 = vmatprep.subr.mxu0 0.0
    %3945 = vmatpush1.msra.mxu0 %v3834
    %3946 = vmatprep.subr.mxu0 0.0
    %3947 = vmatpush1.msra.mxu0 %v3835
    %3948 = vmatprep.subr.mxu0 0.0
    %3949 = vmatpush1.msra.mxu0 %v3836
    %3950 = vmatprep.subr.mxu0 0.0
    %3951 = vmatpush1.msra.mxu0 %v3837
    %3952 = vmatprep.subr.mxu0 0.0
    %3953 = vmatpush1.msra.mxu0 %v3838
    %3954 = vmatprep.subr.mxu0 0.0
    %3955 = vmatpush1.msra.mxu0 %v3839
    %3956 = vmatprep.subr.mxu0 0.0
    %3957 = vmatpush1.msra.mxu0 %v3840
    %3958 = vmatprep.subr.mxu0 0.0
    %3959 = vmatpush1.msra.mxu0 %v3841
    %3960 = vmatprep.subr.mxu0 0.0
    %3961 = vmatpush1.msra.mxu0 %v3842
    %3962 = vmatprep.subr.mxu0 0.0
    %3963 = vmatpush1.msra.mxu0 %v3843
    %3964 = vmatprep.subr.mxu0 0.0
    %3965 = vmatpush1.msra.mxu0 %v3844
    %3966 = vmatprep.subr.mxu0 0.0
    %3967 = vmatpush1.msra.mxu0 %v3845
    %3968 = vmatprep.subr.mxu0 0.0
    %3969 = vmatpush1.msra.mxu0 %v3846
    %3970 = vmatprep.subr.mxu0 0.0
    %3971 = vmatpush1.msra.mxu0 %v3847
    %3972 = vmatprep.subr.mxu0 0.0
    %3973 = vmatpush1.msra.mxu0 %v3848
    %3974 = vmatprep.subr.mxu0 0.0
    %3975 = vmatpush1.msra.mxu0 %v3849
    %3976 = vmatprep.subr.mxu0 0.0
    %3977 = vmatpush1.msra.mxu0 %v3850
    %3978 = vmatprep.subr.mxu0 0.0
    %3979 = vmatpush1.msra.mxu0 %v3851
    %3980 = vmatprep.subr.mxu0 0.0
    %3981 = vmatpush1.msra.mxu0 %v3852
    %3982 = vmatprep.subr.mxu0 0.0
    %3983 = vmatpush1.msra.mxu0 %v3853
    %3984 = vmatprep.subr.mxu0 0.0
    %3985 = vmatpush1.msra.mxu0 %v3854
    %3986 = vmatprep.subr.mxu0 0.0
    %3987 = vmatpush1.msra.mxu0 %v3855
    %3988 = vmatprep.subr.mxu0 0.0
    %3989 = vmatpush1.msra.mxu0 %v3856
    %3990 = vmatprep.subr.mxu0 0.0
    %3991 = vmatpush1.msra.mxu0 %v3857
    %3992 = vmatprep.subr.mxu0 0.0
    %3993 = vmatpush1.msra.mxu0 %v3858
    %3994 = vmatprep.subr.mxu0 0.0
    %3995 = vmatpush1.msra.mxu0 %v3859
    %3996 = vmatprep.subr.mxu0 0.0
    %3997 = vmatpush1.msra.mxu0 %v3860
    %3998 = vmatprep.subr.mxu0 0.0
    %3999 = vmatpush1.msra.mxu0 %v3861
    %4000 = vmatprep.subr.mxu0 0.0
    %4001 = vmatpush1.msra.mxu0 %v3862
    %4002 = vmatprep.mubr.f32.mxu0 %v3504
    %4003 = vmatmul.mubr.f32.gmra.mrb[0].mxu0 %v3431
    %v4004 = vpop.f32.mrb[0].mxu0
    %v4005 = vadd.f32 %v3930, %v4004
    %v4006 = vpop.f32.mrb[0].mxu0
    %4007 = vmatprep.mubr.f32.mxu0 %v3796
    %4008 = vmatmul.mubr.f32.gmra.mrb[0].mxu0 %v3723
    %v4009 = vpop.f32.mrb[0].mxu0
    %v4010 = vadd.f32 %v3935, %v4009
    %v4011 = vpop.f32.mrb[0].mxu0
    %4012 = vdwg.mxu0
    %v4013 = vtanh.pop %v4005
    %v4014 = vtanh.pop %v4010
    %v4015 = vld [vmem:[%s11] sm:$0xff]
    %v4016 = vld [vmem:[%s11 + $0x8] sm:$0xff]
    %v4017 = vld [vmem:[%s11 + $0x10] sm:$0xff]
    %v4018 = vld [vmem:[%s11 + $0x18] sm:$0xff]
    %v4019 = vld [vmem:[%s12] sm:$0x1]
    %v4021 = vlaneseq
    %v4022 = vshrl.u32 %v4021, 7
    %v4023 = vsub.s32 0, %v4022
    %v4024 = vrot.slane %v4019, %v4023
    %v4027 = vsel %vm79, %v4013, 0
    %v4030 = vsel %vm79, %v4014, 0
    %4032 = vmatprep.subr.mxu0 0.0
    %4033 = vmatpush1.msra.mxu0 %v4015
    %4034 = vmatprep.subr.mxu0 0.0
    %4035 = vmatpush1.msra.mxu0 %v4016
    %4036 = vmatprep.subr.mxu0 0.0
    %4037 = vmatpush1.msra.mxu0 %v4017
    %4038 = vmatprep.subr.mxu0 0.0
    %4039 = vmatpush1.msra.mxu0 %v4018
    %4040 = vmatprep.subr.mxu0 0.0
    %4041 = vmatpush1.msra.mxu0 0.0
    %4042 = vmatprep.subr.mxu0 0.0
    %4043 = vmatpush1.msra.mxu0 0.0
    %4044 = vmatprep.subr.mxu0 0.0
    %4045 = vmatpush1.msra.mxu0 0.0
    %4046 = vmatprep.subr.mxu0 0.0
    %4047 = vmatpush1.msra.mxu0 0.0
    %4048 = vmatprep.subr.mxu0 0.0
    %4049 = vmatpush1.msra.mxu0 0.0
    %4050 = vmatprep.subr.mxu0 0.0
    %4051 = vmatpush1.msra.mxu0 0.0
    %4052 = vmatprep.subr.mxu0 0.0
    %4053 = vmatpush1.msra.mxu0 0.0
    %4054 = vmatprep.subr.mxu0 0.0
    %4055 = vmatpush1.msra.mxu0 0.0
    %4056 = vmatprep.subr.mxu0 0.0
    %4057 = vmatpush1.msra.mxu0 0.0
    %4058 = vmatprep.subr.mxu0 0.0
    %4059 = vmatpush1.msra.mxu0 0.0
    %4060 = vmatprep.subr.mxu0 0.0
    %4061 = vmatpush1.msra.mxu0 0.0
    %4062 = vmatprep.subr.mxu0 0.0
    %4063 = vmatpush1.msra.mxu0 0.0
    %4064 = vmatprep.subr.mxu0 0.0
    %4065 = vmatpush1.msra.mxu0 0.0
    %4066 = vmatprep.subr.mxu0 0.0
    %4067 = vmatpush1.msra.mxu0 0.0
    %4068 = vmatprep.subr.mxu0 0.0
    %4069 = vmatpush1.msra.mxu0 0.0
    %4070 = vmatprep.subr.mxu0 0.0
    %4071 = vmatpush1.msra.mxu0 0.0
    %4072 = vmatprep.subr.mxu0 0.0
    %4073 = vmatpush1.msra.mxu0 0.0
    %4074 = vmatprep.subr.mxu0 0.0
    %4075 = vmatpush1.msra.mxu0 0.0
    %4076 = vmatprep.subr.mxu0 0.0
    %4077 = vmatpush1.msra.mxu0 0.0
    %4078 = vmatprep.subr.mxu0 0.0
    %4079 = vmatpush1.msra.mxu0 0.0
    %4080 = vmatprep.subr.mxu0 0.0
    %4081 = vmatpush1.msra.mxu0 0.0
    %4082 = vmatprep.subr.mxu0 0.0
    %4083 = vmatpush1.msra.mxu0 0.0
    %4084 = vmatprep.subr.mxu0 0.0
    %4085 = vmatpush1.msra.mxu0 0.0
    %4086 = vmatprep.subr.mxu0 0.0
    %4087 = vmatpush1.msra.mxu0 0.0
    %4088 = vmatprep.subr.mxu0 0.0
    %4089 = vmatpush1.msra.mxu0 0.0
    %4090 = vmatprep.subr.mxu0 0.0
    %4091 = vmatpush1.msra.mxu0 0.0
    %4092 = vmatprep.subr.mxu0 0.0
    %4093 = vmatpush1.msra.mxu0 0.0
    %4094 = vmatprep.subr.mxu0 0.0
    %4095 = vmatpush1.msra.mxu0 0.0
    %4096 = vmatprep.mubr.f32.mxu0 0.0
    %4097 = vmatmul.mubr.f32.gmra.mrb[0].mxu0 %v4027
    %v4098 = vpop.f32.mrb[0].mxu0
    %v4099 = vadd.f32 %v4024, %v4098
    %v4100 = vpop.f32.mrb[0].mxu0
    %4101 = vmatprep.mubr.f32.mxu0 0.0
    %4102 = vmatmul.mubr.f32.gmra.mrb[0].mxu0 %v4030
    %v4103 = vpop.f32.mrb[0].mxu0
    %v4104 = vadd.f32 %v4024, %v4103
    %v4105 = vpop.f32.mrb[0].mxu0
    %4106 = vdwg.mxu0
    %v4107 = vsel %vm3126, %v4099, -inf
    %4108 = vmax.xlane.f32.xlu0 %v4107
    %v4109 = vpop.xlane.xlu0 %4108
    %v4110 = vsel %vm3126, %v4104, -inf
    %4111 = vmax.xlane.f32.xlu0 %v4110
    %v4112 = vpop.xlane.xlu0 %4111
    %v4113 = vlaneseq
    %v4114 = vand.u32 %v4113, 127
    %vm4115 = vcmp.eq.f32.partialorder %v4099, %v4109
    %vm4116 = vcmp.eq.f32.partialorder %v4104, %v4112
    %v4117 = vsel %vm4115, %v4114, 16
    %v4118 = vsel %vm4116, %v4114, 16
    %v4119 = vsel %vm3126, %v4117, 2147483647
    %v4120 = vand.u32 %v4119, 65535
    %v4121 = vshra.s32 %v4119, 16
    %v4122 = vcvt.s32.f32 %v4120
    %v4123 = vcvt.s32.f32 %v4121
    %4124 = vmin.xlane.f32.xlu0 %v4123
    %v4125 = vpop.xlane.xlu0 %4124
    %vm4126 = vcmp.eq.f32.partialorder %v4123, %v4125
    %v4127 = vsel %vm4126, %v4122, inf
    %4128 = vmin.xlane.f32.xlu0 %v4127
    %v4129 = vpop.xlane.xlu0 %4128
    %v4130 = vcvt.f32.s32 %v4129
    %v4131 = vcvt.f32.s32 %v4125
    %v4132 = vshll.u32 %v4131, 16
    %v4133 = vadd.s32 %v4132, %v4130
    %v4134 = vsel %vm3126, %v4118, 2147483647
    %v4135 = vand.u32 %v4134, 65535
    %v4136 = vshra.s32 %v4134, 16
    %v4137 = vcvt.s32.f32 %v4135
    %v4138 = vcvt.s32.f32 %v4136
    %4139 = vmin.xlane.f32.xlu0 %v4138
    %v4140 = vpop.xlane.xlu0 %4139
    %vm4141 = vcmp.eq.f32.partialorder %v4138, %v4140
    %v4142 = vsel %vm4141, %v4137, inf
    %4143 = vmin.xlane.f32.xlu0 %v4142
    %v4144 = vpop.xlane.xlu0 %4143
    %v4145 = vcvt.f32.s32 %v4144
    %v4146 = vcvt.f32.s32 %v4140
    %v4147 = vshll.u32 %v4146, 16
    %v4148 = vadd.s32 %v4147, %v4145
    %v4149 = vlaneseq
    %v4150 = vshrl.u32 %v4149, 7
    %v4151 = vsub.s32 %v4114, %v4150
    %v4152 = vrot.slane %v4133, %v4151
    %v4153 = vlaneseq
    %v4154 = vshrl.u32 %v4153, 7
    %v4155 = vsub.s32 %v4114, %v4154
    %v4156 = vrot.slane %v4148, %v4155
    %v4157 = vsel %vm478, %v4156, %v4152
    %vm4158 = vcmask 58368
    %4159 = vst.msk [vmem:[#allocation4] sm:$0x3] %vm4158, %v4157
    %v4160 = vsub.f32 %v4099, %v4109
    %v4161 = vsub.f32 %v4104, %v4112
    %v4162 = vmul.f32 %v4160, 1.442695
    %v4163 = vpow.pop %v4162
    %v4164 = vmul.f32 %v4161, 1.442695
    %v4165 = vpow.pop %v4164
    %v4166 = vsel %vm3126, %v4163, 0.0
    %4167 = vadd.xlane.f32.xlu0 %v4166
    %v4168 = vpop.xlane.xlu0 %4167
    %v4169 = vsel %vm3126, %v4165, 0.0
    %4170 = vadd.xlane.f32.xlu0 %v4169
    %v4171 = vpop.xlane.xlu0 %4170
    %v4172 = vlog2.pop %v4168
    %v4173 = vmul.f32 %v4172, 0.6931472
    %v4174 = vlog2.pop %v4171
    %v4175 = vmul.f32 %v4174, 0.6931472
    %v4176 = vadd.f32 %v4173, %v4109
    %v4177 = vadd.f32 %v4175, %v4112
    %v4178 = vsub.f32 %v4099, %v4176
    %v4179 = vsub.f32 %v4104, %v4177
    %4180 = vst.msk [vmem:[#allocation2] sm:$0xff] %vm3126, %v4178
    %4181 = vst.msk [vmem:[#allocation2 + $0x8] sm:$0xff] %vm3126, %v4179
    // Predicated region
    $region54: #{tpu_custom_call.1} parent=1 // pred_check
      _
    $region55: #{tpu_custom_call.1} parent=1 // pred_check_branch
      %4183 = sbr.rel (0) target = $region57
    $region56: #{tpu_custom_call.1} parent=1 // pred_region
      %s4185 = ssub.s32 256, 256
      %4186 = vsyncadd [#allocation3], %s4185
      %s4187 = sshll.u32 [#allocation2], 4
      %s4188 = int_to_ptr.vmem [resolvable:$true] %s4187
      %4193 = dma.vmem_to_hbm [thread:$0]  %s4188, 256, %s13, [#allocation3], 128, 128, 8
    $region57: #{tpu_custom_call.1} parent=1 // pred_fallthru
      _
    // Predicated region
    $region58: #{tpu_custom_call.1} parent=1 // pred_check
      _
    $region59: #{tpu_custom_call.1} parent=1 // pred_check_branch
      %4195 = sbr.rel (0) target = $region61
    $region60: #{tpu_custom_call.1} parent=1 // pred_region
      %s4197 = ssub.s32 32, 32
      %4198 = vsyncadd [#allocation5], %s4197
      %s4200 = sshll.u32 [#allocation4], 4
      %s4201 = int_to_ptr.vmem [resolvable:$true] %s4200
      %4203 = dma.vmem_to_hbm [thread:$0]  %s4201, 32, %s14, [#allocation5]
    $region61: #{tpu_custom_call.1} parent=1 // pred_fallthru
      _
    // Predicated region
    $region62: #{tpu_custom_call.1} parent=1 // pred_check
      _
    $region63: #{tpu_custom_call.1} parent=1 // pred_check_branch
      %4205 = sbr.rel (0) target = $region65
    $region64: #{tpu_custom_call.1} parent=1 // pred_region
      %4206 = dma.done [#allocation3], 256
    $region65: #{tpu_custom_call.1} parent=1 // pred_fallthru
      _
    // Predicated region
    $region66: #{tpu_custom_call.1} parent=1 // pred_check
      _
    $region67: #{tpu_custom_call.1} parent=1 // pred_check_branch
      %4208 = sbr.rel (0) target = $region69
    $region68: #{tpu_custom_call.1} parent=1 // pred_region
      %4209 = dma.done [#allocation5], 32
    $region69: #{tpu_custom_call.1} parent=1 // pred_fallthru
      _
    %4210 = vsyncpa [#allocation3], 1
    %4211 = vsyncpa [#allocation5], 1

</llo_original>
